<compile_context>
chip_gen: v5e
topology: v5e:2x2
jax: 0.10.0
libtpu: 0.0.40
codegen_flags: <defaults>
</compile_context>

<pallas_src>
import functools
import math

import jax
import jax.numpy as jnp
from jax import lax
from jax.experimental import pallas as pl
from jax.experimental.pallas import tpu as pltpu

RATIO_ON = 0.1
LEAK = 0.001


def _round_up(n, m):
    return ((n + m - 1) // m) * m


def _pick_lane_tile(n, min_steps=1):
    for t in (2048, 1024, 512, 256, 128):
        if n % t == 0 and n // t >= min_steps:
            return t
    for t in (2048, 1024, 512, 256, 128):
        if n % t == 0:
            return t
    return n


# ---------------------------------------------------------------------------
# Pallas kernels
# ---------------------------------------------------------------------------
def _conv_bias_relu_kernel(a_ref, w_ref, b_ref, o_ref):
    # a: (K1, TP) bf16 channel-major patches (batch folded into lanes)
    # w: (Cout, K1) bf16; b: (Cout, 1) f32; o: (Cout, TP) bf16
    acc = jnp.dot(w_ref[...], a_ref[...], preferred_element_type=jnp.float32)
    acc = acc + b_ref[...]
    o_ref[...] = jnp.maximum(acc, 0.0).astype(o_ref.dtype)


def _gates_phased_kernel(y_ref, c0_ref, h0_ref, wgy_ref, wgc_ref, bg_ref,
                         mask_ref, phase_ref, tau_ref, inv_tau_ref, times_ref,
                         x_ref, cs_ref, hs_ref, *, cout, wo, ratio_on, leak):
    # y:    (Cout, P) bf16  conv1 output plane of the current batch element
    # c0:   (1, Cout, P) f32  prev_hidden (conv input half)   [module swap]
    # h0:   (1, Cout, P) f32  prev_cell                       [module swap]
    # wgy/wgc: (9, 4*Cout, Cout) bf16 per-tap gate weights; bg: (4*Cout, 1) f32
    # mask: (9, 1, P) bf16 per-tap in-image validity
    b = pl.program_id(0)
    C = cout
    P = y_ref.shape[-1]

    y = y_ref[...]
    c0 = c0_ref[0]
    h0 = h0_ref[0]
    c0b = c0.astype(y.dtype)

    # Zero halo of one image row (+1) on both sides of the flattened plane so every
    # shifted slice below stays in bounds; invalid taps are zeroed by the mask.
    halo = jnp.zeros((C, wo + 1), dtype=y.dtype)
    ypad = jnp.concatenate([halo, y, halo], axis=1)
    cpad = jnp.concatenate([halo, c0b, halo], axis=1)

    # 3x3 'same' conv as 9 shifted matmuls, split into conv-out / prev-hidden halves
    # (replaces im2col + channel concat entirely).
    acc = jnp.zeros((4 * C, P), jnp.float32)
    tap = 0
    for di in (-1, 0, 1):
        for dj in (-1, 0, 1):
            off = (wo + 1) + di * wo + dj
            m = mask_ref[tap]                       # (1, P) bf16
            ys = ypad[:, off:off + P] * m
            cs = cpad[:, off:off + P] * m
            acc = acc + jnp.dot(wgy_ref[tap], ys,
                                preferred_element_type=jnp.float32)
            acc = acc + jnp.dot(wgc_ref[tap], cs,
                                preferred_element_type=jnp.float32)
            tap += 1

    gates = acc + bg_ref[...]
    in_g = jax.nn.sigmoid(gates[0 * C:1 * C])
    rem_g = jax.nn.sigmoid(gates[1 * C:2 * C])
    out_g = jax.nn.sigmoid(gates[2 * C:3 * C])
    cel_g = jnp.tanh(gates[3 * C:4 * C])

    cell = rem_g * h0 + in_g * cel_g
    hidden = out_g * jnp.tanh(cell)

    # PhasedLSTM k gate (all f32).  fmod computed directly for precision:
    # rem = xm - tau * trunc(xm / tau);  phi = |rem| / tau.
    t = times_ref[b]
    xm = t - phase_ref[...]
    q = xm * inv_tau_ref[...]
    n = jnp.where(q >= 0.0, jnp.floor(q), jnp.ceil(q))     # trunc -> torch.fmod sign
    rem = xm - tau_ref[...] * n
    phi = jnp.abs(rem) * inv_tau_ref[...]
    k_up = (2.0 / ratio_on) * phi
    k = jnp.where(phi < ratio_on, 2.0 - k_up, leak * phi)
    k = jnp.where(phi < 0.5 * ratio_on, k_up, k)
    omk = 1.0 - k

    x_ref[0] = cell.astype(x_ref.dtype)                              # layer output
    cs_ref[0] = (k * cell + omk * h0).astype(cs_ref.dtype)           # state[0]
    hs_ref[0] = (k * hidden + omk * c0).astype(hs_ref.dtype)         # state[1]


# ---------------------------------------------------------------------------
# Glue: im2col for conv1 (general stride/padding), param prep, pallas_call wrappers
# ---------------------------------------------------------------------------
def _im2col_bp(x, ks, stride, pad):
    """x (B,Cin,H,W) -> (Cin*ks*ks, B*P_pad) bf16 channel-major patches.
    Column index = b*P_pad + pixel; pixel axis padded to a multiple of 128."""
    x = x.astype(jnp.bfloat16)
    if pad:
        x = jnp.pad(x, ((0, 0), (0, 0), (pad, pad), (pad, pad)))
    B, C, Hp, Wp = x.shape
    Ho = (Hp - ks) // stride + 1
    Wo = (Wp - ks) // stride + 1
    cols = []
    for i in range(ks):
        for j in range(ks):
            cols.append(x[:, :, i:i + stride * Ho:stride, j:j + stride * Wo:stride])
    p = jnp.stack(cols, axis=2).reshape(B, C * ks * ks, Ho * Wo)
    P = Ho * Wo
    P_pad = _round_up(P, 128)
    if P_pad > P:
        p = jnp.pad(p, ((0, 0), (0, 0), (0, P_pad - P)))
    p = jnp.transpose(p, (1, 0, 2)).reshape(C * ks * ks, B * P_pad)
    return p, Ho, Wo


def _flatten_state(s, P_pad):
    B, C = s.shape[0], s.shape[1]
    s = s.reshape(B, C, -1).astype(jnp.float32)
    P = s.shape[-1]
    if P_pad > P:
        s = jnp.pad(s, ((0, 0), (0, 0), (0, P_pad - P)))
    return s


def _conv_bias_relu(patches, w1, b1, *, cout):
    K1, BP = patches.shape
    TP = _pick_lane_tile(BP, min_steps=2)      # >=2 steps keeps both v7x TCs busy
    return pl.pallas_call(
        _conv_bias_relu_kernel,
        out_shape=jax.ShapeDtypeStruct((cout, BP), jnp.bfloat16),
        grid=(BP // TP,),
        in_specs=[pl.BlockSpec((K1, TP), lambda i: (0, i)),
                  pl.BlockSpec((cout, K1), lambda i: (0, 0)),
                  pl.BlockSpec((cout, 1), lambda i: (0, 0))],
        out_specs=pl.BlockSpec((cout, TP), lambda i: (0, i)),
        compiler_params=pltpu.CompilerParams(
            dimension_semantics=("parallel",)),
    )(patches, w1, b1)


def _fused_gates_phased(y, c0f, h0f, kp, times, *, wo):
    B, Cout, P_pad = c0f.shape
    kernel = functools.partial(_gates_phased_kernel, cout=Cout, wo=wo,
                               ratio_on=RATIO_ON, leak=LEAK)
    st = lambda: pl.BlockSpec((1, Cout, P_pad), lambda b: (b, 0, 0))
    px = lambda: pl.BlockSpec((Cout, P_pad), lambda b: (0, 0))
    out_shape = tuple(jax.ShapeDtypeStruct((B, Cout, P_pad), jnp.float32)
                      for _ in range(3))
    return pl.pallas_call(
        kernel,
        out_shape=out_shape,
        grid=(B,),
        in_specs=[pl.BlockSpec((Cout, P_pad), lambda b: (0, b)),           # y plane
                  st(), st(),                                              # c0, h0
                  pl.BlockSpec((9, 4 * Cout, Cout), lambda b: (0, 0, 0)),  # wg_y
                  pl.BlockSpec((9, 4 * Cout, Cout), lambda b: (0, 0, 0)),  # wg_c
                  pl.BlockSpec((4 * Cout, 1), lambda b: (0, 0)),           # bg
                  pl.BlockSpec((9, 1, P_pad), lambda b: (0, 0, 0)),        # tap mask
                  px(), px(), px(),                                        # phase, tau, inv_tau
                  pl.BlockSpec(memory_space=pltpu.MemorySpace.SMEM)],      # times (B,)
        out_specs=(st(), st(), st()),
        compiler_params=pltpu.CompilerParams(
            dimension_semantics=("parallel",)),
    )(y, c0f, h0f, kp["wg_y"], kp["wg_c"], kp["bg"], kp["tap_mask"],
      kp["phase"], kp["tau"], kp["inv_tau"], times)


def prepare_params(params, Ho, Wo):
    """Hoisted, loop-invariant conversion of PyTorch-layout params to kernel layout."""
    Cout = params["w1"].shape[0]
    P = Ho * Wo
    P_pad = _round_up(P, 128)

    wg = params["wg"]                                     # (4*Cout, 2*Cout, 3, 3)
    # Per-tap (di,dj) row-major weights, split into conv-output / prev-hidden halves.
    wg_y = jnp.transpose(wg[:, :Cout], (2, 3, 0, 1)).reshape(9, 4 * Cout, Cout)
    wg_c = jnp.transpose(wg[:, Cout:], (2, 3, 0, 1)).reshape(9, 4 * Cout, Cout)

    tau = params["tau"].reshape(Cout, P)
    phase = params["phase"].reshape(Cout, P)
    if P_pad > P:
        tau = jnp.pad(tau, ((0, 0), (0, P_pad - P)), constant_values=1.0)
        phase = jnp.pad(phase, ((0, 0), (0, P_pad - P)))

    # Per-tap in-image validity masks for the in-kernel 3x3 halo conv.
    pix = jnp.arange(P, dtype=jnp.int32)
    col = pix % Wo
    row = pix // Wo
    masks = []
    for di in (-1, 0, 1):
        for dj in (-1, 0, 1):
            ok = ((row + di >= 0) & (row + di < Ho) &
                  (col + dj >= 0) & (col + dj < Wo))
            masks.append(ok)
    tap_mask = jnp.stack(masks, 0).astype(jnp.bfloat16)
    if P_pad > P:
        tap_mask = jnp.pad(tap_mask, ((0, 0), (0, P_pad - P)))
    tap_mask = tap_mask.reshape(9, 1, P_pad)

    return {
        "w1": params["w1"].reshape(Cout, -1).astype(jnp.bfloat16),  # (Cout, Cin*ks*ks)
        "b1": params["b1"].reshape(Cout, 1).astype(jnp.float32),
        "wg_y": wg_y.astype(jnp.bfloat16),
        "wg_c": wg_c.astype(jnp.bfloat16),
        "bg": params["bg"].reshape(4 * Cout, 1).astype(jnp.float32),
        "phase": phase.astype(jnp.float32),
        "tau": tau.astype(jnp.float32),
        "inv_tau": (1.0 / tau).astype(jnp.float32),
        "tap_mask": tap_mask,
    }


def recurrent_phased_conv_layer(x, times, prev_state, kparams, *,
                                kernel_size=3, stride=1, padding=1):
    B, Cin, H, W = x.shape
    Cout = kparams["w1"].shape[0]

    # --- ConvLayer: conv2d + bias + relu, batch folded into the lane dim ---
    patches, Ho, Wo = _im2col_bp(x, kernel_size, stride, padding)
    P = Ho * Wo
    P_pad = _round_up(P, 128)
    y = _conv_bias_relu(patches, kparams["w1"], kparams["b1"], cout=Cout)  # (Cout, B*P_pad) bf16

    if prev_state is None:
        c0 = jnp.zeros((B, Cout, Ho, Wo), x.dtype)
        h0 = jnp.zeros((B, Cout, Ho, Wo), x.dtype)
    else:
        c0, h0 = prev_state

    # ConvLSTM sees cat(input_, prev_hidden) = (conv_out, c0); prev_cell = h0.
    c0f = _flatten_state(c0, P_pad)     # prev_hidden
    h0f = _flatten_state(h0, P_pad)     # prev_cell
    cell, c_s, h_s = _fused_gates_phased(y, c0f, h0f, kparams, times, wo=Wo)

    unflat = lambda a: a[:, :, :P].reshape(B, Cout, Ho, Wo)
    # PhasedConvLSTMCell returns (h_t, (c_s, h_s)); h_t is the ConvLSTM *cell*.
    return unflat(cell), (unflat(c_s), unflat(h_s))


# ---------------------------------------------------------------------------
# Pure-JAX reference (for correctness check)
# ---------------------------------------------------------------------------
def _reference(x, times, prev_state, params, *, kernel_size=3, stride=1, padding=1):
    dn = ("NCHW", "OIHW", "NCHW")
    Cout = params["w1"].shape[0]
    y = lax.conv_general_dilated(x, params["w1"], (stride, stride),
                                 [(padding, padding), (padding, padding)],
                                 dimension_numbers=dn)
    y = jax.nn.relu(y + params["b1"][None, :, None, None])
    c0, h0 = prev_state
    stacked = jnp.concatenate([y, c0], axis=1)
    gates = lax.conv_general_dilated(stacked, params["wg"], (1, 1),
                                     [(1, 1), (1, 1)], dimension_numbers=dn)
    gates = gates + params["bg"][None, :, None, None]
    in_g = jax.nn.sigmoid(gates[:, :Cout])
    rem_g = jax.nn.sigmoid(gates[:, Cout:2 * Cout])
    out_g = jax.nn.sigmoid(gates[:, 2 * Cout:3 * Cout])
    cel_g = jnp.tanh(gates[:, 3 * Cout:])
    cell = rem_g * h0 + in_g * cel_g
    hidden = out_g * jnp.tanh(cell)
    B = x.shape[0]
    t = times[:, None]
    tau = params["tau"][None, :]
    phase = params["phase"][None, :]
    xm = t - phase
    phi = jnp.abs(jnp.fmod(xm, tau)) / tau
    k_up = 2.0 * phi / RATIO_ON
    k = jnp.where(phi < RATIO_ON, 2.0 - k_up, LEAK * phi)
    k = jnp.where(phi < 0.5 * RATIO_ON, k_up, k)
    c_s_new = k * hidden.reshape(B, -1) + (1.0 - k) * c0.reshape(B, -1)
    h_s_new = k * cell.reshape(B, -1) + (1.0 - k) * h0.reshape(B, -1)
    return cell, (h_s_new.reshape(c0.shape), c_s_new.reshape(c0.shape))


# ---------------------------------------------------------------------------
if __name__ == "__main__":
    B, Cin, H, W = 2, 4, 16, 16
    Cout, ks, stride, pad = 8, 3, 1, 1
    Ho = (H + 2 * pad - ks) // stride + 1
    Wo = (W + 2 * pad - ks) // stride + 1
    hidden_size = Cout * Ho * Wo

    keys = jax.random.split(jax.random.PRNGKey(0), 10)
    params = {
        "w1": jax.random.normal(keys[0], (Cout, Cin, ks, ks), jnp.float32) * 0.1,
        "b1": jax.random.normal(keys[1], (Cout,), jnp.float32) * 0.1,
        "wg": jax.random.normal(keys[2], (4 * Cout, 2 * Cout, 3, 3), jnp.float32) * 0.1,
        "bg": jax.random.normal(keys[3], (4 * Cout,), jnp.float32) * 0.1,
        "tau": jnp.exp(jax.random.uniform(keys[4], (hidden_size,), jnp.float32,
                                          minval=math.log(0.02), maxval=math.log(50.0))),
    }
    params["phase"] = jax.random.uniform(keys[5], (hidden_size,), jnp.float32) * params["tau"]

    x = jax.random.normal(keys[6], (B, Cin, H, W), jnp.float32)
    times = jax.random.uniform(keys[7], (B,), jnp.float32, minval=0.0, maxval=100.0)
    c0 = jax.random.normal(keys[8], (B, Cout, Ho, Wo), jnp.float32) * 0.1
    h0 = jax.random.normal(keys[9], (B, Cout, Ho, Wo), jnp.float32) * 0.1
    prev_state = (c0, h0)

    # Loop-invariant parameter prep, done once outside the recurrent step.
    kparams = prepare_params(params, Ho, Wo)

    step = jax.jit(functools.partial(recurrent_phased_conv_layer,
                                     kernel_size=ks, stride=stride, padding=pad))
    out, (c_s, h_s) = step(x, times, prev_state, kparams)
    jax.block_until_ready((out, c_s, h_s))

    ref_out, (ref_cs, ref_hs) = _reference(x, times, prev_state, params,
                                           kernel_size=ks, stride=stride, padding=pad)
    assert jnp.allclose(out, ref_out, rtol=5e-3, atol=5e-3)
    assert jnp.allclose(c_s, ref_cs, rtol=5e-3, atol=5e-3)
    assert jnp.allclose(h_s, ref_hs, rtol=5e-3, atol=5e-3)

    print("KERNEL_OK")
</pallas_src>

<mosaic_0001>
module attributes {stable_mosaic.version = 11 : i64} {
  func.func @_conv_bias_relu_kernel(%arg0: i32, %arg1: memref<36x256xbf16, #tpu.memory_space<vmem>>, %arg2: memref<8x36xbf16, #tpu.memory_space<vmem>>, %arg3: memref<8x1xf32, #tpu.memory_space<vmem>>, %arg4: memref<8x256xbf16, #tpu.memory_space<vmem>>) attributes {dimension_semantics = [#tpu.dimension_semantics<parallel>], iteration_bounds = array<i64: 2>, scalar_prefetch = 0 : i64, scratch_operands = 0 : i64, tpu.core_type = #tpu.core_type<tc>, window_params = [{transform_indices = @transform_0, window_bounds = array<i64: 36, 256>}, {pipeline_mode = #tpu.pipeline_mode<synchronous>, transform_indices = @transform_1, window_bounds = array<i64: 8, 36>}, {pipeline_mode = #tpu.pipeline_mode<synchronous>, transform_indices = @transform_2, window_bounds = array<i64: 8, 1>}, {transform_indices = @transform_3, window_bounds = array<i64: 8, 256>}]} {
    %c0 = arith.constant 0 : index
    %c0_0 = arith.constant 0 : index
    %0 = vector.load %arg2[%c0, %c0_0] : memref<8x36xbf16, #tpu.memory_space<vmem>>, vector<8x36xbf16>
    %c0_1 = arith.constant 0 : index
    %c0_2 = arith.constant 0 : index
    %1 = vector.load %arg1[%c0_1, %c0_2] : memref<36x256xbf16, #tpu.memory_space<vmem>>, vector<36x256xbf16>
    %cst = arith.constant dense<0.000000e+00> : vector<8x256xf32>
    %2 = tpu.matmul %0, %1, %cst {dimension_numbers = #tpu.dot_dimension_numbers<[1], [0], [0], [1], [0, 0, 1, 1], [], []>} : vector<8x36xbf16>, vector<36x256xbf16>, vector<8x256xf32> -> vector<8x256xf32>
    %c0_3 = arith.constant 0 : index
    %c0_4 = arith.constant 0 : index
    %3 = vector.load %arg3[%c0_3, %c0_4] : memref<8x1xf32, #tpu.memory_space<vmem>>, vector<8x1xf32>
    %4 = vector.broadcast %3 : vector<8x1xf32> to vector<8x256xf32>
    %5 = arith.addf %2, %4 : vector<8x256xf32>
    %cst_5 = arith.constant 0.000000e+00 : f32
    %6 = vector.broadcast %cst_5 : f32 to vector<8x256xf32>
    %7 = arith.maximumf %5, %6 : vector<8x256xf32>
    %8 = arith.truncf %7 : vector<8x256xf32> to vector<8x256xbf16>
    %c0_6 = arith.constant 0 : index
    %c0_7 = arith.constant 0 : index
    %9 = vector.load %arg4[%c0_6, %c0_7] : memref<8x256xbf16, #tpu.memory_space<vmem>>, vector<8x256xbf16>
    tpu.vector_store %arg4[%c0_6, %c0_7], %8 {strides = array<i32>} : memref<8x256xbf16, #tpu.memory_space<vmem>>, vector<8x256xbf16>,
    return
  }
  func.func @transform_0(%arg0: i32) -> (i32, i32) {
    %c0_i32 = arith.constant 0 : i32
    %c0_i32_0 = arith.constant 0 : i32
    return %c0_i32, %arg0 : i32, i32
  }
  func.func @transform_1(%arg0: i32) -> (i32, i32) {
    %c0_i32 = arith.constant 0 : i32
    %c0_i32_0 = arith.constant 0 : i32
    %c0_i32_1 = arith.constant 0 : i32
    return %c0_i32, %c0_i32_0 : i32, i32
  }
  func.func @transform_2(%arg0: i32) -> (i32, i32) {
    %c0_i32 = arith.constant 0 : i32
    %c0_i32_0 = arith.constant 0 : i32
    %c0_i32_1 = arith.constant 0 : i32
    return %c0_i32, %c0_i32_0 : i32, i32
  }
  func.func @transform_3(%arg0: i32) -> (i32, i32) {
    %c0_i32 = arith.constant 0 : i32
    %c0_i32_0 = arith.constant 0 : i32
    return %c0_i32, %arg0 : i32, i32
  }
}

module attributes {stable_mosaic.version = 11 : i64} {
  func.func @_gates_phased_kernel(%arg0: i32, %arg1: memref<8x256xbf16, #tpu.memory_space<vmem>>, %arg2: memref<1x8x256xf32, #tpu.memory_space<vmem>>, %arg3: memref<1x8x256xf32, #tpu.memory_space<vmem>>, %arg4: memref<9x32x8xbf16, #tpu.memory_space<vmem>>, %arg5: memref<9x32x8xbf16, #tpu.memory_space<vmem>>, %arg6: memref<32x1xf32, #tpu.memory_space<vmem>>, %arg7: memref<9x1x256xbf16, #tpu.memory_space<vmem>>, %arg8: memref<8x256xf32, #tpu.memory_space<vmem>>, %arg9: memref<8x256xf32, #tpu.memory_space<vmem>>, %arg10: memref<8x256xf32, #tpu.memory_space<vmem>>, %arg11: memref<2xf32, #tpu.memory_space<smem>>, %arg12: memref<1x8x256xf32, #tpu.memory_space<vmem>>, %arg13: memref<1x8x256xf32, #tpu.memory_space<vmem>>, %arg14: memref<1x8x256xf32, #tpu.memory_space<vmem>>) attributes {dimension_semantics = [#tpu.dimension_semantics<parallel>], iteration_bounds = array<i64: 2>, scalar_prefetch = 0 : i64, scratch_operands = 0 : i64, tpu.core_type = #tpu.core_type<tc>, window_params = [{transform_indices = @transform_0, window_bounds = array<i64: 8, 256>}, {transform_indices = @transform_1, window_bounds = array<i64: 1, 8, 256>}, {transform_indices = @transform_2, window_bounds = array<i64: 1, 8, 256>}, {pipeline_mode = #tpu.pipeline_mode<synchronous>, transform_indices = @transform_3, window_bounds = array<i64: 9, 32, 8>}, {pipeline_mode = #tpu.pipeline_mode<synchronous>, transform_indices = @transform_4, window_bounds = array<i64: 9, 32, 8>}, {pipeline_mode = #tpu.pipeline_mode<synchronous>, transform_indices = @transform_5, window_bounds = array<i64: 32, 1>}, {pipeline_mode = #tpu.pipeline_mode<synchronous>, transform_indices = @transform_6, window_bounds = array<i64: 9, 1, 256>}, {pipeline_mode = #tpu.pipeline_mode<synchronous>, transform_indices = @transform_7, window_bounds = array<i64: 8, 256>}, {pipeline_mode = #tpu.pipeline_mode<synchronous>, transform_indices = @transform_8, window_bounds = array<i64: 8, 256>}, {pipeline_mode = #tpu.pipeline_mode<synchronous>, transform_indices = @transform_9, window_bounds = array<i64: 8, 256>}, {transform_indices = @transform_10, window_bounds = array<i64: 2>}, {transform_indices = @transform_11, window_bounds = array<i64: 1, 8, 256>}, {transform_indices = @transform_12, window_bounds = array<i64: 1, 8, 256>}, {transform_indices = @transform_13, window_bounds = array<i64: 1, 8, 256>}]} {
    %c0 = arith.constant 0 : index
    %c0_0 = arith.constant 0 : index
    %0 = vector.load %arg1[%c0, %c0_0] : memref<8x256xbf16, #tpu.memory_space<vmem>>, vector<8x256xbf16>
    %c0_1 = arith.constant 0 : index
    %c0_2 = arith.constant 0 : index
    %c0_3 = arith.constant 0 : index
    %1 = vector.load %arg2[%c0_1, %c0_2, %c0_3] : memref<1x8x256xf32, #tpu.memory_space<vmem>>, vector<1x8x256xf32>
    %2 = vector.shape_cast %1 : vector<1x8x256xf32> to vector<8x256xf32>
    %c0_4 = arith.constant 0 : index
    %c0_5 = arith.constant 0 : index
    %c0_6 = arith.constant 0 : index
    %3 = vector.load %arg3[%c0_4, %c0_5, %c0_6] : memref<1x8x256xf32, #tpu.memory_space<vmem>>, vector<1x8x256xf32>
    %4 = vector.shape_cast %3 : vector<1x8x256xf32> to vector<8x256xf32>
    %5 = arith.truncf %2 : vector<8x256xf32> to vector<8x256xbf16>
    %cst = arith.constant 0.000000e+00 : bf16
    %6 = vector.broadcast %cst : bf16 to vector<8x17xbf16>
    %7 = tpu.concatenate %6, %0, %6 in 1 : vector<8x17xbf16>, vector<8x256xbf16>, vector<8x17xbf16> -> vector<8x290xbf16>
    %8 = tpu.concatenate %6, %5, %6 in 1 : vector<8x17xbf16>, vector<8x256xbf16>, vector<8x17xbf16> -> vector<8x290xbf16>
    %cst_7 = arith.constant 0.000000e+00 : f32
    %9 = vector.broadcast %cst_7 : f32 to vector<32x256xf32>
    %c0_8 = arith.constant 0 : index
    %c0_9 = arith.constant 0 : index
    %c0_10 = arith.constant 0 : index
    %10 = vector.load %arg7[%c0_8, %c0_9, %c0_10] : memref<9x1x256xbf16, #tpu.memory_space<vmem>>, vector<1x1x256xbf16>
    %11 = vector.shape_cast %10 : vector<1x1x256xbf16> to vector<1x256xbf16>
    %12 = vector.extract_strided_slice %7 {offsets = [0, 0], sizes = [8, 256], strides = [1, 1]} : vector<8x290xbf16> to vector<8x256xbf16>
    %13 = vector.broadcast %11 : vector<1x256xbf16> to vector<8x256xbf16>
    %14 = arith.mulf %12, %13 : vector<8x256xbf16>
    %15 = vector.extract_strided_slice %8 {offsets = [0, 0], sizes = [8, 256], strides = [1, 1]} : vector<8x290xbf16> to vector<8x256xbf16>
    %16 = vector.broadcast %11 : vector<1x256xbf16> to vector<8x256xbf16>
    %17 = arith.mulf %15, %16 : vector<8x256xbf16>
    %c0_11 = arith.constant 0 : index
    %c0_12 = arith.constant 0 : index
    %c0_13 = arith.constant 0 : index
    %18 = vector.load %arg4[%c0_11, %c0_12, %c0_13] : memref<9x32x8xbf16, #tpu.memory_space<vmem>>, vector<1x32x8xbf16>
    %19 = vector.shape_cast %18 : vector<1x32x8xbf16> to vector<32x8xbf16>
    %cst_14 = arith.constant dense<0.000000e+00> : vector<32x256xf32>
    %20 = tpu.matmul %19, %14, %cst_14 {dimension_numbers = #tpu.dot_dimension_numbers<[1], [0], [0], [1], [0, 0, 1, 1], [], []>} : vector<32x8xbf16>, vector<8x256xbf16>, vector<32x256xf32> -> vector<32x256xf32>
    %21 = arith.addf %9, %20 : vector<32x256xf32>
    %c0_15 = arith.constant 0 : index
    %c0_16 = arith.constant 0 : index
    %c0_17 = arith.constant 0 : index
    %22 = vector.load %arg5[%c0_15, %c0_16, %c0_17] : memref<9x32x8xbf16, #tpu.memory_space<vmem>>, vector<1x32x8xbf16>
    %23 = vector.shape_cast %22 : vector<1x32x8xbf16> to vector<32x8xbf16>
    %cst_18 = arith.constant dense<0.000000e+00> : vector<32x256xf32>
    %24 = tpu.matmul %23, %17, %cst_18 {dimension_numbers = #tpu.dot_dimension_numbers<[1], [0], [0], [1], [0, 0, 1, 1], [], []>} : vector<32x8xbf16>, vector<8x256xbf16>, vector<32x256xf32> -> vector<32x256xf32>
    %25 = arith.addf %21, %24 : vector<32x256xf32>
    %c1 = arith.constant 1 : index
    %c0_19 = arith.constant 0 : index
    %c0_20 = arith.constant 0 : index
    %26 = vector.load %arg7[%c1, %c0_19, %c0_20] : memref<9x1x256xbf16, #tpu.memory_space<vmem>>, vector<1x1x256xbf16>
    %27 = vector.shape_cast %26 : vector<1x1x256xbf16> to vector<1x256xbf16>
    %28 = vector.extract_strided_slice %7 {offsets = [0, 1], sizes = [8, 256], strides = [1, 1]} : vector<8x290xbf16> to vector<8x256xbf16>
    %29 = vector.broadcast %27 : vector<1x256xbf16> to vector<8x256xbf16>
    %30 = arith.mulf %28, %29 : vector<8x256xbf16>
    %31 = vector.extract_strided_slice %8 {offsets = [0, 1], sizes = [8, 256], strides = [1, 1]} : vector<8x290xbf16> to vector<8x256xbf16>
    %32 = vector.broadcast %27 : vector<1x256xbf16> to vector<8x256xbf16>
    %33 = arith.mulf %31, %32 : vector<8x256xbf16>
    %c1_21 = arith.constant 1 : index
    %c0_22 = arith.constant 0 : index
    %c0_23 = arith.constant 0 : index
    %34 = vector.load %arg4[%c1_21, %c0_22, %c0_23] : memref<9x32x8xbf16, #tpu.memory_space<vmem>>, vector<1x32x8xbf16>
    %35 = vector.shape_cast %34 : vector<1x32x8xbf16> to vector<32x8xbf16>
    %cst_24 = arith.constant dense<0.000000e+00> : vector<32x256xf32>
    %36 = tpu.matmul %35, %30, %cst_24 {dimension_numbers = #tpu.dot_dimension_numbers<[1], [0], [0], [1], [0, 0, 1, 1], [], []>} : vector<32x8xbf16>, vector<8x256xbf16>, vector<32x256xf32> -> vector<32x256xf32>
    %37 = arith.addf %25, %36 : vector<32x256xf32>
    %c1_25 = arith.constant 1 : index
    %c0_26 = arith.constant 0 : index
    %c0_27 = arith.constant 0 : index
    %38 = vector.load %arg5[%c1_25, %c0_26, %c0_27] : memref<9x32x8xbf16, #tpu.memory_space<vmem>>, vector<1x32x8xbf16>
    %39 = vector.shape_cast %38 : vector<1x32x8xbf16> to vector<32x8xbf16>
    %cst_28 = arith.constant dense<0.000000e+00> : vector<32x256xf32>
    %40 = tpu.matmul %39, %33, %cst_28 {dimension_numbers = #tpu.dot_dimension_numbers<[1], [0], [0], [1], [0, 0, 1, 1], [], []>} : vector<32x8xbf16>, vector<8x256xbf16>, vector<32x256xf32> -> vector<32x256xf32>
    %41 = arith.addf %37, %40 : vector<32x256xf32>
    %c2 = arith.constant 2 : index
    %c0_29 = arith.constant 0 : index
    %c0_30 = arith.constant 0 : index
    %42 = vector.load %arg7[%c2, %c0_29, %c0_30] : memref<9x1x256xbf16, #tpu.memory_space<vmem>>, vector<1x1x256xbf16>
    %43 = vector.shape_cast %42 : vector<1x1x256xbf16> to vector<1x256xbf16>
    %44 = vector.extract_strided_slice %7 {offsets = [0, 2], sizes = [8, 256], strides = [1, 1]} : vector<8x290xbf16> to vector<8x256xbf16>
    %45 = vector.broadcast %43 : vector<1x256xbf16> to vector<8x256xbf16>
    %46 = arith.mulf %44, %45 : vector<8x256xbf16>
    %47 = vector.extract_strided_slice %8 {offsets = [0, 2], sizes = [8, 256], strides = [1, 1]} : vector<8x290xbf16> to vector<8x256xbf16>
    %48 = vector.broadcast %43 : vector<1x256xbf16> to vector<8x256xbf16>
    %49 = arith.mulf %47, %48 : vector<8x256xbf16>
    %c2_31 = arith.constant 2 : index
    %c0_32 = arith.constant 0 : index
    %c0_33 = arith.constant 0 : index
    %50 = vector.load %arg4[%c2_31, %c0_32, %c0_33] : memref<9x32x8xbf16, #tpu.memory_space<vmem>>, vector<1x32x8xbf16>
    %51 = vector.shape_cast %50 : vector<1x32x8xbf16> to vector<32x8xbf16>
    %cst_34 = arith.constant dense<0.000000e+00> : vector<32x256xf32>
    %52 = tpu.matmul %51, %46, %cst_34 {dimension_numbers = #tpu.dot_dimension_numbers<[1], [0], [0], [1], [0, 0, 1, 1], [], []>} : vector<32x8xbf16>, vector<8x256xbf16>, vector<32x256xf32> -> vector<32x256xf32>
    %53 = arith.addf %41, %52 : vector<32x256xf32>
    %c2_35 = arith.constant 2 : index
    %c0_36 = arith.constant 0 : index
    %c0_37 = arith.constant 0 : index
    %54 = vector.load %arg5[%c2_35, %c0_36, %c0_37] : memref<9x32x8xbf16, #tpu.memory_space<vmem>>, vector<1x32x8xbf16>
    %55 = vector.shape_cast %54 : vector<1x32x8xbf16> to vector<32x8xbf16>
    %cst_38 = arith.constant dense<0.000000e+00> : vector<32x256xf32>
    %56 = tpu.matmul %55, %49, %cst_38 {dimension_numbers = #tpu.dot_dimension_numbers<[1], [0], [0], [1], [0, 0, 1, 1], [], []>} : vector<32x8xbf16>, vector<8x256xbf16>, vector<32x256xf32> -> vector<32x256xf32>
    %57 = arith.addf %53, %56 : vector<32x256xf32>
    %c3 = arith.constant 3 : index
    %c0_39 = arith.constant 0 : index
    %c0_40 = arith.constant 0 : index
    %58 = vector.load %arg7[%c3, %c0_39, %c0_40] : memref<9x1x256xbf16, #tpu.memory_space<vmem>>, vector<1x1x256xbf16>
    %59 = vector.shape_cast %58 : vector<1x1x256xbf16> to vector<1x256xbf16>
    %60 = vector.extract_strided_slice %7 {offsets = [0, 16], sizes = [8, 256], strides = [1, 1]} : vector<8x290xbf16> to vector<8x256xbf16>
    %61 = vector.broadcast %59 : vector<1x256xbf16> to vector<8x256xbf16>
    %62 = arith.mulf %60, %61 : vector<8x256xbf16>
    %63 = vector.extract_strided_slice %8 {offsets = [0, 16], sizes = [8, 256], strides = [1, 1]} : vector<8x290xbf16> to vector<8x256xbf16>
    %64 = vector.broadcast %59 : vector<1x256xbf16> to vector<8x256xbf16>
    %65 = arith.mulf %63, %64 : vector<8x256xbf16>
    %c3_41 = arith.constant 3 : index
    %c0_42 = arith.constant 0 : index
    %c0_43 = arith.constant 0 : index
    %66 = vector.load %arg4[%c3_41, %c0_42, %c0_43] : memref<9x32x8xbf16, #tpu.memory_space<vmem>>, vector<1x32x8xbf16>
    %67 = vector.shape_cast %66 : vector<1x32x8xbf16> to vector<32x8xbf16>
    %cst_44 = arith.constant dense<0.000000e+00> : vector<32x256xf32>
    %68 = tpu.matmul %67, %62, %cst_44 {dimension_numbers = #tpu.dot_dimension_numbers<[1], [0], [0], [1], [0, 0, 1, 1], [], []>} : vector<32x8xbf16>, vector<8x256xbf16>, vector<32x256xf32> -> vector<32x256xf32>
    %69 = arith.addf %57, %68 : vector<32x256xf32>
    %c3_45 = arith.constant 3 : index
    %c0_46 = arith.constant 0 : index
    %c0_47 = arith.constant 0 : index
    %70 = vector.load %arg5[%c3_45, %c0_46, %c0_47] : memref<9x32x8xbf16, #tpu.memory_space<vmem>>, vector<1x32x8xbf16>
    %71 = vector.shape_cast %70 : vector<1x32x8xbf16> to vector<32x8xbf16>
    %cst_48 = arith.constant dense<0.000000e+00> : vector<32x256xf32>
    %72 = tpu.matmul %71, %65, %cst_48 {dimension_numbers = #tpu.dot_dimension_numbers<[1], [0], [0], [1], [0, 0, 1, 1], [], []>} : vector<32x8xbf16>, vector<8x256xbf16>, vector<32x256xf32> -> vector<32x256xf32>
    %73 = arith.addf %69, %72 : vector<32x256xf32>
    %c4 = arith.constant 4 : index
    %c0_49 = arith.constant 0 : index
    %c0_50 = arith.constant 0 : index
    %74 = vector.load %arg7[%c4, %c0_49, %c0_50] : memref<9x1x256xbf16, #tpu.memory_space<vmem>>, vector<1x1x256xbf16>
    %75 = vector.shape_cast %74 : vector<1x1x256xbf16> to vector<1x256xbf16>
    %76 = vector.extract_strided_slice %7 {offsets = [0, 17], sizes = [8, 256], strides = [1, 1]} : vector<8x290xbf16> to vector<8x256xbf16>
    %77 = vector.broadcast %75 : vector<1x256xbf16> to vector<8x256xbf16>
    %78 = arith.mulf %76, %77 : vector<8x256xbf16>
    %79 = vector.extract_strided_slice %8 {offsets = [0, 17], sizes = [8, 256], strides = [1, 1]} : vector<8x290xbf16> to vector<8x256xbf16>
    %80 = vector.broadcast %75 : vector<1x256xbf16> to vector<8x256xbf16>
    %81 = arith.mulf %79, %80 : vector<8x256xbf16>
    %c4_51 = arith.constant 4 : index
    %c0_52 = arith.constant 0 : index
    %c0_53 = arith.constant 0 : index
    %82 = vector.load %arg4[%c4_51, %c0_52, %c0_53] : memref<9x32x8xbf16, #tpu.memory_space<vmem>>, vector<1x32x8xbf16>
    %83 = vector.shape_cast %82 : vector<1x32x8xbf16> to vector<32x8xbf16>
    %cst_54 = arith.constant dense<0.000000e+00> : vector<32x256xf32>
    %84 = tpu.matmul %83, %78, %cst_54 {dimension_numbers = #tpu.dot_dimension_numbers<[1], [0], [0], [1], [0, 0, 1, 1], [], []>} : vector<32x8xbf16>, vector<8x256xbf16>, vector<32x256xf32> -> vector<32x256xf32>
    %85 = arith.addf %73, %84 : vector<32x256xf32>
    %c4_55 = arith.constant 4 : index
    %c0_56 = arith.constant 0 : index
    %c0_57 = arith.constant 0 : index
    %86 = vector.load %arg5[%c4_55, %c0_56, %c0_57] : memref<9x32x8xbf16, #tpu.memory_space<vmem>>, vector<1x32x8xbf16>
    %87 = vector.shape_cast %86 : vector<1x32x8xbf16> to vector<32x8xbf16>
    %cst_58 = arith.constant dense<0.000000e+00> : vector<32x256xf32>
    %88 = tpu.matmul %87, %81, %cst_58 {dimension_numbers = #tpu.dot_dimension_numbers<[1], [0], [0], [1], [0, 0, 1, 1], [], []>} : vector<32x8xbf16>, vector<8x256xbf16>, vector<32x256xf32> -> vector<32x256xf32>
    %89 = arith.addf %85, %88 : vector<32x256xf32>
    %c5 = arith.constant 5 : index
    %c0_59 = arith.constant 0 : index
    %c0_60 = arith.constant 0 : index
    %90 = vector.load %arg7[%c5, %c0_59, %c0_60] : memref<9x1x256xbf16, #tpu.memory_space<vmem>>, vector<1x1x256xbf16>
    %91 = vector.shape_cast %90 : vector<1x1x256xbf16> to vector<1x256xbf16>
    %92 = vector.extract_strided_slice %7 {offsets = [0, 18], sizes = [8, 256], strides = [1, 1]} : vector<8x290xbf16> to vector<8x256xbf16>
    %93 = vector.broadcast %91 : vector<1x256xbf16> to vector<8x256xbf16>
    %94 = arith.mulf %92, %93 : vector<8x256xbf16>
    %95 = vector.extract_strided_slice %8 {offsets = [0, 18], sizes = [8, 256], strides = [1, 1]} : vector<8x290xbf16> to vector<8x256xbf16>
    %96 = vector.broadcast %91 : vector<1x256xbf16> to vector<8x256xbf16>
    %97 = arith.mulf %95, %96 : vector<8x256xbf16>
    %c5_61 = arith.constant 5 : index
    %c0_62 = arith.constant 0 : index
    %c0_63 = arith.constant 0 : index
    %98 = vector.load %arg4[%c5_61, %c0_62, %c0_63] : memref<9x32x8xbf16, #tpu.memory_space<vmem>>, vector<1x32x8xbf16>
    %99 = vector.shape_cast %98 : vector<1x32x8xbf16> to vector<32x8xbf16>
    %cst_64 = arith.constant dense<0.000000e+00> : vector<32x256xf32>
    %100 = tpu.matmul %99, %94, %cst_64 {dimension_numbers = #tpu.dot_dimension_numbers<[1], [0], [0], [1], [0, 0, 1, 1], [], []>} : vector<32x8xbf16>, vector<8x256xbf16>, vector<32x256xf32> -> vector<32x256xf32>
    %101 = arith.addf %89, %100 : vector<32x256xf32>
    %c5_65 = arith.constant 5 : index
    %c0_66 = arith.constant 0 : index
    %c0_67 = arith.constant 0 : index
    %102 = vector.load %arg5[%c5_65, %c0_66, %c0_67] : memref<9x32x8xbf16, #tpu.memory_space<vmem>>, vector<1x32x8xbf16>
    %103 = vector.shape_cast %102 : vector<1x32x8xbf16> to vector<32x8xbf16>
    %cst_68 = arith.constant dense<0.000000e+00> : vector<32x256xf32>
    %104 = tpu.matmul %103, %97, %cst_68 {dimension_numbers = #tpu.dot_dimension_numbers<[1], [0], [0], [1], [0, 0, 1, 1], [], []>} : vector<32x8xbf16>, vector<8x256xbf16>, vector<32x256xf32> -> vector<32x256xf32>
    %105 = arith.addf %101, %104 : vector<32x256xf32>
    %c6 = arith.constant 6 : index
    %c0_69 = arith.constant 0 : index
    %c0_70 = arith.constant 0 : index
    %106 = vector.load %arg7[%c6, %c0_69, %c0_70] : memref<9x1x256xbf16, #tpu.memory_space<vmem>>, vector<1x1x256xbf16>
    %107 = vector.shape_cast %106 : vector<1x1x256xbf16> to vector<1x256xbf16>
    %108 = vector.extract_strided_slice %7 {offsets = [0, 32], sizes = [8, 256], strides = [1, 1]} : vector<8x290xbf16> to vector<8x256xbf16>
    %109 = vector.broadcast %107 : vector<1x256xbf16> to vector<8x256xbf16>
    %110 = arith.mulf %108, %109 : vector<8x256xbf16>
    %111 = vector.extract_strided_slice %8 {offsets = [0, 32], sizes = [8, 256], strides = [1, 1]} : vector<8x290xbf16> to vector<8x256xbf16>
    %112 = vector.broadcast %107 : vector<1x256xbf16> to vector<8x256xbf16>
    %113 = arith.mulf %111, %112 : vector<8x256xbf16>
    %c6_71 = arith.constant 6 : index
    %c0_72 = arith.constant 0 : index
    %c0_73 = arith.constant 0 : index
    %114 = vector.load %arg4[%c6_71, %c0_72, %c0_73] : memref<9x32x8xbf16, #tpu.memory_space<vmem>>, vector<1x32x8xbf16>
    %115 = vector.shape_cast %114 : vector<1x32x8xbf16> to vector<32x8xbf16>
    %cst_74 = arith.constant dense<0.000000e+00> : vector<32x256xf32>
    %116 = tpu.matmul %115, %110, %cst_74 {dimension_numbers = #tpu.dot_dimension_numbers<[1], [0], [0], [1], [0, 0, 1, 1], [], []>} : vector<32x8xbf16>, vector<8x256xbf16>, vector<32x256xf32> -> vector<32x256xf32>
    %117 = arith.addf %105, %116 : vector<32x256xf32>
    %c6_75 = arith.constant 6 : index
    %c0_76 = arith.constant 0 : index
    %c0_77 = arith.constant 0 : index
    %118 = vector.load %arg5[%c6_75, %c0_76, %c0_77] : memref<9x32x8xbf16, #tpu.memory_space<vmem>>, vector<1x32x8xbf16>
    %119 = vector.shape_cast %118 : vector<1x32x8xbf16> to vector<32x8xbf16>
    %cst_78 = arith.constant dense<0.000000e+00> : vector<32x256xf32>
    %120 = tpu.matmul %119, %113, %cst_78 {dimension_numbers = #tpu.dot_dimension_numbers<[1], [0], [0], [1], [0, 0, 1, 1], [], []>} : vector<32x8xbf16>, vector<8x256xbf16>, vector<32x256xf32> -> vector<32x256xf32>
    %121 = arith.addf %117, %120 : vector<32x256xf32>
    %c7 = arith.constant 7 : index
    %c0_79 = arith.constant 0 : index
    %c0_80 = arith.constant 0 : index
    %122 = vector.load %arg7[%c7, %c0_79, %c0_80] : memref<9x1x256xbf16, #tpu.memory_space<vmem>>, vector<1x1x256xbf16>
    %123 = vector.shape_cast %122 : vector<1x1x256xbf16> to vector<1x256xbf16>
    %124 = vector.extract_strided_slice %7 {offsets = [0, 33], sizes = [8, 256], strides = [1, 1]} : vector<8x290xbf16> to vector<8x256xbf16>
    %125 = vector.broadcast %123 : vector<1x256xbf16> to vector<8x256xbf16>
    %126 = arith.mulf %124, %125 : vector<8x256xbf16>
    %127 = vector.extract_strided_slice %8 {offsets = [0, 33], sizes = [8, 256], strides = [1, 1]} : vector<8x290xbf16> to vector<8x256xbf16>
    %128 = vector.broadcast %123 : vector<1x256xbf16> to vector<8x256xbf16>
    %129 = arith.mulf %127, %128 : vector<8x256xbf16>
    %c7_81 = arith.constant 7 : index
    %c0_82 = arith.constant 0 : index
    %c0_83 = arith.constant 0 : index
    %130 = vector.load %arg4[%c7_81, %c0_82, %c0_83] : memref<9x32x8xbf16, #tpu.memory_space<vmem>>, vector<1x32x8xbf16>
    %131 = vector.shape_cast %130 : vector<1x32x8xbf16> to vector<32x8xbf16>
    %cst_84 = arith.constant dense<0.000000e+00> : vector<32x256xf32>
    %132 = tpu.matmul %131, %126, %cst_84 {dimension_numbers = #tpu.dot_dimension_numbers<[1], [0], [0], [1], [0, 0, 1, 1], [], []>} : vector<32x8xbf16>, vector<8x256xbf16>, vector<32x256xf32> -> vector<32x256xf32>
    %133 = arith.addf %121, %132 : vector<32x256xf32>
    %c7_85 = arith.constant 7 : index
    %c0_86 = arith.constant 0 : index
    %c0_87 = arith.constant 0 : index
    %134 = vector.load %arg5[%c7_85, %c0_86, %c0_87] : memref<9x32x8xbf16, #tpu.memory_space<vmem>>, vector<1x32x8xbf16>
    %135 = vector.shape_cast %134 : vector<1x32x8xbf16> to vector<32x8xbf16>
    %cst_88 = arith.constant dense<0.000000e+00> : vector<32x256xf32>
    %136 = tpu.matmul %135, %129, %cst_88 {dimension_numbers = #tpu.dot_dimension_numbers<[1], [0], [0], [1], [0, 0, 1, 1], [], []>} : vector<32x8xbf16>, vector<8x256xbf16>, vector<32x256xf32> -> vector<32x256xf32>
    %137 = arith.addf %133, %136 : vector<32x256xf32>
    %c8 = arith.constant 8 : index
    %c0_89 = arith.constant 0 : index
    %c0_90 = arith.constant 0 : index
    %138 = vector.load %arg7[%c8, %c0_89, %c0_90] : memref<9x1x256xbf16, #tpu.memory_space<vmem>>, vector<1x1x256xbf16>
    %139 = vector.shape_cast %138 : vector<1x1x256xbf16> to vector<1x256xbf16>
    %140 = vector.extract_strided_slice %7 {offsets = [0, 34], sizes = [8, 256], strides = [1, 1]} : vector<8x290xbf16> to vector<8x256xbf16>
    %141 = vector.broadcast %139 : vector<1x256xbf16> to vector<8x256xbf16>
    %142 = arith.mulf %140, %141 : vector<8x256xbf16>
    %143 = vector.extract_strided_slice %8 {offsets = [0, 34], sizes = [8, 256], strides = [1, 1]} : vector<8x290xbf16> to vector<8x256xbf16>
    %144 = vector.broadcast %139 : vector<1x256xbf16> to vector<8x256xbf16>
    %145 = arith.mulf %143, %144 : vector<8x256xbf16>
    %c8_91 = arith.constant 8 : index
    %c0_92 = arith.constant 0 : index
    %c0_93 = arith.constant 0 : index
    %146 = vector.load %arg4[%c8_91, %c0_92, %c0_93] : memref<9x32x8xbf16, #tpu.memory_space<vmem>>, vector<1x32x8xbf16>
    %147 = vector.shape_cast %146 : vector<1x32x8xbf16> to vector<32x8xbf16>
    %cst_94 = arith.constant dense<0.000000e+00> : vector<32x256xf32>
    %148 = tpu.matmul %147, %142, %cst_94 {dimension_numbers = #tpu.dot_dimension_numbers<[1], [0], [0], [1], [0, 0, 1, 1], [], []>} : vector<32x8xbf16>, vector<8x256xbf16>, vector<32x256xf32> -> vector<32x256xf32>
    %149 = arith.addf %137, %148 : vector<32x256xf32>
    %c8_95 = arith.constant 8 : index
    %c0_96 = arith.constant 0 : index
    %c0_97 = arith.constant 0 : index
    %150 = vector.load %arg5[%c8_95, %c0_96, %c0_97] : memref<9x32x8xbf16, #tpu.memory_space<vmem>>, vector<1x32x8xbf16>
    %151 = vector.shape_cast %150 : vector<1x32x8xbf16> to vector<32x8xbf16>
    %cst_98 = arith.constant dense<0.000000e+00> : vector<32x256xf32>
    %152 = tpu.matmul %151, %145, %cst_98 {dimension_numbers = #tpu.dot_dimension_numbers<[1], [0], [0], [1], [0, 0, 1, 1], [], []>} : vector<32x8xbf16>, vector<8x256xbf16>, vector<32x256xf32> -> vector<32x256xf32>
    %153 = arith.addf %149, %152 : vector<32x256xf32>
    %c0_99 = arith.constant 0 : index
    %c0_100 = arith.constant 0 : index
    %154 = vector.load %arg6[%c0_99, %c0_100] : memref<32x1xf32, #tpu.memory_space<vmem>>, vector<32x1xf32>
    %155 = vector.broadcast %154 : vector<32x1xf32> to vector<32x256xf32>
    %156 = arith.addf %153, %155 : vector<32x256xf32>
    %157 = vector.extract_strided_slice %156 {offsets = [0, 0], sizes = [8, 256], strides = [1, 1]} : vector<32x256xf32> to vector<8x256xf32>
    %158 = arith.negf %157 : vector<8x256xf32>
    %159 = math.exp %158 : vector<8x256xf32>
    %cst_101 = arith.constant 1.000000e+00 : f32
    %160 = vector.broadcast %cst_101 : f32 to vector<8x256xf32>
    %161 = arith.addf %160, %159 : vector<8x256xf32>
    %162 = arith.divf %160, %161 : vector<8x256xf32>
    %163 = vector.extract_strided_slice %156 {offsets = [8, 0], sizes = [8, 256], strides = [1, 1]} : vector<32x256xf32> to vector<8x256xf32>
    %164 = arith.negf %163 : vector<8x256xf32>
    %165 = math.exp %164 : vector<8x256xf32>
    %cst_102 = arith.constant 1.000000e+00 : f32
    %166 = vector.broadcast %cst_102 : f32 to vector<8x256xf32>
    %167 = arith.addf %166, %165 : vector<8x256xf32>
    %168 = arith.divf %166, %167 : vector<8x256xf32>
    %169 = vector.extract_strided_slice %156 {offsets = [16, 0], sizes = [8, 256], strides = [1, 1]} : vector<32x256xf32> to vector<8x256xf32>
    %170 = arith.negf %169 : vector<8x256xf32>
    %171 = math.exp %170 : vector<8x256xf32>
    %cst_103 = arith.constant 1.000000e+00 : f32
    %172 = vector.broadcast %cst_103 : f32 to vector<8x256xf32>
    %173 = arith.addf %172, %171 : vector<8x256xf32>
    %174 = arith.divf %172, %173 : vector<8x256xf32>
    %175 = vector.extract_strided_slice %156 {offsets = [24, 0], sizes = [8, 256], strides = [1, 1]} : vector<32x256xf32> to vector<8x256xf32>
    %176 = math.tanh %175 : vector<8x256xf32>
    %177 = arith.mulf %168, %4 : vector<8x256xf32>
    %178 = arith.mulf %162, %176 : vector<8x256xf32>
    %179 = arith.addf %177, %178 : vector<8x256xf32>
    %180 = math.tanh %179 : vector<8x256xf32>
    %181 = arith.mulf %174, %180 : vector<8x256xf32>
    %182 = arith.index_cast %arg0 : i32 to index
    %183 = memref.load %arg11[%182] : memref<2xf32, #tpu.memory_space<smem>>
    %c0_104 = arith.constant 0 : index
    %c0_105 = arith.constant 0 : index
    %184 = vector.load %arg8[%c0_104, %c0_105] : memref<8x256xf32, #tpu.memory_space<vmem>>, vector<8x256xf32>
    %185 = vector.broadcast %183 : f32 to vector<8x256xf32>
    %186 = arith.subf %185, %184 : vector<8x256xf32>
    %c0_106 = arith.constant 0 : index
    %c0_107 = arith.constant 0 : index
    %187 = vector.load %arg10[%c0_106, %c0_107] : memref<8x256xf32, #tpu.memory_space<vmem>>, vector<8x256xf32>
    %188 = arith.mulf %186, %187 : vector<8x256xf32>
    %cst_108 = arith.constant 0.000000e+00 : f32
    %189 = vector.broadcast %cst_108 : f32 to vector<8x256xf32>
    %190 = arith.cmpf oge, %188, %189 : vector<8x256xf32>
    %191 = math.floor %188 : vector<8x256xf32>
    %192 = math.ceil %188 : vector<8x256xf32>
    %193 = arith.select %190, %191, %192 : vector<8x256xi1>, vector<8x256xf32>
    %c0_109 = arith.constant 0 : index
    %c0_110 = arith.constant 0 : index
    %194 = vector.load %arg9[%c0_109, %c0_110] : memref<8x256xf32, #tpu.memory_space<vmem>>, vector<8x256xf32>
    %195 = arith.mulf %194, %193 : vector<8x256xf32>
    %196 = arith.subf %186, %195 : vector<8x256xf32>
    %197 = math.absf %196 : vector<8x256xf32>
    %c0_111 = arith.constant 0 : index
    %c0_112 = arith.constant 0 : index
    %198 = vector.load %arg10[%c0_111, %c0_112] : memref<8x256xf32, #tpu.memory_space<vmem>>, vector<8x256xf32>
    %199 = arith.mulf %197, %198 : vector<8x256xf32>
    %cst_113 = arith.constant 2.000000e+01 : f32
    %200 = vector.broadcast %cst_113 : f32 to vector<8x256xf32>
    %201 = arith.mulf %200, %199 : vector<8x256xf32>
    %cst_114 = arith.constant 1.000000e-01 : f32
    %202 = vector.broadcast %cst_114 : f32 to vector<8x256xf32>
    %203 = arith.cmpf olt, %199, %202 : vector<8x256xf32>
    %cst_115 = arith.constant 2.000000e+00 : f32
    %204 = vector.broadcast %cst_115 : f32 to vector<8x256xf32>
    %205 = arith.subf %204, %201 : vector<8x256xf32>
    %cst_116 = arith.constant 1.000000e-03 : f32
    %206 = vector.broadcast %cst_116 : f32 to vector<8x256xf32>
    %207 = arith.mulf %206, %199 : vector<8x256xf32>
    %208 = arith.select %203, %205, %207 : vector<8x256xi1>, vector<8x256xf32>
    %cst_117 = arith.constant 5.000000e-02 : f32
    %209 = vector.broadcast %cst_117 : f32 to vector<8x256xf32>
    %210 = arith.cmpf olt, %199, %209 : vector<8x256xf32>
    %211 = arith.select %210, %201, %208 : vector<8x256xi1>, vector<8x256xf32>
    %cst_118 = arith.constant 1.000000e+00 : f32
    %212 = vector.broadcast %cst_118 : f32 to vector<8x256xf32>
    %213 = arith.subf %212, %211 : vector<8x256xf32>
    %c0_119 = arith.constant 0 : index
    %c0_120 = arith.constant 0 : index
    %c0_121 = arith.constant 0 : index
    %214 = vector.load %arg12[%c0_119, %c0_120, %c0_121] : memref<1x8x256xf32, #tpu.memory_space<vmem>>, vector<1x8x256xf32>
    %215 = vector.shape_cast %214 : vector<1x8x256xf32> to vector<8x256xf32>
    %216 = vector.shape_cast %179 : vector<8x256xf32> to vector<1x8x256xf32>
    tpu.vector_store %arg12[%c0_119, %c0_120, %c0_121], %216 {strides = array<i32>} : memref<1x8x256xf32, #tpu.memory_space<vmem>>, vector<1x8x256xf32>,
    %217 = arith.mulf %211, %179 : vector<8x256xf32>
    %218 = arith.mulf %213, %4 : vector<8x256xf32>
    %219 = arith.addf %217, %218 : vector<8x256xf32>
    %c0_122 = arith.constant 0 : index
    %c0_123 = arith.constant 0 : index
    %c0_124 = arith.constant 0 : index
    %220 = vector.load %arg13[%c0_122, %c0_123, %c0_124] : memref<1x8x256xf32, #tpu.memory_space<vmem>>, vector<1x8x256xf32>
    %221 = vector.shape_cast %220 : vector<1x8x256xf32> to vector<8x256xf32>
    %222 = vector.shape_cast %219 : vector<8x256xf32> to vector<1x8x256xf32>
    tpu.vector_store %arg13[%c0_122, %c0_123, %c0_124], %222 {strides = array<i32>} : memref<1x8x256xf32, #tpu.memory_space<vmem>>, vector<1x8x256xf32>,
    %223 = arith.mulf %211, %181 : vector<8x256xf32>
    %224 = arith.mulf %213, %2 : vector<8x256xf32>
    %225 = arith.addf %223, %224 : vector<8x256xf32>
    %c0_125 = arith.constant 0 : index
    %c0_126 = arith.constant 0 : index
    %c0_127 = arith.constant 0 : index
    %226 = vector.load %arg14[%c0_125, %c0_126, %c0_127] : memref<1x8x256xf32, #tpu.memory_space<vmem>>, vector<1x8x256xf32>
    %227 = vector.shape_cast %226 : vector<1x8x256xf32> to vector<8x256xf32>
    %228 = vector.shape_cast %225 : vector<8x256xf32> to vector<1x8x256xf32>
    tpu.vector_store %arg14[%c0_125, %c0_126, %c0_127], %228 {strides = array<i32>} : memref<1x8x256xf32, #tpu.memory_space<vmem>>, vector<1x8x256xf32>,
    return
  }
  func.func @transform_0(%arg0: i32) -> (i32, i32) {
    %c0_i32 = arith.constant 0 : i32
    %c0_i32_0 = arith.constant 0 : i32
    return %c0_i32, %arg0 : i32, i32
  }
  func.func @transform_1(%arg0: i32) -> (i32, i32, i32) {
    %c0_i32 = arith.constant 0 : i32
    %c0_i32_0 = arith.constant 0 : i32
    %c0_i32_1 = arith.constant 0 : i32
    return %arg0, %c0_i32, %c0_i32_0 : i32, i32, i32
  }
  func.func @transform_2(%arg0: i32) -> (i32, i32, i32) {
    %c0_i32 = arith.constant 0 : i32
    %c0_i32_0 = arith.constant 0 : i32
    %c0_i32_1 = arith.constant 0 : i32
    return %arg0, %c0_i32, %c0_i32_0 : i32, i32, i32
  }
  func.func @transform_3(%arg0: i32) -> (i32, i32, i32) {
    %c0_i32 = arith.constant 0 : i32
    %c0_i32_0 = arith.constant 0 : i32
    %c0_i32_1 = arith.constant 0 : i32
    %c0_i32_2 = arith.constant 0 : i32
    return %c0_i32, %c0_i32_0, %c0_i32_1 : i32, i32, i32
  }
  func.func @transform_4(%arg0: i32) -> (i32, i32, i32) {
    %c0_i32 = arith.constant 0 : i32
    %c0_i32_0 = arith.constant 0 : i32
    %c0_i32_1 = arith.constant 0 : i32
    %c0_i32_2 = arith.constant 0 : i32
    return %c0_i32, %c0_i32_0, %c0_i32_1 : i32, i32, i32
  }
  func.func @transform_5(%arg0: i32) -> (i32, i32) {
    %c0_i32 = arith.constant 0 : i32
    %c0_i32_0 = arith.constant 0 : i32
    %c0_i32_1 = arith.constant 0 : i32
    return %c0_i32, %c0_i32_0 : i32, i32
  }
  func.func @transform_6(%arg0: i32) -> (i32, i32, i32) {
    %c0_i32 = arith.constant 0 : i32
    %c0_i32_0 = arith.constant 0 : i32
    %c0_i32_1 = arith.constant 0 : i32
    %c0_i32_2 = arith.constant 0 : i32
    return %c0_i32, %c0_i32_0, %c0_i32_1 : i32, i32, i32
  }
  func.func @transform_7(%arg0: i32) -> (i32, i32) {
    %c0_i32 = arith.constant 0 : i32
    %c0_i32_0 = arith.constant 0 : i32
    %c0_i32_1 = arith.constant 0 : i32
    return %c0_i32, %c0_i32_0 : i32, i32
  }
  func.func @transform_8(%arg0: i32) -> (i32, i32) {
    %c0_i32 = arith.constant 0 : i32
    %c0_i32_0 = arith.constant 0 : i32
    %c0_i32_1 = arith.constant 0 : i32
    return %c0_i32, %c0_i32_0 : i32, i32
  }
  func.func @transform_9(%arg0: i32) -> (i32, i32) {
    %c0_i32 = arith.constant 0 : i32
    %c0_i32_0 = arith.constant 0 : i32
    %c0_i32_1 = arith.constant 0 : i32
    return %c0_i32, %c0_i32_0 : i32, i32
  }
  func.func @transform_10(%arg0: i32) -> i32 {
    %c0_i32 = arith.constant 0 : i32
    %c0_i32_0 = arith.constant 0 : i32
    return %c0_i32 : i32
  }
  func.func @transform_11(%arg0: i32) -> (i32, i32, i32) {
    %c0_i32 = arith.constant 0 : i32
    %c0_i32_0 = arith.constant 0 : i32
    %c0_i32_1 = arith.constant 0 : i32
    return %arg0, %c0_i32, %c0_i32_0 : i32, i32, i32
  }
  func.func @transform_12(%arg0: i32) -> (i32, i32, i32) {
    %c0_i32 = arith.constant 0 : i32
    %c0_i32_0 = arith.constant 0 : i32
    %c0_i32_1 = arith.constant 0 : i32
    return %arg0, %c0_i32, %c0_i32_0 : i32, i32, i32
  }
  func.func @transform_13(%arg0: i32) -> (i32, i32, i32) {
    %c0_i32 = arith.constant 0 : i32
    %c0_i32_0 = arith.constant 0 : i32
    %c0_i32_1 = arith.constant 0 : i32
    return %arg0, %c0_i32, %c0_i32_0 : i32, i32, i32
  }
}

</mosaic_0001>

<llo_original>
// kernel: recurrent_phased_conv_layer.2
$region0: #{recurrent_phased_conv_layer.2}
  #allocation0 [shape = 'u32[]', space=smem, size = 0x4, offset = 0x4, fixed_abs, tag = 'smem constant byte address 0x4 - core index']
  #allocation1 [shape = 'u32[72,128]{1,0:T(1,128)}', space=vmem, size = 0x9000, scoped, tag = 'internal scratch']
  %s0 = inlined_call_operand.vmem [shape: bf16[36,512], index: 0, kind: input, shape index: {}]
  %s1 = inlined_call_operand.vmem [shape: bf16[8,36], index: 1, kind: input, shape index: {}]
  %s2 = inlined_call_operand.vmem [shape: f32[8,1], index: 2, kind: input, shape index: {}]
  %s3 = inlined_call_operand.vmem [shape: bf16[8,512], index: 3, kind: output, shape index: {}]
  %s4 = sld [smem:[#allocation0]]
  $region83: #{recurrent_phased_conv_layer.2} parent=0
    _
  %s6 = ssub.s32 1, %s4
  %s7 = scalar_select 0, %s6, %s4
  $region1: #{recurrent_phased_conv_layer.2} parent=0
    #allocation2 [shape = 'u8[40960]{0}', space=vmem, size = 0xa000, scoped, tag = 'input window, operand 0']
    loop: start=0, step=1, limit=4
    $region2: #{recurrent_phased_conv_layer.2} parent=1 // loop_pre_header
      _
    $region3: #{recurrent_phased_conv_layer.2} parent=1 // loop_header
      %s9 = sphi 0, %s13
      %p10 = scmp.ge.s32.totalorder %s9, 4
      %s19 = sphi 0, %s21
      %s22 = sphi 0, %s19
      %s23 = sphi 0, %s22
      %s39 = sphi 0, %s23
      %s43 = sphi 0, %s43
      %s45 = sphi 0, %s43
      %s46 = sphi 0, %s45
      %s60 = sphi 0, %s46
      %s64 = sphi 0, %s64
      %s66 = sphi 0, %s64
      %s67 = sphi 0, %s66
      %s81 = sphi 0, %s67
      %s87 = sphi 0, %s89
      %s90 = sphi 0, %s87
      %s91 = sphi 0, %s90
      %s107 = sphi 0, %s91
    $region4: #{recurrent_phased_conv_layer.2} parent=1 // loop_header_branch
      %12 = sbr.rel (%p10) target = $region8
    $region5: #{recurrent_phased_conv_layer.2} parent=1 // loop_body
      %s14 = ssub.s32 %s9, 1
      %s15 = ssub.s32 %s9, 2
      %s16 = sadd.s32 %s9, 1
      %s17 = ssub.s32 %s9, %s16
      %p18 = scmp.eq.s32.totalorder %s17, 0
      %s20 = sadd.s32 %s19, 1
      %s21 = scalar_select %p18, %s19, %s20
      %p24 = pneg %p18
      %p25 = scmp.eq.s32.totalorder %s9, 1
      %p26 = por %p24, %p25
      %p27 = scmp.ne.s32.totalorder %s19, %s22
      %p28 = scmp.eq.s32.totalorder %s9, 0
      %p29 = por %p27, %p28
      %p30 = scmp.ne.s32.totalorder %s19, %s22
      %p31 = scmp.eq.s32.totalorder %s14, 1
      %p32 = por %p30, %p31
      %p33 = scmp.ne.s32.totalorder %s22, %s23
      %p34 = scmp.eq.s32.totalorder %s14, 0
      %p35 = por %p33, %p34
      %p36 = scmp.ne.s32.totalorder %s22, %s23
      %p37 = scmp.eq.s32.totalorder %s15, 1
      %p38 = por %p36, %p37
      %p40 = scmp.ne.s32.totalorder %s23, %s39
      %p41 = scmp.eq.s32.totalorder %s15, 0
      %p42 = por %p40, %p41
      %s44 = sadd.s32 %s43, 1
      %p47 = scmp.eq.s32.totalorder %s9, 1
      %p48 = scmp.ne.s32.totalorder %s43, %s45
      %p49 = scmp.eq.s32.totalorder %s9, 0
      %p50 = por %p48, %p49
      %p51 = scmp.ne.s32.totalorder %s43, %s45
      %p52 = scmp.eq.s32.totalorder %s14, 1
      %p53 = por %p51, %p52
      %p54 = scmp.ne.s32.totalorder %s45, %s46
      %p55 = scmp.eq.s32.totalorder %s14, 0
      %p56 = por %p54, %p55
      %p57 = scmp.ne.s32.totalorder %s45, %s46
      %p58 = scmp.eq.s32.totalorder %s15, 1
      %p59 = por %p57, %p58
      %p61 = scmp.ne.s32.totalorder %s46, %s60
      %p62 = scmp.eq.s32.totalorder %s15, 0
      %p63 = por %p61, %p62
      %s65 = sadd.s32 %s64, 1
      %p68 = scmp.eq.s32.totalorder %s9, 1
      %p69 = scmp.ne.s32.totalorder %s64, %s66
      %p70 = scmp.eq.s32.totalorder %s9, 0
      %p71 = por %p69, %p70
      %p72 = scmp.ne.s32.totalorder %s64, %s66
      %p73 = scmp.eq.s32.totalorder %s14, 1
      %p74 = por %p72, %p73
      %p75 = scmp.ne.s32.totalorder %s66, %s67
      %p76 = scmp.eq.s32.totalorder %s14, 0
      %p77 = por %p75, %p76
      %p78 = scmp.ne.s32.totalorder %s66, %s67
      %p79 = scmp.eq.s32.totalorder %s15, 1
      %p80 = por %p78, %p79
      %p82 = scmp.ne.s32.totalorder %s67, %s81
      %p83 = scmp.eq.s32.totalorder %s15, 0
      %p84 = por %p82, %p83
      %s85 = ssub.s32 %s9, %s16
      %p86 = scmp.eq.s32.totalorder %s85, 0
      %s88 = sadd.s32 %s87, 1
      %s89 = scalar_select %p86, %s87, %s88
      %p92 = pneg %p86
      %p93 = scmp.eq.s32.totalorder %s9, 1
      %p94 = por %p92, %p93
      %p95 = scmp.ne.s32.totalorder %s87, %s90
      %p96 = scmp.eq.s32.totalorder %s9, 0
      %p97 = por %p95, %p96
      %p98 = scmp.ne.s32.totalorder %s87, %s90
      %p99 = scmp.eq.s32.totalorder %s14, 1
      %p100 = por %p98, %p99
      %p101 = scmp.ne.s32.totalorder %s90, %s91
      %p102 = scmp.eq.s32.totalorder %s14, 0
      %p103 = por %p101, %p102
      %p104 = scmp.ne.s32.totalorder %s90, %s91
      %p105 = scmp.eq.s32.totalorder %s15, 1
      %p106 = por %p104, %p105
      %p108 = scmp.ne.s32.totalorder %s91, %s107
      %p109 = scmp.eq.s32.totalorder %s15, 0
      %p110 = por %p108, %p109
      %p111 = scmp.le.s32.totalorder 1, %s9
      %p112 = scmp.lt.s32.totalorder %s9, 3
      %p113 = pnand %p111, %p112
      %p114 = pneg %p113
      // Predicated region
      $region9: #{recurrent_phased_conv_layer.2} parent=5 // pred_check
        _
      $region10: #{recurrent_phased_conv_layer.2} parent=5 // pred_check_branch
        %116 = sbr.rel (%p113) target = $region12
      $region11: #{recurrent_phased_conv_layer.2} parent=5 // pred_region
        %s117 = ssub.s32 %s9, 1
        // Predicated region
        $region13: #{recurrent_phased_conv_layer.2} parent=11 // pred_check
          %p118 = pneg %p56
        $region14: #{recurrent_phased_conv_layer.2} parent=11 // pred_check_branch
          %120 = sbr.rel (%p118) target = $region16
        $region15: #{recurrent_phased_conv_layer.2} parent=11 // pred_region
          _
        $region16: #{recurrent_phased_conv_layer.2} parent=11 // pred_fallthru
          _
        // Predicated region
        $region17: #{recurrent_phased_conv_layer.2} parent=11 // pred_check
          %p121 = pneg %p77
        $region18: #{recurrent_phased_conv_layer.2} parent=11 // pred_check_branch
          %123 = sbr.rel (%p121) target = $region20
        $region19: #{recurrent_phased_conv_layer.2} parent=11 // pred_region
          _
        $region20: #{recurrent_phased_conv_layer.2} parent=11 // pred_fallthru
          _
      $region12: #{recurrent_phased_conv_layer.2} parent=5 // pred_fallthru
        _
      %p124 = scmp.lt.s32.totalorder %s9, 2
      // Predicated region
      $region21: #{recurrent_phased_conv_layer.2} parent=5 // pred_check
        %p125 = pneg %p124
      $region22: #{recurrent_phased_conv_layer.2} parent=5 // pred_check_branch
        %127 = sbr.rel (%p125) target = $region24
      $region23: #{recurrent_phased_conv_layer.2} parent=5 // pred_region
        // Predicated region
        $region25: #{recurrent_phased_conv_layer.2} parent=23 // pred_check
          %p128 = pneg %p29
        $region26: #{recurrent_phased_conv_layer.2} parent=23 // pred_check_branch
          %130 = sbr.rel (%p128) target = $region28
        $region27: #{recurrent_phased_conv_layer.2} parent=23 // pred_region
          %s131 = sand.u32 %s19, 1
          %s132 = sand.u32 %s19, 1
          %s133 = smul.addr %s132, 40
          %s134 = scalar_lea.vmem [#allocation2], %s133
          %s135 = smul.u32 2, %s9
          %s136 = smul.addr %s135, 4
          %s137 = scalar_lea.vmem %s0, %s136
          // Predicated region
          $region29: #{recurrent_phased_conv_layer.2} parent=27 // pred_check
            _
          $region30: #{recurrent_phased_conv_layer.2} parent=27 // pred_check_branch
            %139 = sbr.rel (0) target = $region32
          $region31: #{recurrent_phased_conv_layer.2} parent=27 // pred_region
            // Predicated region
            $region33: #{recurrent_phased_conv_layer.2} parent=31 // pred_check
              _
            $region34: #{recurrent_phased_conv_layer.2} parent=31 // pred_check_branch
              %141 = sbr.rel (0) target = $region36
            $region35: #{recurrent_phased_conv_layer.2} parent=31 // pred_region
              // Predicated region
              $region48: #{recurrent_phased_conv_layer.2} parent=35 // pred_check
                _
              $region49: #{recurrent_phased_conv_layer.2} parent=35 // pred_check_branch
                %165 = sbr.rel (0) target = $region51
              $region50: #{recurrent_phased_conv_layer.2} parent=35 // pred_region
                loop: start=0, step=1, limit=1
                $region52: #{recurrent_phased_conv_layer.2} parent=50 // loop_pre_header
                  _
                $region53: #{recurrent_phased_conv_layer.2} parent=50 // loop_header
                  %s167 = sphi 0, %s171
                  %p168 = scmp.ge.s32.totalorder %s167, 1
                  %s172 = sphi %s137, %s137
                  %s173 = sphi %s134, %s134
                $region54: #{recurrent_phased_conv_layer.2} parent=50 // loop_header_branch
                  %170 = sbr.rel (%p168) target = $region58
                $region55: #{recurrent_phased_conv_layer.2} parent=50 // loop_body
                  %v174 = vld [vmem:[%s172] sm:$0xff]
                  %175 = vst [vmem:[%s173] sm:$0xff] %v174
                  %v176 = vld [vmem:[%s172 + $0x10] sm:$0xff]
                  %177 = vst [vmem:[%s173 + $0x8] sm:$0xff] %v176
                  %v178 = vld [vmem:[%s172 + $0x20] sm:$0xff]
                  %179 = vst [vmem:[%s173 + $0x10] sm:$0xff] %v178
                  %v180 = vld [vmem:[%s172 + $0x30] sm:$0xff]
                  %181 = vst [vmem:[%s173 + $0x18] sm:$0xff] %v180
                  %v182 = vld [vmem:[%s172 + $0x40] sm:$0xff]
                  %183 = vst [vmem:[%s173 + $0x20] sm:$0xff] %v182
                $region56: #{recurrent_phased_conv_layer.2} parent=50 // loop_footer
                  %s171 = sadd.s32 1, %s167
                $region57: #{recurrent_phased_conv_layer.2} parent=50 // loop_footer_branch
                  %166 = sbr.rel target = $region53
                $region58: #{recurrent_phased_conv_layer.2} parent=50 // loop_exit
                  _
              $region51: #{recurrent_phased_conv_layer.2} parent=35 // pred_fallthru
                _
              // Predicated region
              $region59: #{recurrent_phased_conv_layer.2} parent=35 // pred_check
                _
              $region60: #{recurrent_phased_conv_layer.2} parent=35 // pred_check_branch
                %185 = sbr.rel target = $region62
              $region61: #{recurrent_phased_conv_layer.2} parent=35 // pred_region
                _
              $region62: #{recurrent_phased_conv_layer.2} parent=35 // pred_fallthru
                _
            $region36: #{recurrent_phased_conv_layer.2} parent=31 // pred_fallthru
              _
            // Predicated region
            $region37: #{recurrent_phased_conv_layer.2} parent=31 // pred_check
              _
            $region38: #{recurrent_phased_conv_layer.2} parent=31 // pred_check_branch
              %143 = sbr.rel target = $region40
            $region39: #{recurrent_phased_conv_layer.2} parent=31 // pred_region
              %s145 = ssub.s32 256, 1
              loop: start=0, step=1, limit=1
              $region41: #{recurrent_phased_conv_layer.2} parent=39 // loop_pre_header
                _
              $region42: #{recurrent_phased_conv_layer.2} parent=39 // loop_header
                %s147 = sphi 0, %s151
                %p148 = scmp.ge.s32.totalorder %s147, 1
                %s152 = sphi %s137, %s137
                %s153 = sphi %s134, %s134
              $region43: #{recurrent_phased_conv_layer.2} parent=39 // loop_header_branch
                %150 = sbr.rel (%p148) target = $region47
              $region44: #{recurrent_phased_conv_layer.2} parent=39 // loop_body
                %v154 = vld [vmem:[%s152] sm:%s145]
                %155 = vst [vmem:[%s153] sm:%s145] %v154
                %v156 = vld [vmem:[%s152 + $0x10] sm:%s145]
                %157 = vst [vmem:[%s153 + $0x8] sm:%s145] %v156
                %v158 = vld [vmem:[%s152 + $0x20] sm:%s145]
                %159 = vst [vmem:[%s153 + $0x10] sm:%s145] %v158
                %v160 = vld [vmem:[%s152 + $0x30] sm:%s145]
                %161 = vst [vmem:[%s153 + $0x18] sm:%s145] %v160
                %v162 = vld [vmem:[%s152 + $0x40] sm:%s145]
                %163 = vst [vmem:[%s153 + $0x20] sm:%s145] %v162
              $region45: #{recurrent_phased_conv_layer.2} parent=39 // loop_footer
                %s151 = sadd.s32 1, %s147
              $region46: #{recurrent_phased_conv_layer.2} parent=39 // loop_footer_branch
                %146 = sbr.rel target = $region42
              $region47: #{recurrent_phased_conv_layer.2} parent=39 // loop_exit
                _
            $region40: #{recurrent_phased_conv_layer.2} parent=31 // pred_fallthru
              _
          $region32: #{recurrent_phased_conv_layer.2} parent=27 // pred_fallthru
            _
          %186 = vnop
        $region28: #{recurrent_phased_conv_layer.2} parent=23 // pred_fallthru
          _
      $region24: #{recurrent_phased_conv_layer.2} parent=5 // pred_fallthru
        _
      %p187 = scmp.le.s32.totalorder 1, %s9
      %p188 = scmp.lt.s32.totalorder %s9, 3
      %p189 = pnand %p187, %p188
      %p190 = pneg %p189
      // Predicated region
      $region63: #{recurrent_phased_conv_layer.2} parent=5 // pred_check
        _
      $region64: #{recurrent_phased_conv_layer.2} parent=5 // pred_check_branch
        %192 = sbr.rel (%p189) target = $region66
      $region65: #{recurrent_phased_conv_layer.2} parent=5 // pred_region
        %s193 = ssub.s32 %s9, 1
        %s194 = sand.u32 %s22, 1
        %s195 = sand.u32 %s22, 1
        %s196 = smul.addr %s195, 40
        %s197 = scalar_lea.vmem [#allocation2], %s196
        // Predicated region
        $region67: #{recurrent_phased_conv_layer.2} parent=65 // pred_check
          %p198 = pneg %p35
        $region68: #{recurrent_phased_conv_layer.2} parent=65 // pred_check_branch
          %200 = sbr.rel (%p198) target = $region70
        $region69: #{recurrent_phased_conv_layer.2} parent=65 // pred_region
          _
        $region70: #{recurrent_phased_conv_layer.2} parent=65 // pred_fallthru
          _
        %s201 = sand.u32 %s22, 1
        %s202 = sand.u32 %s22, 1
        %s203 = smul.addr %s202, 40
        %s204 = scalar_lea.vmem [#allocation2], %s203
        %p205 = pneg %p35
        %p206 = pneg %p32
        %p207 = pneg %p56
        %p208 = pneg %p53
        %p209 = pneg %p77
        %p210 = pneg %p74
        %p211 = pneg %p103
        %p212 = pneg %p100
        %s213 = smul.u32 2, %s14
        %p214 = scmp.lt.s32.totalorder %s213, 3
        %s215 = scalar_select %p214, %s213, 3
        %s216 = smul.addr %s215, 4
        %s217 = scalar_lea.vmem %s3, %s216
        %s218 = smul.u32 2, %s14
        %s219 = smul.u32 2, %s14
        %p220 = scmp.lt.s32.totalorder %s219, 3
        %s221 = scalar_select %p220, %s219, 3
        %s222 = smul.addr %s221, 4
        %s223 = scalar_lea.vmem %s3, %s222
        %s224 = smul.u32 2, %s14
        %v226 = vld [vmem:[%s1] sm:$0xf]
        %v227 = vld [vmem:[%s197] sm:$0xff]
        %v228 = vld [vmem:[%s197 + $0x8] sm:$0xff]
        %v229 = vld [vmem:[%s197 + $0x10] sm:$0xff]
        %v230 = vld [vmem:[%s197 + $0x18] sm:$0xff]
        %v231 = vld [vmem:[%s197 + $0x20] sm:$0x33]
        %v232 = vld [vmem:[%s2] sm:$0xff]
        %234 = vset.pattern.permute.xlu0 0
        %235 = vperm.xlu0 %234, %v232
        %v236 = vpop.permute.xlu0 %235
        %v243 = vunpack.c.l.b16 %v227
        %v244 = vunpack.c.h.b16 %v227
        %v245 = vunpack.c.l.b16 %v228
        %v246 = vunpack.c.h.b16 %v228
        %v247 = vunpack.c.l.b16 %v229
        %v248 = vunpack.c.h.b16 %v229
        %v249 = vunpack.c.l.b16 %v230
        %v250 = vunpack.c.h.b16 %v230
        %v251 = vunpack.c.l.b16 %v231
        %v252 = vunpack.c.h.b16 %v231
        %v253 = vpack.c.b16 %v245, %v243
        %v254 = vpack.c.b16 %v246, %v244
        %v255 = vpack.c.b16 %v249, %v247
        %v256 = vpack.c.b16 %v250, %v248
        %v257 = vpack.c.b16 %v251, %v251
        %v258 = vpack.c.b16 %v252, %v252
        %vm263 = vcmask 293888
        %v265 = vsel %vm263, %v226, 0
        %vm267 = vcmask 1041408
        %v269 = vsel %vm267, %v257, 0
        %v272 = vsel %vm267, %v258, 0
        %274 = vmatpush.bf16.msra.mxu0 0
        %275 = vmatpush.bf16.msra.mxu0 0
        %276 = vmatpush.bf16.msra.mxu0 0
        %277 = vmatpush.bf16.msra.mxu0 0
        %278 = vmatpush.bf16.msra.mxu0 0
        %279 = vmatpush.bf16.msra.mxu0 %v269
        %280 = vmatpush.bf16.msra.mxu0 %v255
        %281 = vmatpush.bf16.msra.mxu0 %v253
        %282 = vmatmul.bf16.gmra.mxu0 %v265
        %v283 = vpop.f32.mrf.mxu0
        %v284 = vadd.f32 %v236, %v283
        %v285 = vpop.f32.mrf.mxu0
        %286 = vdwg.mxu0
        %287 = vmatpush.bf16.msra.mxu0 0
        %288 = vmatpush.bf16.msra.mxu0 0
        %289 = vmatpush.bf16.msra.mxu0 0
        %290 = vmatpush.bf16.msra.mxu0 0
        %291 = vmatpush.bf16.msra.mxu0 0
        %292 = vmatpush.bf16.msra.mxu0 %v272
        %293 = vmatpush.bf16.msra.mxu0 %v256
        %294 = vmatpush.bf16.msra.mxu0 %v254
        %295 = vmatmul.bf16.gmra.mxu0 %v265
        %v296 = vpop.f32.mrf.mxu0
        %v297 = vadd.f32 %v236, %v296
        %v298 = vpop.f32.mrf.mxu0
        %299 = vdwg.mxu0
        %v300 = vmax.f32 %v284, 0.0
        %v301 = vmax.f32 %v297, 0.0
        %v302 = vpack.c.bf16 %v301, %v300
        %303 = vst [vmem:[%s223] sm:$0xff] %v302
        %s304 = smul.u32 2, %s14
        %p305 = scmp.lt.s32.totalorder %s304, 3
        %s306 = scalar_select %p305, %s304, 3
        %s307 = smul.addr %s306, 4
        %s308 = scalar_lea.vmem %s3, %s307
        // Predicated region
        $region71: #{recurrent_phased_conv_layer.2} parent=65 // pred_check
          %p309 = pneg %p100
        $region72: #{recurrent_phased_conv_layer.2} parent=65 // pred_check_branch
          %311 = sbr.rel (%p309) target = $region74
        $region73: #{recurrent_phased_conv_layer.2} parent=65 // pred_region
          %s312 = smul.u32 2, %s14
        $region74: #{recurrent_phased_conv_layer.2} parent=65 // pred_fallthru
          _
      $region66: #{recurrent_phased_conv_layer.2} parent=5 // pred_fallthru
        _
      %p313 = scmp.le.s32.totalorder 2, %s9
      // Predicated region
      $region75: #{recurrent_phased_conv_layer.2} parent=5 // pred_check
        %p314 = pneg %p313
      $region76: #{recurrent_phased_conv_layer.2} parent=5 // pred_check_branch
        %316 = sbr.rel (%p314) target = $region78
      $region77: #{recurrent_phased_conv_layer.2} parent=5 // pred_region
        %s317 = ssub.s32 %s9, 2
        // Predicated region
        $region79: #{recurrent_phased_conv_layer.2} parent=77 // pred_check
          %p318 = pneg %p106
        $region80: #{recurrent_phased_conv_layer.2} parent=77 // pred_check_branch
          %320 = sbr.rel (%p318) target = $region82
        $region81: #{recurrent_phased_conv_layer.2} parent=77 // pred_region
          %s321 = smul.u32 2, %s15
          %p322 = scmp.lt.s32.totalorder %s321, 3
          %s323 = scalar_select %p322, %s321, 3
          %s324 = smul.addr %s323, 4
          %s325 = scalar_lea.vmem %s3, %s324
        $region82: #{recurrent_phased_conv_layer.2} parent=77 // pred_fallthru
          _
      $region78: #{recurrent_phased_conv_layer.2} parent=5 // pred_fallthru
        _
    $region6: #{recurrent_phased_conv_layer.2} parent=1 // loop_footer
      %s13 = sadd.s32 1, %s9
    $region7: #{recurrent_phased_conv_layer.2} parent=1 // loop_footer_branch
      %8 = sbr.rel target = $region3
    $region8: #{recurrent_phased_conv_layer.2} parent=1 // loop_exit
      _

// kernel: recurrent_phased_conv_layer.3
$region0: #{recurrent_phased_conv_layer.3}
  #allocation0 [shape = 'u32[]', space=smem, size = 0x4, offset = 0x4, fixed_abs, tag = 'smem constant byte address 0x4 - core index']
  #allocation1 [shape = 'u32[72,128]{1,0:T(1,128)}', space=vmem, size = 0x9000, scoped, tag = 'internal scratch']
  %s0 = inlined_call_operand.vmem [shape: bf16[8,512], index: 0, kind: input, shape index: {}]
  %s1 = inlined_call_operand.vmem [shape: f32[2,8,256], index: 1, kind: input, shape index: {}]
  %s2 = inlined_call_operand.vmem [shape: f32[2,8,256], index: 2, kind: input, shape index: {}]
  %s3 = inlined_call_operand.vmem [shape: bf16[9,32,8], index: 3, kind: input, shape index: {}]
  %s4 = inlined_call_operand.vmem [shape: bf16[9,32,8], index: 4, kind: input, shape index: {}]
  %s5 = inlined_call_operand.vmem [shape: f32[32,1], index: 5, kind: input, shape index: {}]
  %s6 = inlined_call_operand.vmem [shape: bf16[9,1,256], index: 6, kind: input, shape index: {}]
  %s7 = inlined_call_operand.vmem [shape: f32[8,256], index: 7, kind: input, shape index: {}]
  %s8 = inlined_call_operand.vmem [shape: f32[8,256], index: 8, kind: input, shape index: {}]
  %s9 = inlined_call_operand.vmem [shape: f32[8,256], index: 9, kind: input, shape index: {}]
  %s10 = inlined_call_operand.vmem [shape: f32[2], index: 10, kind: input, shape index: {}]
  %s11 = inlined_call_operand.vmem [shape: f32[2,8,256], index: 11, kind: output, shape index: {0}]
  %s12 = inlined_call_operand.vmem [shape: f32[2,8,256], index: 12, kind: output, shape index: {1}]
  %s13 = inlined_call_operand.vmem [shape: f32[2,8,256], index: 13, kind: output, shape index: {2}]
  %14 = xla_tuple %s11, %s12, %s13
  %s15 = sld [smem:[#allocation0]]
  $region97: #{recurrent_phased_conv_layer.3} parent=0
    _
  %s17 = ssub.s32 1, %s15
  %s18 = scalar_select 0, %s17, %s15
  $region1: #{recurrent_phased_conv_layer.3} parent=0
    #allocation2 [shape = 'u8[512]{0}', space=smem, size = 0x200, scoped, tag = 'input window, operand 10, single buffered']
    #allocation3 [shape = 's32[2]{0}', space=sflag, size = 0x8, scoped, tag = 'scoped memory for recurrent_phased_conv_layer.3']
    %19 = vsyncpa [#allocation3], 0
    loop: start=0, step=1, limit=4
    $region2: #{recurrent_phased_conv_layer.3} parent=1 // loop_pre_header
      _
    $region3: #{recurrent_phased_conv_layer.3} parent=1 // loop_header
      %s21 = sphi 0, %s25
      %p22 = scmp.ge.s32.totalorder %s21, 4
      %s31 = sphi 0, %s33
      %s34 = sphi 0, %s31
      %s35 = sphi 0, %s34
      %s51 = sphi 0, %s35
      %s57 = sphi 0, %s59
      %s60 = sphi 0, %s57
      %s61 = sphi 0, %s60
      %s77 = sphi 0, %s61
      %s83 = sphi 0, %s85
      %s86 = sphi 0, %s83
      %s87 = sphi 0, %s86
      %s103 = sphi 0, %s87
      %s107 = sphi 0, %s107
      %s109 = sphi 0, %s107
      %s110 = sphi 0, %s109
      %s124 = sphi 0, %s110
      %s128 = sphi 0, %s128
      %s130 = sphi 0, %s128
      %s131 = sphi 0, %s130
      %s145 = sphi 0, %s131
      %s149 = sphi 0, %s149
      %s151 = sphi 0, %s149
      %s152 = sphi 0, %s151
      %s166 = sphi 0, %s152
      %s170 = sphi 0, %s170
      %s172 = sphi 0, %s170
      %s173 = sphi 0, %s172
      %s187 = sphi 0, %s173
      %s191 = sphi 0, %s191
      %s193 = sphi 0, %s191
      %s194 = sphi 0, %s193
      %s208 = sphi 0, %s194
      %s212 = sphi 0, %s212
      %s214 = sphi 0, %s212
      %s215 = sphi 0, %s214
      %s229 = sphi 0, %s215
      %s233 = sphi 0, %s233
      %s235 = sphi 0, %s233
      %s236 = sphi 0, %s235
      %s250 = sphi 0, %s236
      %s254 = sphi 0, %s254
      %s256 = sphi 0, %s254
      %s257 = sphi 0, %s256
      %s271 = sphi 0, %s257
      %s277 = sphi 0, %s279
      %s280 = sphi 0, %s277
      %s281 = sphi 0, %s280
      %s297 = sphi 0, %s281
      %s303 = sphi 0, %s305
      %s306 = sphi 0, %s303
      %s307 = sphi 0, %s306
      %s323 = sphi 0, %s307
      %s329 = sphi 0, %s331
      %s332 = sphi 0, %s329
      %s333 = sphi 0, %s332
      %s349 = sphi 0, %s333
    $region4: #{recurrent_phased_conv_layer.3} parent=1 // loop_header_branch
      %24 = sbr.rel (%p22) target = $region8
    $region5: #{recurrent_phased_conv_layer.3} parent=1 // loop_body
      %s26 = ssub.s32 %s21, 1
      %s27 = ssub.s32 %s21, 2
      %s28 = sadd.s32 %s21, 1
      %s29 = ssub.s32 %s21, %s28
      %p30 = scmp.eq.s32.totalorder %s29, 0
      %s32 = sadd.s32 %s31, 1
      %s33 = scalar_select %p30, %s31, %s32
      %p36 = pneg %p30
      %p37 = scmp.eq.s32.totalorder %s21, 1
      %p38 = por %p36, %p37
      %p39 = scmp.ne.s32.totalorder %s31, %s34
      %p40 = scmp.eq.s32.totalorder %s21, 0
      %p41 = por %p39, %p40
      %p42 = scmp.ne.s32.totalorder %s31, %s34
      %p43 = scmp.eq.s32.totalorder %s26, 1
      %p44 = por %p42, %p43
      %p45 = scmp.ne.s32.totalorder %s34, %s35
      %p46 = scmp.eq.s32.totalorder %s26, 0
      %p47 = por %p45, %p46
      %p48 = scmp.ne.s32.totalorder %s34, %s35
      %p49 = scmp.eq.s32.totalorder %s27, 1
      %p50 = por %p48, %p49
      %p52 = scmp.ne.s32.totalorder %s35, %s51
      %p53 = scmp.eq.s32.totalorder %s27, 0
      %p54 = por %p52, %p53
      %s55 = ssub.s32 %s21, %s28
      %p56 = scmp.eq.s32.totalorder %s55, 0
      %s58 = sadd.s32 %s57, 1
      %s59 = scalar_select %p56, %s57, %s58
      %p62 = pneg %p56
      %p63 = scmp.eq.s32.totalorder %s21, 1
      %p64 = por %p62, %p63
      %p65 = scmp.ne.s32.totalorder %s57, %s60
      %p66 = scmp.eq.s32.totalorder %s21, 0
      %p67 = por %p65, %p66
      %p68 = scmp.ne.s32.totalorder %s57, %s60
      %p69 = scmp.eq.s32.totalorder %s26, 1
      %p70 = por %p68, %p69
      %p71 = scmp.ne.s32.totalorder %s60, %s61
      %p72 = scmp.eq.s32.totalorder %s26, 0
      %p73 = por %p71, %p72
      %p74 = scmp.ne.s32.totalorder %s60, %s61
      %p75 = scmp.eq.s32.totalorder %s27, 1
      %p76 = por %p74, %p75
      %p78 = scmp.ne.s32.totalorder %s61, %s77
      %p79 = scmp.eq.s32.totalorder %s27, 0
      %p80 = por %p78, %p79
      %s81 = ssub.s32 %s21, %s28
      %p82 = scmp.eq.s32.totalorder %s81, 0
      %s84 = sadd.s32 %s83, 1
      %s85 = scalar_select %p82, %s83, %s84
      %p88 = pneg %p82
      %p89 = scmp.eq.s32.totalorder %s21, 1
      %p90 = por %p88, %p89
      %p91 = scmp.ne.s32.totalorder %s83, %s86
      %p92 = scmp.eq.s32.totalorder %s21, 0
      %p93 = por %p91, %p92
      %p94 = scmp.ne.s32.totalorder %s83, %s86
      %p95 = scmp.eq.s32.totalorder %s26, 1
      %p96 = por %p94, %p95
      %p97 = scmp.ne.s32.totalorder %s86, %s87
      %p98 = scmp.eq.s32.totalorder %s26, 0
      %p99 = por %p97, %p98
      %p100 = scmp.ne.s32.totalorder %s86, %s87
      %p101 = scmp.eq.s32.totalorder %s27, 1
      %p102 = por %p100, %p101
      %p104 = scmp.ne.s32.totalorder %s87, %s103
      %p105 = scmp.eq.s32.totalorder %s27, 0
      %p106 = por %p104, %p105
      %s108 = sadd.s32 %s107, 1
      %p111 = scmp.eq.s32.totalorder %s21, 1
      %p112 = scmp.ne.s32.totalorder %s107, %s109
      %p113 = scmp.eq.s32.totalorder %s21, 0
      %p114 = por %p112, %p113
      %p115 = scmp.ne.s32.totalorder %s107, %s109
      %p116 = scmp.eq.s32.totalorder %s26, 1
      %p117 = por %p115, %p116
      %p118 = scmp.ne.s32.totalorder %s109, %s110
      %p119 = scmp.eq.s32.totalorder %s26, 0
      %p120 = por %p118, %p119
      %p121 = scmp.ne.s32.totalorder %s109, %s110
      %p122 = scmp.eq.s32.totalorder %s27, 1
      %p123 = por %p121, %p122
      %p125 = scmp.ne.s32.totalorder %s110, %s124
      %p126 = scmp.eq.s32.totalorder %s27, 0
      %p127 = por %p125, %p126
      %s129 = sadd.s32 %s128, 1
      %p132 = scmp.eq.s32.totalorder %s21, 1
      %p133 = scmp.ne.s32.totalorder %s128, %s130
      %p134 = scmp.eq.s32.totalorder %s21, 0
      %p135 = por %p133, %p134
      %p136 = scmp.ne.s32.totalorder %s128, %s130
      %p137 = scmp.eq.s32.totalorder %s26, 1
      %p138 = por %p136, %p137
      %p139 = scmp.ne.s32.totalorder %s130, %s131
      %p140 = scmp.eq.s32.totalorder %s26, 0
      %p141 = por %p139, %p140
      %p142 = scmp.ne.s32.totalorder %s130, %s131
      %p143 = scmp.eq.s32.totalorder %s27, 1
      %p144 = por %p142, %p143
      %p146 = scmp.ne.s32.totalorder %s131, %s145
      %p147 = scmp.eq.s32.totalorder %s27, 0
      %p148 = por %p146, %p147
      %s150 = sadd.s32 %s149, 1
      %p153 = scmp.eq.s32.totalorder %s21, 1
      %p154 = scmp.ne.s32.totalorder %s149, %s151
      %p155 = scmp.eq.s32.totalorder %s21, 0
      %p156 = por %p154, %p155
      %p157 = scmp.ne.s32.totalorder %s149, %s151
      %p158 = scmp.eq.s32.totalorder %s26, 1
      %p159 = por %p157, %p158
      %p160 = scmp.ne.s32.totalorder %s151, %s152
      %p161 = scmp.eq.s32.totalorder %s26, 0
      %p162 = por %p160, %p161
      %p163 = scmp.ne.s32.totalorder %s151, %s152
      %p164 = scmp.eq.s32.totalorder %s27, 1
      %p165 = por %p163, %p164
      %p167 = scmp.ne.s32.totalorder %s152, %s166
      %p168 = scmp.eq.s32.totalorder %s27, 0
      %p169 = por %p167, %p168
      %s171 = sadd.s32 %s170, 1
      %p174 = scmp.eq.s32.totalorder %s21, 1
      %p175 = scmp.ne.s32.totalorder %s170, %s172
      %p176 = scmp.eq.s32.totalorder %s21, 0
      %p177 = por %p175, %p176
      %p178 = scmp.ne.s32.totalorder %s170, %s172
      %p179 = scmp.eq.s32.totalorder %s26, 1
      %p180 = por %p178, %p179
      %p181 = scmp.ne.s32.totalorder %s172, %s173
      %p182 = scmp.eq.s32.totalorder %s26, 0
      %p183 = por %p181, %p182
      %p184 = scmp.ne.s32.totalorder %s172, %s173
      %p185 = scmp.eq.s32.totalorder %s27, 1
      %p186 = por %p184, %p185
      %p188 = scmp.ne.s32.totalorder %s173, %s187
      %p189 = scmp.eq.s32.totalorder %s27, 0
      %p190 = por %p188, %p189
      %s192 = sadd.s32 %s191, 1
      %p195 = scmp.eq.s32.totalorder %s21, 1
      %p196 = scmp.ne.s32.totalorder %s191, %s193
      %p197 = scmp.eq.s32.totalorder %s21, 0
      %p198 = por %p196, %p197
      %p199 = scmp.ne.s32.totalorder %s191, %s193
      %p200 = scmp.eq.s32.totalorder %s26, 1
      %p201 = por %p199, %p200
      %p202 = scmp.ne.s32.totalorder %s193, %s194
      %p203 = scmp.eq.s32.totalorder %s26, 0
      %p204 = por %p202, %p203
      %p205 = scmp.ne.s32.totalorder %s193, %s194
      %p206 = scmp.eq.s32.totalorder %s27, 1
      %p207 = por %p205, %p206
      %p209 = scmp.ne.s32.totalorder %s194, %s208
      %p210 = scmp.eq.s32.totalorder %s27, 0
      %p211 = por %p209, %p210
      %s213 = sadd.s32 %s212, 1
      %p216 = scmp.eq.s32.totalorder %s21, 1
      %p217 = scmp.ne.s32.totalorder %s212, %s214
      %p218 = scmp.eq.s32.totalorder %s21, 0
      %p219 = por %p217, %p218
      %p220 = scmp.ne.s32.totalorder %s212, %s214
      %p221 = scmp.eq.s32.totalorder %s26, 1
      %p222 = por %p220, %p221
      %p223 = scmp.ne.s32.totalorder %s214, %s215
      %p224 = scmp.eq.s32.totalorder %s26, 0
      %p225 = por %p223, %p224
      %p226 = scmp.ne.s32.totalorder %s214, %s215
      %p227 = scmp.eq.s32.totalorder %s27, 1
      %p228 = por %p226, %p227
      %p230 = scmp.ne.s32.totalorder %s215, %s229
      %p231 = scmp.eq.s32.totalorder %s27, 0
      %p232 = por %p230, %p231
      %s234 = sadd.s32 %s233, 1
      %p237 = scmp.eq.s32.totalorder %s21, 1
      %p238 = scmp.ne.s32.totalorder %s233, %s235
      %p239 = scmp.eq.s32.totalorder %s21, 0
      %p240 = por %p238, %p239
      %p241 = scmp.ne.s32.totalorder %s233, %s235
      %p242 = scmp.eq.s32.totalorder %s26, 1
      %p243 = por %p241, %p242
      %p244 = scmp.ne.s32.totalorder %s235, %s236
      %p245 = scmp.eq.s32.totalorder %s26, 0
      %p246 = por %p244, %p245
      %p247 = scmp.ne.s32.totalorder %s235, %s236
      %p248 = scmp.eq.s32.totalorder %s27, 1
      %p249 = por %p247, %p248
      %p251 = scmp.ne.s32.totalorder %s236, %s250
      %p252 = scmp.eq.s32.totalorder %s27, 0
      %p253 = por %p251, %p252
      %s255 = sadd.s32 %s254, 1
      %p258 = scmp.eq.s32.totalorder %s21, 1
      %p259 = scmp.ne.s32.totalorder %s254, %s256
      %p260 = scmp.eq.s32.totalorder %s21, 0
      %p261 = por %p259, %p260
      %p262 = scmp.ne.s32.totalorder %s254, %s256
      %p263 = scmp.eq.s32.totalorder %s26, 1
      %p264 = por %p262, %p263
      %p265 = scmp.ne.s32.totalorder %s256, %s257
      %p266 = scmp.eq.s32.totalorder %s26, 0
      %p267 = por %p265, %p266
      %p268 = scmp.ne.s32.totalorder %s256, %s257
      %p269 = scmp.eq.s32.totalorder %s27, 1
      %p270 = por %p268, %p269
      %p272 = scmp.ne.s32.totalorder %s257, %s271
      %p273 = scmp.eq.s32.totalorder %s27, 0
      %p274 = por %p272, %p273
      %s275 = ssub.s32 %s21, %s28
      %p276 = scmp.eq.s32.totalorder %s275, 0
      %s278 = sadd.s32 %s277, 1
      %s279 = scalar_select %p276, %s277, %s278
      %p282 = pneg %p276
      %p283 = scmp.eq.s32.totalorder %s21, 1
      %p284 = por %p282, %p283
      %p285 = scmp.ne.s32.totalorder %s277, %s280
      %p286 = scmp.eq.s32.totalorder %s21, 0
      %p287 = por %p285, %p286
      %p288 = scmp.ne.s32.totalorder %s277, %s280
      %p289 = scmp.eq.s32.totalorder %s26, 1
      %p290 = por %p288, %p289
      %p291 = scmp.ne.s32.totalorder %s280, %s281
      %p292 = scmp.eq.s32.totalorder %s26, 0
      %p293 = por %p291, %p292
      %p294 = scmp.ne.s32.totalorder %s280, %s281
      %p295 = scmp.eq.s32.totalorder %s27, 1
      %p296 = por %p294, %p295
      %p298 = scmp.ne.s32.totalorder %s281, %s297
      %p299 = scmp.eq.s32.totalorder %s27, 0
      %p300 = por %p298, %p299
      %s301 = ssub.s32 %s21, %s28
      %p302 = scmp.eq.s32.totalorder %s301, 0
      %s304 = sadd.s32 %s303, 1
      %s305 = scalar_select %p302, %s303, %s304
      %p308 = pneg %p302
      %p309 = scmp.eq.s32.totalorder %s21, 1
      %p310 = por %p308, %p309
      %p311 = scmp.ne.s32.totalorder %s303, %s306
      %p312 = scmp.eq.s32.totalorder %s21, 0
      %p313 = por %p311, %p312
      %p314 = scmp.ne.s32.totalorder %s303, %s306
      %p315 = scmp.eq.s32.totalorder %s26, 1
      %p316 = por %p314, %p315
      %p317 = scmp.ne.s32.totalorder %s306, %s307
      %p318 = scmp.eq.s32.totalorder %s26, 0
      %p319 = por %p317, %p318
      %p320 = scmp.ne.s32.totalorder %s306, %s307
      %p321 = scmp.eq.s32.totalorder %s27, 1
      %p322 = por %p320, %p321
      %p324 = scmp.ne.s32.totalorder %s307, %s323
      %p325 = scmp.eq.s32.totalorder %s27, 0
      %p326 = por %p324, %p325
      %s327 = ssub.s32 %s21, %s28
      %p328 = scmp.eq.s32.totalorder %s327, 0
      %s330 = sadd.s32 %s329, 1
      %s331 = scalar_select %p328, %s329, %s330
      %p334 = pneg %p328
      %p335 = scmp.eq.s32.totalorder %s21, 1
      %p336 = por %p334, %p335
      %p337 = scmp.ne.s32.totalorder %s329, %s332
      %p338 = scmp.eq.s32.totalorder %s21, 0
      %p339 = por %p337, %p338
      %p340 = scmp.ne.s32.totalorder %s329, %s332
      %p341 = scmp.eq.s32.totalorder %s26, 1
      %p342 = por %p340, %p341
      %p343 = scmp.ne.s32.totalorder %s332, %s333
      %p344 = scmp.eq.s32.totalorder %s26, 0
      %p345 = por %p343, %p344
      %p346 = scmp.ne.s32.totalorder %s332, %s333
      %p347 = scmp.eq.s32.totalorder %s27, 1
      %p348 = por %p346, %p347
      %p350 = scmp.ne.s32.totalorder %s333, %s349
      %p351 = scmp.eq.s32.totalorder %s27, 0
      %p352 = por %p350, %p351
      %p353 = scmp.le.s32.totalorder 1, %s21
      %p354 = scmp.lt.s32.totalorder %s21, 3
      %p355 = pnand %p353, %p354
      %p356 = pneg %p355
      // Predicated region
      $region9: #{recurrent_phased_conv_layer.3} parent=5 // pred_check
        _
      $region10: #{recurrent_phased_conv_layer.3} parent=5 // pred_check_branch
        %358 = sbr.rel (%p355) target = $region12
      $region11: #{recurrent_phased_conv_layer.3} parent=5 // pred_region
        %s359 = ssub.s32 %s21, 1
        // Predicated region
        $region13: #{recurrent_phased_conv_layer.3} parent=11 // pred_check
          %p360 = pneg %p120
        $region14: #{recurrent_phased_conv_layer.3} parent=11 // pred_check_branch
          %362 = sbr.rel (%p360) target = $region16
        $region15: #{recurrent_phased_conv_layer.3} parent=11 // pred_region
          _
        $region16: #{recurrent_phased_conv_layer.3} parent=11 // pred_fallthru
          _
        // Predicated region
        $region17: #{recurrent_phased_conv_layer.3} parent=11 // pred_check
          %p363 = pneg %p141
        $region18: #{recurrent_phased_conv_layer.3} parent=11 // pred_check_branch
          %365 = sbr.rel (%p363) target = $region20
        $region19: #{recurrent_phased_conv_layer.3} parent=11 // pred_region
          _
        $region20: #{recurrent_phased_conv_layer.3} parent=11 // pred_fallthru
          _
        // Predicated region
        $region21: #{recurrent_phased_conv_layer.3} parent=11 // pred_check
          %p366 = pneg %p162
        $region22: #{recurrent_phased_conv_layer.3} parent=11 // pred_check_branch
          %368 = sbr.rel (%p366) target = $region24
        $region23: #{recurrent_phased_conv_layer.3} parent=11 // pred_region
          _
        $region24: #{recurrent_phased_conv_layer.3} parent=11 // pred_fallthru
          _
        // Predicated region
        $region25: #{recurrent_phased_conv_layer.3} parent=11 // pred_check
          %p369 = pneg %p183
        $region26: #{recurrent_phased_conv_layer.3} parent=11 // pred_check_branch
          %371 = sbr.rel (%p369) target = $region28
        $region27: #{recurrent_phased_conv_layer.3} parent=11 // pred_region
          _
        $region28: #{recurrent_phased_conv_layer.3} parent=11 // pred_fallthru
          _
        // Predicated region
        $region29: #{recurrent_phased_conv_layer.3} parent=11 // pred_check
          %p372 = pneg %p204
        $region30: #{recurrent_phased_conv_layer.3} parent=11 // pred_check_branch
          %374 = sbr.rel (%p372) target = $region32
        $region31: #{recurrent_phased_conv_layer.3} parent=11 // pred_region
          _
        $region32: #{recurrent_phased_conv_layer.3} parent=11 // pred_fallthru
          _
        // Predicated region
        $region33: #{recurrent_phased_conv_layer.3} parent=11 // pred_check
          %p375 = pneg %p225
        $region34: #{recurrent_phased_conv_layer.3} parent=11 // pred_check_branch
          %377 = sbr.rel (%p375) target = $region36
        $region35: #{recurrent_phased_conv_layer.3} parent=11 // pred_region
          _
        $region36: #{recurrent_phased_conv_layer.3} parent=11 // pred_fallthru
          _
        // Predicated region
        $region37: #{recurrent_phased_conv_layer.3} parent=11 // pred_check
          %p378 = pneg %p246
        $region38: #{recurrent_phased_conv_layer.3} parent=11 // pred_check_branch
          %380 = sbr.rel (%p378) target = $region40
        $region39: #{recurrent_phased_conv_layer.3} parent=11 // pred_region
          _
        $region40: #{recurrent_phased_conv_layer.3} parent=11 // pred_fallthru
          _
        // Predicated region
        $region41: #{recurrent_phased_conv_layer.3} parent=11 // pred_check
          %p381 = pneg %p267
        $region42: #{recurrent_phased_conv_layer.3} parent=11 // pred_check_branch
          %383 = sbr.rel (%p381) target = $region44
        $region43: #{recurrent_phased_conv_layer.3} parent=11 // pred_region
          %385 = vsyncadd [#allocation3], 0
          %s387 = sshll.u32 %s10, 4
          %s388 = int_to_ptr.vmem [resolvable:$true] %s387
          %390 = dma.vmem_to_smem %s388, 16, [#allocation2], [#allocation3]
        $region44: #{recurrent_phased_conv_layer.3} parent=11 // pred_fallthru
          _
      $region12: #{recurrent_phased_conv_layer.3} parent=5 // pred_fallthru
        _
      %p391 = scmp.lt.s32.totalorder %s21, 2
      // Predicated region
      $region45: #{recurrent_phased_conv_layer.3} parent=5 // pred_check
        %p392 = pneg %p391
      $region46: #{recurrent_phased_conv_layer.3} parent=5 // pred_check_branch
        %394 = sbr.rel (%p392) target = $region48
      $region47: #{recurrent_phased_conv_layer.3} parent=5 // pred_region
        // Predicated region
        $region49: #{recurrent_phased_conv_layer.3} parent=47 // pred_check
          %p395 = pneg %p41
        $region50: #{recurrent_phased_conv_layer.3} parent=47 // pred_check_branch
          %397 = sbr.rel (%p395) target = $region52
        $region51: #{recurrent_phased_conv_layer.3} parent=47 // pred_region
          %s398 = smul.u32 2, %s21
          %p399 = scmp.lt.s32.totalorder %s398, 3
          %s400 = scalar_select %p399, %s398, 3
          %s401 = smul.addr %s400, 4
          %s402 = scalar_lea.vmem %s0, %s401
          %s403 = smul.u32 2, %s21
        $region52: #{recurrent_phased_conv_layer.3} parent=47 // pred_fallthru
          _
        // Predicated region
        $region53: #{recurrent_phased_conv_layer.3} parent=47 // pred_check
          %p404 = pneg %p67
        $region54: #{recurrent_phased_conv_layer.3} parent=47 // pred_check_branch
          %406 = sbr.rel (%p404) target = $region56
        $region55: #{recurrent_phased_conv_layer.3} parent=47 // pred_region
          %p407 = scmp.lt.s32.totalorder %s21, 1
          %s408 = scalar_select %p407, %s21, 1
          %s409 = smul.addr %s408, 2
          %s410 = smul.addr %s409, 8
          %s411 = scalar_lea.vmem %s1, %s410
        $region56: #{recurrent_phased_conv_layer.3} parent=47 // pred_fallthru
          _
        // Predicated region
        $region57: #{recurrent_phased_conv_layer.3} parent=47 // pred_check
          %p412 = pneg %p93
        $region58: #{recurrent_phased_conv_layer.3} parent=47 // pred_check_branch
          %414 = sbr.rel (%p412) target = $region60
        $region59: #{recurrent_phased_conv_layer.3} parent=47 // pred_region
          %p415 = scmp.lt.s32.totalorder %s21, 1
          %s416 = scalar_select %p415, %s21, 1
          %s417 = smul.addr %s416, 2
          %s418 = smul.addr %s417, 8
          %s419 = scalar_lea.vmem %s2, %s418
        $region60: #{recurrent_phased_conv_layer.3} parent=47 // pred_fallthru
          _
      $region48: #{recurrent_phased_conv_layer.3} parent=5 // pred_fallthru
        _
      %p420 = scmp.le.s32.totalorder 1, %s21
      %p421 = scmp.lt.s32.totalorder %s21, 3
      %p422 = pnand %p420, %p421
      %p423 = pneg %p422
      // Predicated region
      $region61: #{recurrent_phased_conv_layer.3} parent=5 // pred_check
        _
      $region62: #{recurrent_phased_conv_layer.3} parent=5 // pred_check_branch
        %425 = sbr.rel (%p422) target = $region64
      $region63: #{recurrent_phased_conv_layer.3} parent=5 // pred_region
        %s426 = ssub.s32 %s21, 1
        // Predicated region
        $region65: #{recurrent_phased_conv_layer.3} parent=63 // pred_check
          %p427 = pneg %p267
        $region66: #{recurrent_phased_conv_layer.3} parent=63 // pred_check_branch
          %429 = sbr.rel (%p427) target = $region68
        $region67: #{recurrent_phased_conv_layer.3} parent=63 // pred_region
          %431 = dma.done [#allocation3], 16
        $region68: #{recurrent_phased_conv_layer.3} parent=63 // pred_fallthru
          _
        %432 = sfence
        %s433 = smul.u32 2, %s26
        %p434 = scmp.lt.s32.totalorder %s433, 3
        %s435 = scalar_select %p434, %s433, 3
        %s436 = smul.addr %s435, 4
        %s437 = scalar_lea.vmem %s0, %s436
        %p438 = pneg %p47
        %p439 = pneg %p44
        %p440 = scmp.lt.s32.totalorder %s26, 1
        %s441 = scalar_select %p440, %s26, 1
        %s442 = smul.addr %s441, 2
        %s443 = smul.addr %s442, 8
        %s444 = scalar_lea.vmem %s1, %s443
        %p445 = pneg %p73
        %p446 = pneg %p70
        %p447 = scmp.lt.s32.totalorder %s26, 1
        %s448 = scalar_select %p447, %s26, 1
        %s449 = smul.addr %s448, 2
        %s450 = smul.addr %s449, 8
        %s451 = scalar_lea.vmem %s2, %s450
        %p452 = pneg %p99
        %p453 = pneg %p96
        %p454 = pneg %p120
        %p455 = pneg %p117
        %p456 = pneg %p141
        %p457 = pneg %p138
        %p458 = pneg %p162
        %p459 = pneg %p159
        %p460 = pneg %p183
        %p461 = pneg %p180
        %p462 = pneg %p204
        %p463 = pneg %p201
        %p464 = pneg %p225
        %p465 = pneg %p222
        %p466 = pneg %p246
        %p467 = pneg %p243
        %p468 = pneg %p267
        %p469 = pneg %p264
        %p470 = pneg %p293
        %p471 = pneg %p290
        %p472 = scmp.lt.s32.totalorder %s26, 1
        %s473 = scalar_select %p472, %s26, 1
        %s474 = smul.addr %s473, 2
        %s475 = smul.addr %s474, 8
        %s476 = scalar_lea.vmem %s11, %s475
        %p477 = pneg %p319
        %p478 = pneg %p316
        %p479 = scmp.lt.s32.totalorder %s26, 1
        %s480 = scalar_select %p479, %s26, 1
        %s481 = smul.addr %s480, 2
        %s482 = smul.addr %s481, 8
        %s483 = scalar_lea.vmem %s12, %s482
        %p484 = pneg %p345
        %p485 = pneg %p342
        %p486 = scmp.lt.s32.totalorder %s26, 1
        %s487 = scalar_select %p486, %s26, 1
        %s488 = smul.addr %s487, 2
        %s489 = smul.addr %s488, 8
        %s490 = scalar_lea.vmem %s13, %s489
        %s491 = smul.u32 2, %s26
        %p492 = scmp.lt.s32.totalorder %s491, 3
        %s493 = scalar_select %p492, %s491, 3
        %s494 = smul.addr %s493, 4
        %s495 = scalar_lea.vmem %s0, %s494
        %s496 = smul.u32 2, %s26
        %p497 = scmp.lt.s32.totalorder %s26, 1
        %s498 = scalar_select %p497, %s26, 1
        %s499 = smul.addr %s498, 2
        %s500 = smul.addr %s499, 8
        %s501 = scalar_lea.vmem %s1, %s500
        %p502 = scmp.lt.s32.totalorder %s26, 1
        %s503 = scalar_select %p502, %s26, 1
        %s504 = smul.addr %s503, 2
        %s505 = smul.addr %s504, 8
        %s506 = scalar_lea.vmem %s2, %s505
        %p507 = scmp.lt.s32.totalorder %s26, 1
        %s508 = scalar_select %p507, %s26, 1
        %s509 = smul.addr %s508, 2
        %s510 = smul.addr %s509, 8
        %s511 = scalar_lea.vmem %s11, %s510
        %p512 = scmp.lt.s32.totalorder %s26, 1
        %s513 = scalar_select %p512, %s26, 1
        %s514 = smul.addr %s513, 2
        %s515 = smul.addr %s514, 8
        %s516 = scalar_lea.vmem %s12, %s515
        %p517 = scmp.lt.s32.totalorder %s26, 1
        %s518 = scalar_select %p517, %s26, 1
        %s519 = smul.addr %s518, 2
        %s520 = smul.addr %s519, 8
        %s521 = scalar_lea.vmem %s13, %s520
        %v523 = vld [vmem:[%s495] sm:$0xff]
        %v524 = vld [vmem:[%s501] sm:$0xff]
        %v525 = vld [vmem:[%s501 + $0x8] sm:$0xff]
        %v526 = vld [vmem:[%s506] sm:$0xff]
        %v527 = vld [vmem:[%s506 + $0x8] sm:$0xff]
        %v528 = vpack.c.bf16 %v525, %v524
        %v530 = vunpack.c.l.b16 %v523
        %v531 = vunpack.c.h.b16 %v523
        %v532 = vpack.c.b16 %v530, %v530
        %v533 = vpack.c.b16 %v531, %v531
        %534 = vrot.lane.b32.xlu0 %v532, 17
        %v535 = vpop.permute.xlu0 %534
        %536 = vrot.lane.b32.xlu0 %v533, 17
        %v537 = vpop.permute.xlu0 %536
        %vm538 = vcmask 138240
        %v539 = vsel %vm538, %v535, %v537
        %vm541 = vcmask 138240
        %v544 = vsel %vm541, 0, %v535
        %v547 = vsel %vm541, %v537, 0
        %v550 = vunpack.c.l.b16 %v528
        %v551 = vunpack.c.h.b16 %v528
        %v552 = vpack.c.b16 %v550, %v550
        %v553 = vpack.c.b16 %v551, %v551
        %554 = vrot.lane.b32.xlu0 %v552, 17
        %v555 = vpop.permute.xlu0 %554
        %556 = vrot.lane.b32.xlu0 %v553, 17
        %v557 = vpop.permute.xlu0 %556
        %v558 = vsel %vm538, %v555, %v557
        %v561 = vsel %vm541, 0, %v555
        %v564 = vsel %vm541, %v557, 0
        %v566 = vld [vmem:[%s6] sm:$0x3]
        %568 = vst [vmem:[#allocation1] ss:$9 sm:$0xff] %v566
        %v569 = vld [vmem:[#allocation1] sm:$0xff]
        %v570 = vld [vmem:[#allocation1 + $0x9] sm:$0xff]
        %v571 = vpack.i.b16 %v569, %v569
        %v573 = vperm.slane %v571, 0
        %v574 = vpack.i.b16 %v570, %v570
        %v576 = vperm.slane %v574, 0
        %v577 = vunpack.c.l.bf16 %v544
        %v578 = vunpack.c.l.bf16 %v539
        %v579 = vunpack.c.l.bf16 %v573
        %v580 = vunpack.c.l.bf16 %v576
        %v581 = vmul.f32 %v577, %v579
        %v582 = vmul.f32 %v578, %v580
        %v583 = vpack.c.bf16 %v581, %v581
        %v584 = vpack.c.bf16 %v582, %v582
        %v585 = vunpack.c.l.bf16 %v561
        %v586 = vunpack.c.l.bf16 %v558
        %v587 = vmul.f32 %v585, %v579
        %v588 = vmul.f32 %v586, %v580
        %v589 = vpack.c.bf16 %v587, %v587
        %v590 = vpack.c.bf16 %v588, %v588
        %v591 = vld [vmem:[%s3] sm:$0xf]
        %v592 = vld [vmem:[%s3 + $0x4] sm:$0xf]
        %v593 = vld [vmem:[%s3 + $0x8] sm:$0xf]
        %v594 = vld [vmem:[%s3 + $0xc] sm:$0xf]
        %v595 = vld [vmem:[%s4] sm:$0xf]
        %v596 = vld [vmem:[%s4 + $0x4] sm:$0xf]
        %v597 = vld [vmem:[%s4 + $0x8] sm:$0xf]
        %v598 = vld [vmem:[%s4 + $0xc] sm:$0xf]
        %v603 = vunpack.c.l.b16 %v595
        %v604 = vunpack.c.l.b16 %v596
        %v605 = vunpack.c.l.b16 %v597
        %v606 = vunpack.c.l.b16 %v598
        %v607 = vpack.c.b16 %v604, %v603
        %v608 = vpack.c.b16 %v606, %v605
        %vm609 = vcmask 64512
        %v611 = vsel %vm609, %v607, 0
        %v614 = vsel %vm609, %v608, 0
        %vm616 = vcmask 1043456
        %v618 = vsel %vm616, %v589, 0
        %v621 = vsel %vm616, %v590, 0
        %623 = vmatpush.bf16.msra.mxu0 0
        %624 = vmatpush.bf16.msra.mxu0 0
        %625 = vmatpush.bf16.msra.mxu0 0
        %626 = vmatpush.bf16.msra.mxu0 0
        %627 = vmatpush.bf16.msra.mxu0 0
        %628 = vmatpush.bf16.msra.mxu0 0
        %629 = vmatpush.bf16.msra.mxu0 0
        %630 = vmatpush.bf16.msra.mxu0 %v618
        %631 = vmatmul.bf16.gmra.mxu0 %v611
        %v632 = vpop.f32.mrf.mxu0
        %v633 = vadd.f32 0.0, %v632
        %v634 = vpop.f32.mrf.mxu0
        %v635 = vadd.f32 0.0, %v634
        %636 = vmatmul.bf16.gmra.mxu0 %v614
        %v637 = vpop.f32.mrf.mxu0
        %v638 = vadd.f32 0.0, %v637
        %v639 = vpop.f32.mrf.mxu0
        %v640 = vadd.f32 0.0, %v639
        %641 = vdwg.mxu0
        %642 = vmatpush.bf16.msra.mxu0 0
        %643 = vmatpush.bf16.msra.mxu0 0
        %644 = vmatpush.bf16.msra.mxu0 0
        %645 = vmatpush.bf16.msra.mxu0 0
        %646 = vmatpush.bf16.msra.mxu0 0
        %647 = vmatpush.bf16.msra.mxu0 0
        %648 = vmatpush.bf16.msra.mxu0 0
        %649 = vmatpush.bf16.msra.mxu0 %v621
        %650 = vmatmul.bf16.gmra.mxu0 %v611
        %v651 = vpop.f32.mrf.mxu0
        %v652 = vadd.f32 0.0, %v651
        %v653 = vpop.f32.mrf.mxu0
        %v654 = vadd.f32 0.0, %v653
        %655 = vmatmul.bf16.gmra.mxu0 %v614
        %v656 = vpop.f32.mrf.mxu0
        %v657 = vadd.f32 0.0, %v656
        %v658 = vpop.f32.mrf.mxu0
        %v659 = vadd.f32 0.0, %v658
        %660 = vdwg.mxu0
        %v665 = vunpack.c.l.b16 %v591
        %v666 = vunpack.c.l.b16 %v592
        %v667 = vunpack.c.l.b16 %v593
        %v668 = vunpack.c.l.b16 %v594
        %v669 = vpack.c.b16 %v666, %v665
        %v670 = vpack.c.b16 %v668, %v667
        %v672 = vsel %vm609, %v669, 0
        %v675 = vsel %vm609, %v670, 0
        %v678 = vsel %vm616, %v583, 0
        %v681 = vsel %vm616, %v584, 0
        %683 = vmatpush.bf16.msra.mxu0 0
        %684 = vmatpush.bf16.msra.mxu0 0
        %685 = vmatpush.bf16.msra.mxu0 0
        %686 = vmatpush.bf16.msra.mxu0 0
        %687 = vmatpush.bf16.msra.mxu0 0
        %688 = vmatpush.bf16.msra.mxu0 0
        %689 = vmatpush.bf16.msra.mxu0 0
        %690 = vmatpush.bf16.msra.mxu0 %v678
        %691 = vmatmul.bf16.gmra.mxu0 %v672
        %v692 = vpop.f32.mrf.mxu0
        %v693 = vadd.f32 %v633, %v692
        %v694 = vpop.f32.mrf.mxu0
        %v695 = vadd.f32 %v635, %v694
        %696 = vmatmul.bf16.gmra.mxu0 %v675
        %v697 = vpop.f32.mrf.mxu0
        %v698 = vadd.f32 %v638, %v697
        %v699 = vpop.f32.mrf.mxu0
        %v700 = vadd.f32 %v640, %v699
        %701 = vdwg.mxu0
        %702 = vmatpush.bf16.msra.mxu0 0
        %703 = vmatpush.bf16.msra.mxu0 0
        %704 = vmatpush.bf16.msra.mxu0 0
        %705 = vmatpush.bf16.msra.mxu0 0
        %706 = vmatpush.bf16.msra.mxu0 0
        %707 = vmatpush.bf16.msra.mxu0 0
        %708 = vmatpush.bf16.msra.mxu0 0
        %709 = vmatpush.bf16.msra.mxu0 %v681
        %710 = vmatmul.bf16.gmra.mxu0 %v672
        %v711 = vpop.f32.mrf.mxu0
        %v712 = vadd.f32 %v652, %v711
        %v713 = vpop.f32.mrf.mxu0
        %v714 = vadd.f32 %v654, %v713
        %715 = vmatmul.bf16.gmra.mxu0 %v675
        %v716 = vpop.f32.mrf.mxu0
        %v717 = vadd.f32 %v657, %v716
        %v718 = vpop.f32.mrf.mxu0
        %v719 = vadd.f32 %v659, %v718
        %720 = vdwg.mxu0
        %s721 = scalar_lea.vmem %s6, 2
        %v722 = vld [vmem:[%s721] sm:$0x3]
        %724 = vst [vmem:[#allocation1] ss:$9 sm:$0xff] %v722
        %v725 = vld [vmem:[#allocation1] sm:$0xff]
        %v726 = vld [vmem:[#allocation1 + $0x9] sm:$0xff]
        %v727 = vpack.i.b16 %v725, %v725
        %v729 = vperm.slane %v727, 0
        %v730 = vpack.i.b16 %v726, %v726
        %v732 = vperm.slane %v730, 0
        %v733 = vunpack.c.l.bf16 %v547
        %v734 = vunpack.c.l.bf16 %v729
        %v735 = vunpack.c.l.bf16 %v732
        %738 = vrot.lane.b32.xlu0 %v734, 1
        %v739 = vpop.permute.xlu0 %738
        %740 = vrot.lane.b32.xlu0 %v735, 1
        %v741 = vpop.permute.xlu0 %740
        %vm742 = vcmask 7168
        %v743 = vsel %vm742, %v739, %v741
        %v747 = vmul.f32 %v577, %v739
        %v748 = vmul.f32 %v578, %v743
        %v749 = vmul.f32 %v733, %v741
        %v750 = vpack.c.bf16 %v747, %v747
        %v751 = vpack.c.bf16 %v748, %v748
        %v752 = vpack.c.bf16 %v749, %v749
        %v753 = vunpack.c.l.bf16 %v564
        %v754 = vmul.f32 %v585, %v739
        %v755 = vmul.f32 %v586, %v743
        %v756 = vmul.f32 %v753, %v741
        %v757 = vpack.c.bf16 %v754, %v754
        %v758 = vpack.c.bf16 %v755, %v755
        %v759 = vpack.c.bf16 %v756, %v756
        %s760 = scalar_lea.vmem %s3, 16
        %v761 = vld [vmem:[%s760] sm:$0xf]
        %v762 = vld [vmem:[%s760 + $0x4] sm:$0xf]
        %v763 = vld [vmem:[%s760 + $0x8] sm:$0xf]
        %v764 = vld [vmem:[%s760 + $0xc] sm:$0xf]
        %v769 = vunpack.c.l.b16 %v761
        %v770 = vunpack.c.l.b16 %v762
        %v771 = vunpack.c.l.b16 %v763
        %v772 = vunpack.c.l.b16 %v764
        %v773 = vpack.c.b16 %v770, %v769
        %v774 = vpack.c.b16 %v772, %v771
        %778 = vrot.lane.b32.xlu0 %v750, 127
        %v779 = vpop.permute.xlu0 %778
        %780 = vrot.lane.b32.xlu0 %v751, 127
        %v781 = vpop.permute.xlu0 %780
        %782 = vrot.lane.b32.xlu0 %v752, 127
        %v783 = vpop.permute.xlu0 %782
        %vm784 = vcmask 1039360
        %v785 = vsel %vm784, %v779, %v781
        %v786 = vsel %vm784, %v781, %v783
        %v788 = vsel %vm609, %v773, 0
        %v791 = vsel %vm609, %v774, 0
        %v794 = vsel %vm616, %v785, 0
        %v797 = vsel %vm616, %v786, 0
        %799 = vmatpush.bf16.msra.mxu0 0
        %800 = vmatpush.bf16.msra.mxu0 0
        %801 = vmatpush.bf16.msra.mxu0 0
        %802 = vmatpush.bf16.msra.mxu0 0
        %803 = vmatpush.bf16.msra.mxu0 0
        %804 = vmatpush.bf16.msra.mxu0 0
        %805 = vmatpush.bf16.msra.mxu0 0
        %806 = vmatpush.bf16.msra.mxu0 %v794
        %807 = vmatmul.bf16.gmra.mxu0 %v788
        %v808 = vpop.f32.mrf.mxu0
        %v809 = vadd.f32 0.0, %v808
        %v810 = vpop.f32.mrf.mxu0
        %v811 = vadd.f32 0.0, %v810
        %812 = vmatmul.bf16.gmra.mxu0 %v791
        %v813 = vpop.f32.mrf.mxu0
        %v814 = vadd.f32 0.0, %v813
        %v815 = vpop.f32.mrf.mxu0
        %v816 = vadd.f32 0.0, %v815
        %817 = vdwg.mxu0
        %818 = vmatpush.bf16.msra.mxu0 0
        %819 = vmatpush.bf16.msra.mxu0 0
        %820 = vmatpush.bf16.msra.mxu0 0
        %821 = vmatpush.bf16.msra.mxu0 0
        %822 = vmatpush.bf16.msra.mxu0 0
        %823 = vmatpush.bf16.msra.mxu0 0
        %824 = vmatpush.bf16.msra.mxu0 0
        %825 = vmatpush.bf16.msra.mxu0 %v797
        %826 = vmatmul.bf16.gmra.mxu0 %v788
        %v827 = vpop.f32.mrf.mxu0
        %v828 = vadd.f32 0.0, %v827
        %v829 = vpop.f32.mrf.mxu0
        %v830 = vadd.f32 0.0, %v829
        %831 = vmatmul.bf16.gmra.mxu0 %v791
        %v832 = vpop.f32.mrf.mxu0
        %v833 = vadd.f32 0.0, %v832
        %v834 = vpop.f32.mrf.mxu0
        %v835 = vadd.f32 0.0, %v834
        %836 = vdwg.mxu0
        %v837 = vadd.f32 %v693, %v809
        %v838 = vadd.f32 %v712, %v828
        %v839 = vadd.f32 %v695, %v811
        %v840 = vadd.f32 %v714, %v830
        %v841 = vadd.f32 %v698, %v814
        %v842 = vadd.f32 %v717, %v833
        %v843 = vadd.f32 %v700, %v816
        %v844 = vadd.f32 %v719, %v835
        %s845 = scalar_lea.vmem %s4, 16
        %v846 = vld [vmem:[%s845] sm:$0xf]
        %v847 = vld [vmem:[%s845 + $0x4] sm:$0xf]
        %v848 = vld [vmem:[%s845 + $0x8] sm:$0xf]
        %v849 = vld [vmem:[%s845 + $0xc] sm:$0xf]
        %v854 = vunpack.c.l.b16 %v846
        %v855 = vunpack.c.l.b16 %v847
        %v856 = vunpack.c.l.b16 %v848
        %v857 = vunpack.c.l.b16 %v849
        %v858 = vpack.c.b16 %v855, %v854
        %v859 = vpack.c.b16 %v857, %v856
        %863 = vrot.lane.b32.xlu0 %v757, 127
        %v864 = vpop.permute.xlu0 %863
        %865 = vrot.lane.b32.xlu0 %v758, 127
        %v866 = vpop.permute.xlu0 %865
        %867 = vrot.lane.b32.xlu0 %v759, 127
        %v868 = vpop.permute.xlu0 %867
        %v869 = vsel %vm784, %v864, %v866
        %v870 = vsel %vm784, %v866, %v868
        %v872 = vsel %vm609, %v858, 0
        %v875 = vsel %vm609, %v859, 0
        %v878 = vsel %vm616, %v869, 0
        %v881 = vsel %vm616, %v870, 0
        %883 = vmatpush.bf16.msra.mxu0 0
        %884 = vmatpush.bf16.msra.mxu0 0
        %885 = vmatpush.bf16.msra.mxu0 0
        %886 = vmatpush.bf16.msra.mxu0 0
        %887 = vmatpush.bf16.msra.mxu0 0
        %888 = vmatpush.bf16.msra.mxu0 0
        %889 = vmatpush.bf16.msra.mxu0 0
        %890 = vmatpush.bf16.msra.mxu0 %v878
        %891 = vmatmul.bf16.gmra.mxu0 %v872
        %v892 = vpop.f32.mrf.mxu0
        %v893 = vadd.f32 0.0, %v892
        %v894 = vpop.f32.mrf.mxu0
        %v895 = vadd.f32 0.0, %v894
        %896 = vmatmul.bf16.gmra.mxu0 %v875
        %v897 = vpop.f32.mrf.mxu0
        %v898 = vadd.f32 0.0, %v897
        %v899 = vpop.f32.mrf.mxu0
        %v900 = vadd.f32 0.0, %v899
        %901 = vdwg.mxu0
        %902 = vmatpush.bf16.msra.mxu0 0
        %903 = vmatpush.bf16.msra.mxu0 0
        %904 = vmatpush.bf16.msra.mxu0 0
        %905 = vmatpush.bf16.msra.mxu0 0
        %906 = vmatpush.bf16.msra.mxu0 0
        %907 = vmatpush.bf16.msra.mxu0 0
        %908 = vmatpush.bf16.msra.mxu0 0
        %909 = vmatpush.bf16.msra.mxu0 %v881
        %910 = vmatmul.bf16.gmra.mxu0 %v872
        %v911 = vpop.f32.mrf.mxu0
        %v912 = vadd.f32 0.0, %v911
        %v913 = vpop.f32.mrf.mxu0
        %v914 = vadd.f32 0.0, %v913
        %915 = vmatmul.bf16.gmra.mxu0 %v875
        %v916 = vpop.f32.mrf.mxu0
        %v917 = vadd.f32 0.0, %v916
        %v918 = vpop.f32.mrf.mxu0
        %v919 = vadd.f32 0.0, %v918
        %920 = vdwg.mxu0
        %v921 = vadd.f32 %v837, %v893
        %v922 = vadd.f32 %v838, %v912
        %v923 = vadd.f32 %v839, %v895
        %v924 = vadd.f32 %v840, %v914
        %v925 = vadd.f32 %v841, %v898
        %v926 = vadd.f32 %v842, %v917
        %v927 = vadd.f32 %v843, %v900
        %v928 = vadd.f32 %v844, %v919
        %s929 = scalar_lea.vmem %s6, 4
        %v930 = vld [vmem:[%s929] sm:$0x3]
        %932 = vst [vmem:[#allocation1] ss:$9 sm:$0xff] %v930
        %v933 = vld [vmem:[#allocation1] sm:$0xff]
        %v934 = vld [vmem:[#allocation1 + $0x9] sm:$0xff]
        %v935 = vpack.i.b16 %v933, %v933
        %v937 = vperm.slane %v935, 0
        %v938 = vpack.i.b16 %v934, %v934
        %v940 = vperm.slane %v938, 0
        %v941 = vunpack.c.l.bf16 %v937
        %v942 = vunpack.c.l.bf16 %v940
        %945 = vrot.lane.b32.xlu0 %v941, 2
        %v946 = vpop.permute.xlu0 %945
        %947 = vrot.lane.b32.xlu0 %v942, 2
        %v948 = vpop.permute.xlu0 %947
        %vm949 = vcmask 15360
        %v950 = vsel %vm949, %v946, %v948
        %v954 = vmul.f32 %v577, %v946
        %v955 = vmul.f32 %v578, %v950
        %v956 = vmul.f32 %v733, %v948
        %v957 = vpack.c.bf16 %v954, %v954
        %v958 = vpack.c.bf16 %v955, %v955
        %v959 = vpack.c.bf16 %v956, %v956
        %v960 = vmul.f32 %v585, %v946
        %v961 = vmul.f32 %v586, %v950
        %v962 = vmul.f32 %v753, %v948
        %v963 = vpack.c.bf16 %v960, %v960
        %v964 = vpack.c.bf16 %v961, %v961
        %v965 = vpack.c.bf16 %v962, %v962
        %s966 = scalar_lea.vmem %s3, 32
        %v967 = vld [vmem:[%s966] sm:$0xf]
        %v968 = vld [vmem:[%s966 + $0x4] sm:$0xf]
        %v969 = vld [vmem:[%s966 + $0x8] sm:$0xf]
        %v970 = vld [vmem:[%s966 + $0xc] sm:$0xf]
        %v975 = vunpack.c.l.b16 %v967
        %v976 = vunpack.c.l.b16 %v968
        %v977 = vunpack.c.l.b16 %v969
        %v978 = vunpack.c.l.b16 %v970
        %v979 = vpack.c.b16 %v976, %v975
        %v980 = vpack.c.b16 %v978, %v977
        %984 = vrot.lane.b32.xlu0 %v957, 126
        %v985 = vpop.permute.xlu0 %984
        %986 = vrot.lane.b32.xlu0 %v958, 126
        %v987 = vpop.permute.xlu0 %986
        %988 = vrot.lane.b32.xlu0 %v959, 126
        %v989 = vpop.permute.xlu0 %988
        %vm990 = vcmask 1031168
        %v991 = vsel %vm990, %v985, %v987
        %v992 = vsel %vm990, %v987, %v989
        %v994 = vsel %vm609, %v979, 0
        %v997 = vsel %vm609, %v980, 0
        %v1000 = vsel %vm616, %v991, 0
        %v1003 = vsel %vm616, %v992, 0
        %1005 = vmatpush.bf16.msra.mxu0 0
        %1006 = vmatpush.bf16.msra.mxu0 0
        %1007 = vmatpush.bf16.msra.mxu0 0
        %1008 = vmatpush.bf16.msra.mxu0 0
        %1009 = vmatpush.bf16.msra.mxu0 0
        %1010 = vmatpush.bf16.msra.mxu0 0
        %1011 = vmatpush.bf16.msra.mxu0 0
        %1012 = vmatpush.bf16.msra.mxu0 %v1000
        %1013 = vmatmul.bf16.gmra.mxu0 %v994
        %v1014 = vpop.f32.mrf.mxu0
        %v1015 = vadd.f32 0.0, %v1014
        %v1016 = vpop.f32.mrf.mxu0
        %v1017 = vadd.f32 0.0, %v1016
        %1018 = vmatmul.bf16.gmra.mxu0 %v997
        %v1019 = vpop.f32.mrf.mxu0
        %v1020 = vadd.f32 0.0, %v1019
        %v1021 = vpop.f32.mrf.mxu0
        %v1022 = vadd.f32 0.0, %v1021
        %1023 = vdwg.mxu0
        %1024 = vmatpush.bf16.msra.mxu0 0
        %1025 = vmatpush.bf16.msra.mxu0 0
        %1026 = vmatpush.bf16.msra.mxu0 0
        %1027 = vmatpush.bf16.msra.mxu0 0
        %1028 = vmatpush.bf16.msra.mxu0 0
        %1029 = vmatpush.bf16.msra.mxu0 0
        %1030 = vmatpush.bf16.msra.mxu0 0
        %1031 = vmatpush.bf16.msra.mxu0 %v1003
        %1032 = vmatmul.bf16.gmra.mxu0 %v994
        %v1033 = vpop.f32.mrf.mxu0
        %v1034 = vadd.f32 0.0, %v1033
        %v1035 = vpop.f32.mrf.mxu0
        %v1036 = vadd.f32 0.0, %v1035
        %1037 = vmatmul.bf16.gmra.mxu0 %v997
        %v1038 = vpop.f32.mrf.mxu0
        %v1039 = vadd.f32 0.0, %v1038
        %v1040 = vpop.f32.mrf.mxu0
        %v1041 = vadd.f32 0.0, %v1040
        %1042 = vdwg.mxu0
        %v1043 = vadd.f32 %v921, %v1015
        %v1044 = vadd.f32 %v922, %v1034
        %v1045 = vadd.f32 %v923, %v1017
        %v1046 = vadd.f32 %v924, %v1036
        %v1047 = vadd.f32 %v925, %v1020
        %v1048 = vadd.f32 %v926, %v1039
        %v1049 = vadd.f32 %v927, %v1022
        %v1050 = vadd.f32 %v928, %v1041
        %s1051 = scalar_lea.vmem %s4, 32
        %v1052 = vld [vmem:[%s1051] sm:$0xf]
        %v1053 = vld [vmem:[%s1051 + $0x4] sm:$0xf]
        %v1054 = vld [vmem:[%s1051 + $0x8] sm:$0xf]
        %v1055 = vld [vmem:[%s1051 + $0xc] sm:$0xf]
        %v1060 = vunpack.c.l.b16 %v1052
        %v1061 = vunpack.c.l.b16 %v1053
        %v1062 = vunpack.c.l.b16 %v1054
        %v1063 = vunpack.c.l.b16 %v1055
        %v1064 = vpack.c.b16 %v1061, %v1060
        %v1065 = vpack.c.b16 %v1063, %v1062
        %1069 = vrot.lane.b32.xlu0 %v963, 126
        %v1070 = vpop.permute.xlu0 %1069
        %1071 = vrot.lane.b32.xlu0 %v964, 126
        %v1072 = vpop.permute.xlu0 %1071
        %1073 = vrot.lane.b32.xlu0 %v965, 126
        %v1074 = vpop.permute.xlu0 %1073
        %v1075 = vsel %vm990, %v1070, %v1072
        %v1076 = vsel %vm990, %v1072, %v1074
        %v1078 = vsel %vm609, %v1064, 0
        %v1081 = vsel %vm609, %v1065, 0
        %v1084 = vsel %vm616, %v1075, 0
        %v1087 = vsel %vm616, %v1076, 0
        %1089 = vmatpush.bf16.msra.mxu0 0
        %1090 = vmatpush.bf16.msra.mxu0 0
        %1091 = vmatpush.bf16.msra.mxu0 0
        %1092 = vmatpush.bf16.msra.mxu0 0
        %1093 = vmatpush.bf16.msra.mxu0 0
        %1094 = vmatpush.bf16.msra.mxu0 0
        %1095 = vmatpush.bf16.msra.mxu0 0
        %1096 = vmatpush.bf16.msra.mxu0 %v1084
        %1097 = vmatmul.bf16.gmra.mxu0 %v1078
        %v1098 = vpop.f32.mrf.mxu0
        %v1099 = vadd.f32 0.0, %v1098
        %v1100 = vpop.f32.mrf.mxu0
        %v1101 = vadd.f32 0.0, %v1100
        %1102 = vmatmul.bf16.gmra.mxu0 %v1081
        %v1103 = vpop.f32.mrf.mxu0
        %v1104 = vadd.f32 0.0, %v1103
        %v1105 = vpop.f32.mrf.mxu0
        %v1106 = vadd.f32 0.0, %v1105
        %1107 = vdwg.mxu0
        %1108 = vmatpush.bf16.msra.mxu0 0
        %1109 = vmatpush.bf16.msra.mxu0 0
        %1110 = vmatpush.bf16.msra.mxu0 0
        %1111 = vmatpush.bf16.msra.mxu0 0
        %1112 = vmatpush.bf16.msra.mxu0 0
        %1113 = vmatpush.bf16.msra.mxu0 0
        %1114 = vmatpush.bf16.msra.mxu0 0
        %1115 = vmatpush.bf16.msra.mxu0 %v1087
        %1116 = vmatmul.bf16.gmra.mxu0 %v1078
        %v1117 = vpop.f32.mrf.mxu0
        %v1118 = vadd.f32 0.0, %v1117
        %v1119 = vpop.f32.mrf.mxu0
        %v1120 = vadd.f32 0.0, %v1119
        %1121 = vmatmul.bf16.gmra.mxu0 %v1081
        %v1122 = vpop.f32.mrf.mxu0
        %v1123 = vadd.f32 0.0, %v1122
        %v1124 = vpop.f32.mrf.mxu0
        %v1125 = vadd.f32 0.0, %v1124
        %1126 = vdwg.mxu0
        %v1127 = vadd.f32 %v1043, %v1099
        %v1128 = vadd.f32 %v1044, %v1118
        %v1129 = vadd.f32 %v1045, %v1101
        %v1130 = vadd.f32 %v1046, %v1120
        %v1131 = vadd.f32 %v1047, %v1104
        %v1132 = vadd.f32 %v1048, %v1123
        %v1133 = vadd.f32 %v1049, %v1106
        %v1134 = vadd.f32 %v1050, %v1125
        %s1135 = scalar_lea.vmem %s6, 6
        %v1136 = vld [vmem:[%s1135] sm:$0x3]
        %1138 = vst [vmem:[#allocation1] ss:$9 sm:$0xff] %v1136
        %v1139 = vld [vmem:[#allocation1] sm:$0xff]
        %v1140 = vld [vmem:[#allocation1 + $0x9] sm:$0xff]
        %v1141 = vpack.i.b16 %v1139, %v1139
        %v1143 = vperm.slane %v1141, 0
        %v1144 = vpack.i.b16 %v1140, %v1140
        %v1146 = vperm.slane %v1144, 0
        %v1147 = vunpack.c.l.bf16 %v1143
        %v1148 = vunpack.c.l.bf16 %v1146
        %1151 = vrot.lane.b32.xlu0 %v1147, 16
        %v1152 = vpop.permute.xlu0 %1151
        %1153 = vrot.lane.b32.xlu0 %v1148, 16
        %v1154 = vpop.permute.xlu0 %1153
        %vm1155 = vcmask 130048
        %v1156 = vsel %vm1155, %v1152, %v1154
        %v1160 = vmul.f32 %v577, %v1152
        %v1161 = vmul.f32 %v578, %v1156
        %v1162 = vmul.f32 %v733, %v1154
        %v1163 = vpack.c.bf16 %v1160, %v1160
        %v1164 = vpack.c.bf16 %v1161, %v1161
        %v1165 = vpack.c.bf16 %v1162, %v1162
        %v1166 = vmul.f32 %v585, %v1152
        %v1167 = vmul.f32 %v586, %v1156
        %v1168 = vmul.f32 %v753, %v1154
        %v1169 = vpack.c.bf16 %v1166, %v1166
        %v1170 = vpack.c.bf16 %v1167, %v1167
        %v1171 = vpack.c.bf16 %v1168, %v1168
        %s1172 = scalar_lea.vmem %s3, 48
        %v1173 = vld [vmem:[%s1172] sm:$0xf]
        %v1174 = vld [vmem:[%s1172 + $0x4] sm:$0xf]
        %v1175 = vld [vmem:[%s1172 + $0x8] sm:$0xf]
        %v1176 = vld [vmem:[%s1172 + $0xc] sm:$0xf]
        %v1181 = vunpack.c.l.b16 %v1173
        %v1182 = vunpack.c.l.b16 %v1174
        %v1183 = vunpack.c.l.b16 %v1175
        %v1184 = vunpack.c.l.b16 %v1176
        %v1185 = vpack.c.b16 %v1182, %v1181
        %v1186 = vpack.c.b16 %v1184, %v1183
        %1190 = vrot.lane.b32.xlu0 %v1163, 112
        %v1191 = vpop.permute.xlu0 %1190
        %1192 = vrot.lane.b32.xlu0 %v1164, 112
        %v1193 = vpop.permute.xlu0 %1192
        %1194 = vrot.lane.b32.xlu0 %v1165, 112
        %v1195 = vpop.permute.xlu0 %1194
        %vm1196 = vcmask 916480
        %v1197 = vsel %vm1196, %v1191, %v1193
        %v1198 = vsel %vm1196, %v1193, %v1195
        %v1200 = vsel %vm609, %v1185, 0
        %v1203 = vsel %vm609, %v1186, 0
        %v1206 = vsel %vm616, %v1197, 0
        %v1209 = vsel %vm616, %v1198, 0
        %1211 = vmatpush.bf16.msra.mxu0 0
        %1212 = vmatpush.bf16.msra.mxu0 0
        %1213 = vmatpush.bf16.msra.mxu0 0
        %1214 = vmatpush.bf16.msra.mxu0 0
        %1215 = vmatpush.bf16.msra.mxu0 0
        %1216 = vmatpush.bf16.msra.mxu0 0
        %1217 = vmatpush.bf16.msra.mxu0 0
        %1218 = vmatpush.bf16.msra.mxu0 %v1206
        %1219 = vmatmul.bf16.gmra.mxu0 %v1200
        %v1220 = vpop.f32.mrf.mxu0
        %v1221 = vadd.f32 0.0, %v1220
        %v1222 = vpop.f32.mrf.mxu0
        %v1223 = vadd.f32 0.0, %v1222
        %1224 = vmatmul.bf16.gmra.mxu0 %v1203
        %v1225 = vpop.f32.mrf.mxu0
        %v1226 = vadd.f32 0.0, %v1225
        %v1227 = vpop.f32.mrf.mxu0
        %v1228 = vadd.f32 0.0, %v1227
        %1229 = vdwg.mxu0
        %1230 = vmatpush.bf16.msra.mxu0 0
        %1231 = vmatpush.bf16.msra.mxu0 0
        %1232 = vmatpush.bf16.msra.mxu0 0
        %1233 = vmatpush.bf16.msra.mxu0 0
        %1234 = vmatpush.bf16.msra.mxu0 0
        %1235 = vmatpush.bf16.msra.mxu0 0
        %1236 = vmatpush.bf16.msra.mxu0 0
        %1237 = vmatpush.bf16.msra.mxu0 %v1209
        %1238 = vmatmul.bf16.gmra.mxu0 %v1200
        %v1239 = vpop.f32.mrf.mxu0
        %v1240 = vadd.f32 0.0, %v1239
        %v1241 = vpop.f32.mrf.mxu0
        %v1242 = vadd.f32 0.0, %v1241
        %1243 = vmatmul.bf16.gmra.mxu0 %v1203
        %v1244 = vpop.f32.mrf.mxu0
        %v1245 = vadd.f32 0.0, %v1244
        %v1246 = vpop.f32.mrf.mxu0
        %v1247 = vadd.f32 0.0, %v1246
        %1248 = vdwg.mxu0
        %v1249 = vadd.f32 %v1127, %v1221
        %v1250 = vadd.f32 %v1128, %v1240
        %v1251 = vadd.f32 %v1129, %v1223
        %v1252 = vadd.f32 %v1130, %v1242
        %v1253 = vadd.f32 %v1131, %v1226
        %v1254 = vadd.f32 %v1132, %v1245
        %v1255 = vadd.f32 %v1133, %v1228
        %v1256 = vadd.f32 %v1134, %v1247
        %s1257 = scalar_lea.vmem %s4, 48
        %v1258 = vld [vmem:[%s1257] sm:$0xf]
        %v1259 = vld [vmem:[%s1257 + $0x4] sm:$0xf]
        %v1260 = vld [vmem:[%s1257 + $0x8] sm:$0xf]
        %v1261 = vld [vmem:[%s1257 + $0xc] sm:$0xf]
        %v1266 = vunpack.c.l.b16 %v1258
        %v1267 = vunpack.c.l.b16 %v1259
        %v1268 = vunpack.c.l.b16 %v1260
        %v1269 = vunpack.c.l.b16 %v1261
        %v1270 = vpack.c.b16 %v1267, %v1266
        %v1271 = vpack.c.b16 %v1269, %v1268
        %1275 = vrot.lane.b32.xlu0 %v1169, 112
        %v1276 = vpop.permute.xlu0 %1275
        %1277 = vrot.lane.b32.xlu0 %v1170, 112
        %v1278 = vpop.permute.xlu0 %1277
        %1279 = vrot.lane.b32.xlu0 %v1171, 112
        %v1280 = vpop.permute.xlu0 %1279
        %v1281 = vsel %vm1196, %v1276, %v1278
        %v1282 = vsel %vm1196, %v1278, %v1280
        %v1284 = vsel %vm609, %v1270, 0
        %v1287 = vsel %vm609, %v1271, 0
        %v1290 = vsel %vm616, %v1281, 0
        %v1293 = vsel %vm616, %v1282, 0
        %1295 = vmatpush.bf16.msra.mxu0 0
        %1296 = vmatpush.bf16.msra.mxu0 0
        %1297 = vmatpush.bf16.msra.mxu0 0
        %1298 = vmatpush.bf16.msra.mxu0 0
        %1299 = vmatpush.bf16.msra.mxu0 0
        %1300 = vmatpush.bf16.msra.mxu0 0
        %1301 = vmatpush.bf16.msra.mxu0 0
        %1302 = vmatpush.bf16.msra.mxu0 %v1290
        %1303 = vmatmul.bf16.gmra.mxu0 %v1284
        %v1304 = vpop.f32.mrf.mxu0
        %v1305 = vadd.f32 0.0, %v1304
        %v1306 = vpop.f32.mrf.mxu0
        %v1307 = vadd.f32 0.0, %v1306
        %1308 = vmatmul.bf16.gmra.mxu0 %v1287
        %v1309 = vpop.f32.mrf.mxu0
        %v1310 = vadd.f32 0.0, %v1309
        %v1311 = vpop.f32.mrf.mxu0
        %v1312 = vadd.f32 0.0, %v1311
        %1313 = vdwg.mxu0
        %1314 = vmatpush.bf16.msra.mxu0 0
        %1315 = vmatpush.bf16.msra.mxu0 0
        %1316 = vmatpush.bf16.msra.mxu0 0
        %1317 = vmatpush.bf16.msra.mxu0 0
        %1318 = vmatpush.bf16.msra.mxu0 0
        %1319 = vmatpush.bf16.msra.mxu0 0
        %1320 = vmatpush.bf16.msra.mxu0 0
        %1321 = vmatpush.bf16.msra.mxu0 %v1293
        %1322 = vmatmul.bf16.gmra.mxu0 %v1284
        %v1323 = vpop.f32.mrf.mxu0
        %v1324 = vadd.f32 0.0, %v1323
        %v1325 = vpop.f32.mrf.mxu0
        %v1326 = vadd.f32 0.0, %v1325
        %1327 = vmatmul.bf16.gmra.mxu0 %v1287
        %v1328 = vpop.f32.mrf.mxu0
        %v1329 = vadd.f32 0.0, %v1328
        %v1330 = vpop.f32.mrf.mxu0
        %v1331 = vadd.f32 0.0, %v1330
        %1332 = vdwg.mxu0
        %v1333 = vadd.f32 %v1249, %v1305
        %v1334 = vadd.f32 %v1250, %v1324
        %v1335 = vadd.f32 %v1251, %v1307
        %v1336 = vadd.f32 %v1252, %v1326
        %v1337 = vadd.f32 %v1253, %v1310
        %v1338 = vadd.f32 %v1254, %v1329
        %v1339 = vadd.f32 %v1255, %v1312
        %v1340 = vadd.f32 %v1256, %v1331
        %s1341 = scalar_lea.vmem %s6, 8
        %v1342 = vld [vmem:[%s1341] sm:$0x3]
        %1344 = vst [vmem:[#allocation1] ss:$9 sm:$0xff] %v1342
        %v1345 = vld [vmem:[#allocation1] sm:$0xff]
        %v1346 = vld [vmem:[#allocation1 + $0x9] sm:$0xff]
        %v1347 = vpack.i.b16 %v1345, %v1345
        %v1349 = vperm.slane %v1347, 0
        %v1350 = vpack.i.b16 %v1346, %v1346
        %v1352 = vperm.slane %v1350, 0
        %v1353 = vunpack.c.l.bf16 %v1349
        %v1354 = vunpack.c.l.bf16 %v1352
        %1357 = vrot.lane.b32.xlu0 %v1353, 17
        %v1358 = vpop.permute.xlu0 %1357
        %1359 = vrot.lane.b32.xlu0 %v1354, 17
        %v1360 = vpop.permute.xlu0 %1359
        %v1361 = vsel %vm541, %v1358, %v1360
        %v1365 = vmul.f32 %v577, %v1358
        %v1366 = vmul.f32 %v578, %v1361
        %v1367 = vmul.f32 %v733, %v1360
        %v1368 = vpack.c.bf16 %v1365, %v1365
        %v1369 = vpack.c.bf16 %v1366, %v1366
        %v1370 = vpack.c.bf16 %v1367, %v1367
        %v1371 = vmul.f32 %v585, %v1358
        %v1372 = vmul.f32 %v586, %v1361
        %v1373 = vmul.f32 %v753, %v1360
        %v1374 = vpack.c.bf16 %v1371, %v1371
        %v1375 = vpack.c.bf16 %v1372, %v1372
        %v1376 = vpack.c.bf16 %v1373, %v1373
        %s1377 = scalar_lea.vmem %s3, 64
        %v1378 = vld [vmem:[%s1377] sm:$0xf]
        %v1379 = vld [vmem:[%s1377 + $0x4] sm:$0xf]
        %v1380 = vld [vmem:[%s1377 + $0x8] sm:$0xf]
        %v1381 = vld [vmem:[%s1377 + $0xc] sm:$0xf]
        %v1386 = vunpack.c.l.b16 %v1378
        %v1387 = vunpack.c.l.b16 %v1379
        %v1388 = vunpack.c.l.b16 %v1380
        %v1389 = vunpack.c.l.b16 %v1381
        %v1390 = vpack.c.b16 %v1387, %v1386
        %v1391 = vpack.c.b16 %v1389, %v1388
        %1395 = vrot.lane.b32.xlu0 %v1368, 111
        %v1396 = vpop.permute.xlu0 %1395
        %1397 = vrot.lane.b32.xlu0 %v1369, 111
        %v1398 = vpop.permute.xlu0 %1397
        %1399 = vrot.lane.b32.xlu0 %v1370, 111
        %v1400 = vpop.permute.xlu0 %1399
        %vm1401 = vcmask 908288
        %v1402 = vsel %vm1401, %v1396, %v1398
        %v1403 = vsel %vm1401, %v1398, %v1400
        %v1405 = vsel %vm609, %v1390, 0
        %v1408 = vsel %vm609, %v1391, 0
        %v1411 = vsel %vm616, %v1402, 0
        %v1414 = vsel %vm616, %v1403, 0
        %1416 = vmatpush.bf16.msra.mxu0 0
        %1417 = vmatpush.bf16.msra.mxu0 0
        %1418 = vmatpush.bf16.msra.mxu0 0
        %1419 = vmatpush.bf16.msra.mxu0 0
        %1420 = vmatpush.bf16.msra.mxu0 0
        %1421 = vmatpush.bf16.msra.mxu0 0
        %1422 = vmatpush.bf16.msra.mxu0 0
        %1423 = vmatpush.bf16.msra.mxu0 %v1411
        %1424 = vmatmul.bf16.gmra.mxu0 %v1405
        %v1425 = vpop.f32.mrf.mxu0
        %v1426 = vadd.f32 0.0, %v1425
        %v1427 = vpop.f32.mrf.mxu0
        %v1428 = vadd.f32 0.0, %v1427
        %1429 = vmatmul.bf16.gmra.mxu0 %v1408
        %v1430 = vpop.f32.mrf.mxu0
        %v1431 = vadd.f32 0.0, %v1430
        %v1432 = vpop.f32.mrf.mxu0
        %v1433 = vadd.f32 0.0, %v1432
        %1434 = vdwg.mxu0
        %1435 = vmatpush.bf16.msra.mxu0 0
        %1436 = vmatpush.bf16.msra.mxu0 0
        %1437 = vmatpush.bf16.msra.mxu0 0
        %1438 = vmatpush.bf16.msra.mxu0 0
        %1439 = vmatpush.bf16.msra.mxu0 0
        %1440 = vmatpush.bf16.msra.mxu0 0
        %1441 = vmatpush.bf16.msra.mxu0 0
        %1442 = vmatpush.bf16.msra.mxu0 %v1414
        %1443 = vmatmul.bf16.gmra.mxu0 %v1405
        %v1444 = vpop.f32.mrf.mxu0
        %v1445 = vadd.f32 0.0, %v1444
        %v1446 = vpop.f32.mrf.mxu0
        %v1447 = vadd.f32 0.0, %v1446
        %1448 = vmatmul.bf16.gmra.mxu0 %v1408
        %v1449 = vpop.f32.mrf.mxu0
        %v1450 = vadd.f32 0.0, %v1449
        %v1451 = vpop.f32.mrf.mxu0
        %v1452 = vadd.f32 0.0, %v1451
        %1453 = vdwg.mxu0
        %v1454 = vadd.f32 %v1333, %v1426
        %v1455 = vadd.f32 %v1334, %v1445
        %v1456 = vadd.f32 %v1335, %v1428
        %v1457 = vadd.f32 %v1336, %v1447
        %v1458 = vadd.f32 %v1337, %v1431
        %v1459 = vadd.f32 %v1338, %v1450
        %v1460 = vadd.f32 %v1339, %v1433
        %v1461 = vadd.f32 %v1340, %v1452
        %s1462 = scalar_lea.vmem %s4, 64
        %v1463 = vld [vmem:[%s1462] sm:$0xf]
        %v1464 = vld [vmem:[%s1462 + $0x4] sm:$0xf]
        %v1465 = vld [vmem:[%s1462 + $0x8] sm:$0xf]
        %v1466 = vld [vmem:[%s1462 + $0xc] sm:$0xf]
        %v1471 = vunpack.c.l.b16 %v1463
        %v1472 = vunpack.c.l.b16 %v1464
        %v1473 = vunpack.c.l.b16 %v1465
        %v1474 = vunpack.c.l.b16 %v1466
        %v1475 = vpack.c.b16 %v1472, %v1471
        %v1476 = vpack.c.b16 %v1474, %v1473
        %1480 = vrot.lane.b32.xlu0 %v1374, 111
        %v1481 = vpop.permute.xlu0 %1480
        %1482 = vrot.lane.b32.xlu0 %v1375, 111
        %v1483 = vpop.permute.xlu0 %1482
        %1484 = vrot.lane.b32.xlu0 %v1376, 111
        %v1485 = vpop.permute.xlu0 %1484
        %v1486 = vsel %vm1401, %v1481, %v1483
        %v1487 = vsel %vm1401, %v1483, %v1485
        %v1489 = vsel %vm609, %v1475, 0
        %v1492 = vsel %vm609, %v1476, 0
        %v1495 = vsel %vm616, %v1486, 0
        %v1498 = vsel %vm616, %v1487, 0
        %1500 = vmatpush.bf16.msra.mxu0 0
        %1501 = vmatpush.bf16.msra.mxu0 0
        %1502 = vmatpush.bf16.msra.mxu0 0
        %1503 = vmatpush.bf16.msra.mxu0 0
        %1504 = vmatpush.bf16.msra.mxu0 0
        %1505 = vmatpush.bf16.msra.mxu0 0
        %1506 = vmatpush.bf16.msra.mxu0 0
        %1507 = vmatpush.bf16.msra.mxu0 %v1495
        %1508 = vmatmul.bf16.gmra.mxu0 %v1489
        %v1509 = vpop.f32.mrf.mxu0
        %v1510 = vadd.f32 0.0, %v1509
        %v1511 = vpop.f32.mrf.mxu0
        %v1512 = vadd.f32 0.0, %v1511
        %1513 = vmatmul.bf16.gmra.mxu0 %v1492
        %v1514 = vpop.f32.mrf.mxu0
        %v1515 = vadd.f32 0.0, %v1514
        %v1516 = vpop.f32.mrf.mxu0
        %v1517 = vadd.f32 0.0, %v1516
        %1518 = vdwg.mxu0
        %1519 = vmatpush.bf16.msra.mxu0 0
        %1520 = vmatpush.bf16.msra.mxu0 0
        %1521 = vmatpush.bf16.msra.mxu0 0
        %1522 = vmatpush.bf16.msra.mxu0 0
        %1523 = vmatpush.bf16.msra.mxu0 0
        %1524 = vmatpush.bf16.msra.mxu0 0
        %1525 = vmatpush.bf16.msra.mxu0 0
        %1526 = vmatpush.bf16.msra.mxu0 %v1498
        %1527 = vmatmul.bf16.gmra.mxu0 %v1489
        %v1528 = vpop.f32.mrf.mxu0
        %v1529 = vadd.f32 0.0, %v1528
        %v1530 = vpop.f32.mrf.mxu0
        %v1531 = vadd.f32 0.0, %v1530
        %1532 = vmatmul.bf16.gmra.mxu0 %v1492
        %v1533 = vpop.f32.mrf.mxu0
        %v1534 = vadd.f32 0.0, %v1533
        %v1535 = vpop.f32.mrf.mxu0
        %v1536 = vadd.f32 0.0, %v1535
        %1537 = vdwg.mxu0
        %v1538 = vadd.f32 %v1454, %v1510
        %v1539 = vadd.f32 %v1455, %v1529
        %v1540 = vadd.f32 %v1456, %v1512
        %v1541 = vadd.f32 %v1457, %v1531
        %v1542 = vadd.f32 %v1458, %v1515
        %v1543 = vadd.f32 %v1459, %v1534
        %v1544 = vadd.f32 %v1460, %v1517
        %v1545 = vadd.f32 %v1461, %v1536
        %s1546 = scalar_lea.vmem %s6, 10
        %v1547 = vld [vmem:[%s1546] sm:$0x3]
        %1549 = vst [vmem:[#allocation1] ss:$9 sm:$0xff] %v1547
        %v1550 = vld [vmem:[#allocation1] sm:$0xff]
        %v1551 = vld [vmem:[#allocation1 + $0x9] sm:$0xff]
        %v1552 = vpack.i.b16 %v1550, %v1550
        %v1554 = vperm.slane %v1552, 0
        %v1555 = vpack.i.b16 %v1551, %v1551
        %v1557 = vperm.slane %v1555, 0
        %v1558 = vunpack.c.l.bf16 %v1554
        %v1559 = vunpack.c.l.bf16 %v1557
        %1562 = vrot.lane.b32.xlu0 %v1558, 18
        %v1563 = vpop.permute.xlu0 %1562
        %1564 = vrot.lane.b32.xlu0 %v1559, 18
        %v1565 = vpop.permute.xlu0 %1564
        %vm1566 = vcmask 146432
        %v1567 = vsel %vm1566, %v1563, %v1565
        %v1571 = vmul.f32 %v577, %v1563
        %v1572 = vmul.f32 %v578, %v1567
        %v1573 = vmul.f32 %v733, %v1565
        %v1574 = vpack.c.bf16 %v1571, %v1571
        %v1575 = vpack.c.bf16 %v1572, %v1572
        %v1576 = vpack.c.bf16 %v1573, %v1573
        %v1577 = vmul.f32 %v585, %v1563
        %v1578 = vmul.f32 %v586, %v1567
        %v1579 = vmul.f32 %v753, %v1565
        %v1580 = vpack.c.bf16 %v1577, %v1577
        %v1581 = vpack.c.bf16 %v1578, %v1578
        %v1582 = vpack.c.bf16 %v1579, %v1579
        %s1583 = scalar_lea.vmem %s3, 80
        %v1584 = vld [vmem:[%s1583] sm:$0xf]
        %v1585 = vld [vmem:[%s1583 + $0x4] sm:$0xf]
        %v1586 = vld [vmem:[%s1583 + $0x8] sm:$0xf]
        %v1587 = vld [vmem:[%s1583 + $0xc] sm:$0xf]
        %v1592 = vunpack.c.l.b16 %v1584
        %v1593 = vunpack.c.l.b16 %v1585
        %v1594 = vunpack.c.l.b16 %v1586
        %v1595 = vunpack.c.l.b16 %v1587
        %v1596 = vpack.c.b16 %v1593, %v1592
        %v1597 = vpack.c.b16 %v1595, %v1594
        %1601 = vrot.lane.b32.xlu0 %v1574, 110
        %v1602 = vpop.permute.xlu0 %1601
        %1603 = vrot.lane.b32.xlu0 %v1575, 110
        %v1604 = vpop.permute.xlu0 %1603
        %1605 = vrot.lane.b32.xlu0 %v1576, 110
        %v1606 = vpop.permute.xlu0 %1605
        %vm1607 = vcmask 900096
        %v1608 = vsel %vm1607, %v1602, %v1604
        %v1609 = vsel %vm1607, %v1604, %v1606
        %v1611 = vsel %vm609, %v1596, 0
        %v1614 = vsel %vm609, %v1597, 0
        %v1617 = vsel %vm616, %v1608, 0
        %v1620 = vsel %vm616, %v1609, 0
        %1622 = vmatpush.bf16.msra.mxu0 0
        %1623 = vmatpush.bf16.msra.mxu0 0
        %1624 = vmatpush.bf16.msra.mxu0 0
        %1625 = vmatpush.bf16.msra.mxu0 0
        %1626 = vmatpush.bf16.msra.mxu0 0
        %1627 = vmatpush.bf16.msra.mxu0 0
        %1628 = vmatpush.bf16.msra.mxu0 0
        %1629 = vmatpush.bf16.msra.mxu0 %v1617
        %1630 = vmatmul.bf16.gmra.mxu0 %v1611
        %v1631 = vpop.f32.mrf.mxu0
        %v1632 = vadd.f32 0.0, %v1631
        %v1633 = vpop.f32.mrf.mxu0
        %v1634 = vadd.f32 0.0, %v1633
        %1635 = vmatmul.bf16.gmra.mxu0 %v1614
        %v1636 = vpop.f32.mrf.mxu0
        %v1637 = vadd.f32 0.0, %v1636
        %v1638 = vpop.f32.mrf.mxu0
        %v1639 = vadd.f32 0.0, %v1638
        %1640 = vdwg.mxu0
        %1641 = vmatpush.bf16.msra.mxu0 0
        %1642 = vmatpush.bf16.msra.mxu0 0
        %1643 = vmatpush.bf16.msra.mxu0 0
        %1644 = vmatpush.bf16.msra.mxu0 0
        %1645 = vmatpush.bf16.msra.mxu0 0
        %1646 = vmatpush.bf16.msra.mxu0 0
        %1647 = vmatpush.bf16.msra.mxu0 0
        %1648 = vmatpush.bf16.msra.mxu0 %v1620
        %1649 = vmatmul.bf16.gmra.mxu0 %v1611
        %v1650 = vpop.f32.mrf.mxu0
        %v1651 = vadd.f32 0.0, %v1650
        %v1652 = vpop.f32.mrf.mxu0
        %v1653 = vadd.f32 0.0, %v1652
        %1654 = vmatmul.bf16.gmra.mxu0 %v1614
        %v1655 = vpop.f32.mrf.mxu0
        %v1656 = vadd.f32 0.0, %v1655
        %v1657 = vpop.f32.mrf.mxu0
        %v1658 = vadd.f32 0.0, %v1657
        %1659 = vdwg.mxu0
        %v1660 = vadd.f32 %v1538, %v1632
        %v1661 = vadd.f32 %v1539, %v1651
        %v1662 = vadd.f32 %v1540, %v1634
        %v1663 = vadd.f32 %v1541, %v1653
        %v1664 = vadd.f32 %v1542, %v1637
        %v1665 = vadd.f32 %v1543, %v1656
        %v1666 = vadd.f32 %v1544, %v1639
        %v1667 = vadd.f32 %v1545, %v1658
        %s1668 = scalar_lea.vmem %s4, 80
        %v1669 = vld [vmem:[%s1668] sm:$0xf]
        %v1670 = vld [vmem:[%s1668 + $0x4] sm:$0xf]
        %v1671 = vld [vmem:[%s1668 + $0x8] sm:$0xf]
        %v1672 = vld [vmem:[%s1668 + $0xc] sm:$0xf]
        %v1677 = vunpack.c.l.b16 %v1669
        %v1678 = vunpack.c.l.b16 %v1670
        %v1679 = vunpack.c.l.b16 %v1671
        %v1680 = vunpack.c.l.b16 %v1672
        %v1681 = vpack.c.b16 %v1678, %v1677
        %v1682 = vpack.c.b16 %v1680, %v1679
        %1686 = vrot.lane.b32.xlu0 %v1580, 110
        %v1687 = vpop.permute.xlu0 %1686
        %1688 = vrot.lane.b32.xlu0 %v1581, 110
        %v1689 = vpop.permute.xlu0 %1688
        %1690 = vrot.lane.b32.xlu0 %v1582, 110
        %v1691 = vpop.permute.xlu0 %1690
        %v1692 = vsel %vm1607, %v1687, %v1689
        %v1693 = vsel %vm1607, %v1689, %v1691
        %v1695 = vsel %vm609, %v1681, 0
        %v1698 = vsel %vm609, %v1682, 0
        %v1701 = vsel %vm616, %v1692, 0
        %v1704 = vsel %vm616, %v1693, 0
        %1706 = vmatpush.bf16.msra.mxu0 0
        %1707 = vmatpush.bf16.msra.mxu0 0
        %1708 = vmatpush.bf16.msra.mxu0 0
        %1709 = vmatpush.bf16.msra.mxu0 0
        %1710 = vmatpush.bf16.msra.mxu0 0
        %1711 = vmatpush.bf16.msra.mxu0 0
        %1712 = vmatpush.bf16.msra.mxu0 0
        %1713 = vmatpush.bf16.msra.mxu0 %v1701
        %1714 = vmatmul.bf16.gmra.mxu0 %v1695
        %v1715 = vpop.f32.mrf.mxu0
        %v1716 = vadd.f32 0.0, %v1715
        %v1717 = vpop.f32.mrf.mxu0
        %v1718 = vadd.f32 0.0, %v1717
        %1719 = vmatmul.bf16.gmra.mxu0 %v1698
        %v1720 = vpop.f32.mrf.mxu0
        %v1721 = vadd.f32 0.0, %v1720
        %v1722 = vpop.f32.mrf.mxu0
        %v1723 = vadd.f32 0.0, %v1722
        %1724 = vdwg.mxu0
        %1725 = vmatpush.bf16.msra.mxu0 0
        %1726 = vmatpush.bf16.msra.mxu0 0
        %1727 = vmatpush.bf16.msra.mxu0 0
        %1728 = vmatpush.bf16.msra.mxu0 0
        %1729 = vmatpush.bf16.msra.mxu0 0
        %1730 = vmatpush.bf16.msra.mxu0 0
        %1731 = vmatpush.bf16.msra.mxu0 0
        %1732 = vmatpush.bf16.msra.mxu0 %v1704
        %1733 = vmatmul.bf16.gmra.mxu0 %v1695
        %v1734 = vpop.f32.mrf.mxu0
        %v1735 = vadd.f32 0.0, %v1734
        %v1736 = vpop.f32.mrf.mxu0
        %v1737 = vadd.f32 0.0, %v1736
        %1738 = vmatmul.bf16.gmra.mxu0 %v1698
        %v1739 = vpop.f32.mrf.mxu0
        %v1740 = vadd.f32 0.0, %v1739
        %v1741 = vpop.f32.mrf.mxu0
        %v1742 = vadd.f32 0.0, %v1741
        %1743 = vdwg.mxu0
        %v1744 = vadd.f32 %v1660, %v1716
        %v1745 = vadd.f32 %v1661, %v1735
        %v1746 = vadd.f32 %v1662, %v1718
        %v1747 = vadd.f32 %v1663, %v1737
        %v1748 = vadd.f32 %v1664, %v1721
        %v1749 = vadd.f32 %v1665, %v1740
        %v1750 = vadd.f32 %v1666, %v1723
        %v1751 = vadd.f32 %v1667, %v1742
        %s1752 = scalar_lea.vmem %s6, 12
        %v1753 = vld [vmem:[%s1752] sm:$0x3]
        %1755 = vst [vmem:[#allocation1] ss:$9 sm:$0xff] %v1753
        %v1756 = vld [vmem:[#allocation1] sm:$0xff]
        %v1757 = vld [vmem:[#allocation1 + $0x9] sm:$0xff]
        %v1758 = vpack.i.b16 %v1756, %v1756
        %v1760 = vperm.slane %v1758, 0
        %v1761 = vpack.i.b16 %v1757, %v1757
        %v1763 = vperm.slane %v1761, 0
        %v1764 = vunpack.c.l.bf16 %v1760
        %v1765 = vunpack.c.l.bf16 %v1763
        %1768 = vrot.lane.b32.xlu0 %v1764, 32
        %v1769 = vpop.permute.xlu0 %1768
        %1770 = vrot.lane.b32.xlu0 %v1765, 32
        %v1771 = vpop.permute.xlu0 %1770
        %vm1772 = vcmask 261120
        %v1773 = vsel %vm1772, %v1769, %v1771
        %v1777 = vmul.f32 %v577, %v1769
        %v1778 = vmul.f32 %v578, %v1773
        %v1779 = vmul.f32 %v733, %v1771
        %v1780 = vpack.c.bf16 %v1777, %v1777
        %v1781 = vpack.c.bf16 %v1778, %v1778
        %v1782 = vpack.c.bf16 %v1779, %v1779
        %v1783 = vmul.f32 %v585, %v1769
        %v1784 = vmul.f32 %v586, %v1773
        %v1785 = vmul.f32 %v753, %v1771
        %v1786 = vpack.c.bf16 %v1783, %v1783
        %v1787 = vpack.c.bf16 %v1784, %v1784
        %v1788 = vpack.c.bf16 %v1785, %v1785
        %s1789 = scalar_lea.vmem %s3, 96
        %v1790 = vld [vmem:[%s1789] sm:$0xf]
        %v1791 = vld [vmem:[%s1789 + $0x4] sm:$0xf]
        %v1792 = vld [vmem:[%s1789 + $0x8] sm:$0xf]
        %v1793 = vld [vmem:[%s1789 + $0xc] sm:$0xf]
        %v1798 = vunpack.c.l.b16 %v1790
        %v1799 = vunpack.c.l.b16 %v1791
        %v1800 = vunpack.c.l.b16 %v1792
        %v1801 = vunpack.c.l.b16 %v1793
        %v1802 = vpack.c.b16 %v1799, %v1798
        %v1803 = vpack.c.b16 %v1801, %v1800
        %1807 = vrot.lane.b32.xlu0 %v1780, 96
        %v1808 = vpop.permute.xlu0 %1807
        %1809 = vrot.lane.b32.xlu0 %v1781, 96
        %v1810 = vpop.permute.xlu0 %1809
        %1811 = vrot.lane.b32.xlu0 %v1782, 96
        %v1812 = vpop.permute.xlu0 %1811
        %vm1813 = vcmask 785408
        %v1814 = vsel %vm1813, %v1808, %v1810
        %v1815 = vsel %vm1813, %v1810, %v1812
        %v1817 = vsel %vm609, %v1802, 0
        %v1820 = vsel %vm609, %v1803, 0
        %v1823 = vsel %vm616, %v1814, 0
        %v1826 = vsel %vm616, %v1815, 0
        %1828 = vmatpush.bf16.msra.mxu0 0
        %1829 = vmatpush.bf16.msra.mxu0 0
        %1830 = vmatpush.bf16.msra.mxu0 0
        %1831 = vmatpush.bf16.msra.mxu0 0
        %1832 = vmatpush.bf16.msra.mxu0 0
        %1833 = vmatpush.bf16.msra.mxu0 0
        %1834 = vmatpush.bf16.msra.mxu0 0
        %1835 = vmatpush.bf16.msra.mxu0 %v1823
        %1836 = vmatmul.bf16.gmra.mxu0 %v1817
        %v1837 = vpop.f32.mrf.mxu0
        %v1838 = vadd.f32 0.0, %v1837
        %v1839 = vpop.f32.mrf.mxu0
        %v1840 = vadd.f32 0.0, %v1839
        %1841 = vmatmul.bf16.gmra.mxu0 %v1820
        %v1842 = vpop.f32.mrf.mxu0
        %v1843 = vadd.f32 0.0, %v1842
        %v1844 = vpop.f32.mrf.mxu0
        %v1845 = vadd.f32 0.0, %v1844
        %1846 = vdwg.mxu0
        %1847 = vmatpush.bf16.msra.mxu0 0
        %1848 = vmatpush.bf16.msra.mxu0 0
        %1849 = vmatpush.bf16.msra.mxu0 0
        %1850 = vmatpush.bf16.msra.mxu0 0
        %1851 = vmatpush.bf16.msra.mxu0 0
        %1852 = vmatpush.bf16.msra.mxu0 0
        %1853 = vmatpush.bf16.msra.mxu0 0
        %1854 = vmatpush.bf16.msra.mxu0 %v1826
        %1855 = vmatmul.bf16.gmra.mxu0 %v1817
        %v1856 = vpop.f32.mrf.mxu0
        %v1857 = vadd.f32 0.0, %v1856
        %v1858 = vpop.f32.mrf.mxu0
        %v1859 = vadd.f32 0.0, %v1858
        %1860 = vmatmul.bf16.gmra.mxu0 %v1820
        %v1861 = vpop.f32.mrf.mxu0
        %v1862 = vadd.f32 0.0, %v1861
        %v1863 = vpop.f32.mrf.mxu0
        %v1864 = vadd.f32 0.0, %v1863
        %1865 = vdwg.mxu0
        %v1866 = vadd.f32 %v1744, %v1838
        %v1867 = vadd.f32 %v1745, %v1857
        %v1868 = vadd.f32 %v1746, %v1840
        %v1869 = vadd.f32 %v1747, %v1859
        %v1870 = vadd.f32 %v1748, %v1843
        %v1871 = vadd.f32 %v1749, %v1862
        %v1872 = vadd.f32 %v1750, %v1845
        %v1873 = vadd.f32 %v1751, %v1864
        %s1874 = scalar_lea.vmem %s4, 96
        %v1875 = vld [vmem:[%s1874] sm:$0xf]
        %v1876 = vld [vmem:[%s1874 + $0x4] sm:$0xf]
        %v1877 = vld [vmem:[%s1874 + $0x8] sm:$0xf]
        %v1878 = vld [vmem:[%s1874 + $0xc] sm:$0xf]
        %v1883 = vunpack.c.l.b16 %v1875
        %v1884 = vunpack.c.l.b16 %v1876
        %v1885 = vunpack.c.l.b16 %v1877
        %v1886 = vunpack.c.l.b16 %v1878
        %v1887 = vpack.c.b16 %v1884, %v1883
        %v1888 = vpack.c.b16 %v1886, %v1885
        %1892 = vrot.lane.b32.xlu0 %v1786, 96
        %v1893 = vpop.permute.xlu0 %1892
        %1894 = vrot.lane.b32.xlu0 %v1787, 96
        %v1895 = vpop.permute.xlu0 %1894
        %1896 = vrot.lane.b32.xlu0 %v1788, 96
        %v1897 = vpop.permute.xlu0 %1896
        %v1898 = vsel %vm1813, %v1893, %v1895
        %v1899 = vsel %vm1813, %v1895, %v1897
        %v1901 = vsel %vm609, %v1887, 0
        %v1904 = vsel %vm609, %v1888, 0
        %v1907 = vsel %vm616, %v1898, 0
        %v1910 = vsel %vm616, %v1899, 0
        %1912 = vmatpush.bf16.msra.mxu0 0
        %1913 = vmatpush.bf16.msra.mxu0 0
        %1914 = vmatpush.bf16.msra.mxu0 0
        %1915 = vmatpush.bf16.msra.mxu0 0
        %1916 = vmatpush.bf16.msra.mxu0 0
        %1917 = vmatpush.bf16.msra.mxu0 0
        %1918 = vmatpush.bf16.msra.mxu0 0
        %1919 = vmatpush.bf16.msra.mxu0 %v1907
        %1920 = vmatmul.bf16.gmra.mxu0 %v1901
        %v1921 = vpop.f32.mrf.mxu0
        %v1922 = vadd.f32 0.0, %v1921
        %v1923 = vpop.f32.mrf.mxu0
        %v1924 = vadd.f32 0.0, %v1923
        %1925 = vmatmul.bf16.gmra.mxu0 %v1904
        %v1926 = vpop.f32.mrf.mxu0
        %v1927 = vadd.f32 0.0, %v1926
        %v1928 = vpop.f32.mrf.mxu0
        %v1929 = vadd.f32 0.0, %v1928
        %1930 = vdwg.mxu0
        %1931 = vmatpush.bf16.msra.mxu0 0
        %1932 = vmatpush.bf16.msra.mxu0 0
        %1933 = vmatpush.bf16.msra.mxu0 0
        %1934 = vmatpush.bf16.msra.mxu0 0
        %1935 = vmatpush.bf16.msra.mxu0 0
        %1936 = vmatpush.bf16.msra.mxu0 0
        %1937 = vmatpush.bf16.msra.mxu0 0
        %1938 = vmatpush.bf16.msra.mxu0 %v1910
        %1939 = vmatmul.bf16.gmra.mxu0 %v1901
        %v1940 = vpop.f32.mrf.mxu0
        %v1941 = vadd.f32 0.0, %v1940
        %v1942 = vpop.f32.mrf.mxu0
        %v1943 = vadd.f32 0.0, %v1942
        %1944 = vmatmul.bf16.gmra.mxu0 %v1904
        %v1945 = vpop.f32.mrf.mxu0
        %v1946 = vadd.f32 0.0, %v1945
        %v1947 = vpop.f32.mrf.mxu0
        %v1948 = vadd.f32 0.0, %v1947
        %1949 = vdwg.mxu0
        %v1950 = vadd.f32 %v1866, %v1922
        %v1951 = vadd.f32 %v1867, %v1941
        %v1952 = vadd.f32 %v1868, %v1924
        %v1953 = vadd.f32 %v1869, %v1943
        %v1954 = vadd.f32 %v1870, %v1927
        %v1955 = vadd.f32 %v1871, %v1946
        %v1956 = vadd.f32 %v1872, %v1929
        %v1957 = vadd.f32 %v1873, %v1948
        %s1958 = scalar_lea.vmem %s6, 14
        %v1959 = vld [vmem:[%s1958] sm:$0x3]
        %1961 = vst [vmem:[#allocation1] ss:$9 sm:$0xff] %v1959
        %v1962 = vld [vmem:[#allocation1] sm:$0xff]
        %v1963 = vld [vmem:[#allocation1 + $0x9] sm:$0xff]
        %v1964 = vpack.i.b16 %v1962, %v1962
        %v1966 = vperm.slane %v1964, 0
        %v1967 = vpack.i.b16 %v1963, %v1963
        %v1969 = vperm.slane %v1967, 0
        %v1970 = vunpack.c.l.bf16 %v1966
        %v1971 = vunpack.c.l.bf16 %v1969
        %1974 = vrot.lane.b32.xlu0 %v1970, 33
        %v1975 = vpop.permute.xlu0 %1974
        %1976 = vrot.lane.b32.xlu0 %v1971, 33
        %v1977 = vpop.permute.xlu0 %1976
        %vm1978 = vcmask 269312
        %v1979 = vsel %vm1978, %v1975, %v1977
        %v1983 = vmul.f32 %v577, %v1975
        %v1984 = vmul.f32 %v578, %v1979
        %v1985 = vmul.f32 %v733, %v1977
        %v1986 = vpack.c.bf16 %v1983, %v1983
        %v1987 = vpack.c.bf16 %v1984, %v1984
        %v1988 = vpack.c.bf16 %v1985, %v1985
        %v1989 = vmul.f32 %v585, %v1975
        %v1990 = vmul.f32 %v586, %v1979
        %v1991 = vmul.f32 %v753, %v1977
        %v1992 = vpack.c.bf16 %v1989, %v1989
        %v1993 = vpack.c.bf16 %v1990, %v1990
        %v1994 = vpack.c.bf16 %v1991, %v1991
        %s1995 = scalar_lea.vmem %s3, 112
        %v1996 = vld [vmem:[%s1995] sm:$0xf]
        %v1997 = vld [vmem:[%s1995 + $0x4] sm:$0xf]
        %v1998 = vld [vmem:[%s1995 + $0x8] sm:$0xf]
        %v1999 = vld [vmem:[%s1995 + $0xc] sm:$0xf]
        %v2004 = vunpack.c.l.b16 %v1996
        %v2005 = vunpack.c.l.b16 %v1997
        %v2006 = vunpack.c.l.b16 %v1998
        %v2007 = vunpack.c.l.b16 %v1999
        %v2008 = vpack.c.b16 %v2005, %v2004
        %v2009 = vpack.c.b16 %v2007, %v2006
        %2013 = vrot.lane.b32.xlu0 %v1986, 95
        %v2014 = vpop.permute.xlu0 %2013
        %2015 = vrot.lane.b32.xlu0 %v1987, 95
        %v2016 = vpop.permute.xlu0 %2015
        %2017 = vrot.lane.b32.xlu0 %v1988, 95
        %v2018 = vpop.permute.xlu0 %2017
        %vm2019 = vcmask 777216
        %v2020 = vsel %vm2019, %v2014, %v2016
        %v2021 = vsel %vm2019, %v2016, %v2018
        %v2023 = vsel %vm609, %v2008, 0
        %v2026 = vsel %vm609, %v2009, 0
        %v2029 = vsel %vm616, %v2020, 0
        %v2032 = vsel %vm616, %v2021, 0
        %2034 = vmatpush.bf16.msra.mxu0 0
        %2035 = vmatpush.bf16.msra.mxu0 0
        %2036 = vmatpush.bf16.msra.mxu0 0
        %2037 = vmatpush.bf16.msra.mxu0 0
        %2038 = vmatpush.bf16.msra.mxu0 0
        %2039 = vmatpush.bf16.msra.mxu0 0
        %2040 = vmatpush.bf16.msra.mxu0 0
        %2041 = vmatpush.bf16.msra.mxu0 %v2029
        %2042 = vmatmul.bf16.gmra.mxu0 %v2023
        %v2043 = vpop.f32.mrf.mxu0
        %v2044 = vadd.f32 0.0, %v2043
        %v2045 = vpop.f32.mrf.mxu0
        %v2046 = vadd.f32 0.0, %v2045
        %2047 = vmatmul.bf16.gmra.mxu0 %v2026
        %v2048 = vpop.f32.mrf.mxu0
        %v2049 = vadd.f32 0.0, %v2048
        %v2050 = vpop.f32.mrf.mxu0
        %v2051 = vadd.f32 0.0, %v2050
        %2052 = vdwg.mxu0
        %2053 = vmatpush.bf16.msra.mxu0 0
        %2054 = vmatpush.bf16.msra.mxu0 0
        %2055 = vmatpush.bf16.msra.mxu0 0
        %2056 = vmatpush.bf16.msra.mxu0 0
        %2057 = vmatpush.bf16.msra.mxu0 0
        %2058 = vmatpush.bf16.msra.mxu0 0
        %2059 = vmatpush.bf16.msra.mxu0 0
        %2060 = vmatpush.bf16.msra.mxu0 %v2032
        %2061 = vmatmul.bf16.gmra.mxu0 %v2023
        %v2062 = vpop.f32.mrf.mxu0
        %v2063 = vadd.f32 0.0, %v2062
        %v2064 = vpop.f32.mrf.mxu0
        %v2065 = vadd.f32 0.0, %v2064
        %2066 = vmatmul.bf16.gmra.mxu0 %v2026
        %v2067 = vpop.f32.mrf.mxu0
        %v2068 = vadd.f32 0.0, %v2067
        %v2069 = vpop.f32.mrf.mxu0
        %v2070 = vadd.f32 0.0, %v2069
        %2071 = vdwg.mxu0
        %v2072 = vadd.f32 %v1950, %v2044
        %v2073 = vadd.f32 %v1951, %v2063
        %v2074 = vadd.f32 %v1952, %v2046
        %v2075 = vadd.f32 %v1953, %v2065
        %v2076 = vadd.f32 %v1954, %v2049
        %v2077 = vadd.f32 %v1955, %v2068
        %v2078 = vadd.f32 %v1956, %v2051
        %v2079 = vadd.f32 %v1957, %v2070
        %s2080 = scalar_lea.vmem %s4, 112
        %v2081 = vld [vmem:[%s2080] sm:$0xf]
        %v2082 = vld [vmem:[%s2080 + $0x4] sm:$0xf]
        %v2083 = vld [vmem:[%s2080 + $0x8] sm:$0xf]
        %v2084 = vld [vmem:[%s2080 + $0xc] sm:$0xf]
        %v2089 = vunpack.c.l.b16 %v2081
        %v2090 = vunpack.c.l.b16 %v2082
        %v2091 = vunpack.c.l.b16 %v2083
        %v2092 = vunpack.c.l.b16 %v2084
        %v2093 = vpack.c.b16 %v2090, %v2089
        %v2094 = vpack.c.b16 %v2092, %v2091
        %2098 = vrot.lane.b32.xlu0 %v1992, 95
        %v2099 = vpop.permute.xlu0 %2098
        %2100 = vrot.lane.b32.xlu0 %v1993, 95
        %v2101 = vpop.permute.xlu0 %2100
        %2102 = vrot.lane.b32.xlu0 %v1994, 95
        %v2103 = vpop.permute.xlu0 %2102
        %v2104 = vsel %vm2019, %v2099, %v2101
        %v2105 = vsel %vm2019, %v2101, %v2103
        %v2107 = vsel %vm609, %v2093, 0
        %v2110 = vsel %vm609, %v2094, 0
        %v2113 = vsel %vm616, %v2104, 0
        %v2116 = vsel %vm616, %v2105, 0
        %2118 = vmatpush.bf16.msra.mxu0 0
        %2119 = vmatpush.bf16.msra.mxu0 0
        %2120 = vmatpush.bf16.msra.mxu0 0
        %2121 = vmatpush.bf16.msra.mxu0 0
        %2122 = vmatpush.bf16.msra.mxu0 0
        %2123 = vmatpush.bf16.msra.mxu0 0
        %2124 = vmatpush.bf16.msra.mxu0 0
        %2125 = vmatpush.bf16.msra.mxu0 %v2113
        %2126 = vmatmul.bf16.gmra.mxu0 %v2107
        %v2127 = vpop.f32.mrf.mxu0
        %v2128 = vadd.f32 0.0, %v2127
        %v2129 = vpop.f32.mrf.mxu0
        %v2130 = vadd.f32 0.0, %v2129
        %2131 = vmatmul.bf16.gmra.mxu0 %v2110
        %v2132 = vpop.f32.mrf.mxu0
        %v2133 = vadd.f32 0.0, %v2132
        %v2134 = vpop.f32.mrf.mxu0
        %v2135 = vadd.f32 0.0, %v2134
        %2136 = vdwg.mxu0
        %2137 = vmatpush.bf16.msra.mxu0 0
        %2138 = vmatpush.bf16.msra.mxu0 0
        %2139 = vmatpush.bf16.msra.mxu0 0
        %2140 = vmatpush.bf16.msra.mxu0 0
        %2141 = vmatpush.bf16.msra.mxu0 0
        %2142 = vmatpush.bf16.msra.mxu0 0
        %2143 = vmatpush.bf16.msra.mxu0 0
        %2144 = vmatpush.bf16.msra.mxu0 %v2116
        %2145 = vmatmul.bf16.gmra.mxu0 %v2107
        %v2146 = vpop.f32.mrf.mxu0
        %v2147 = vadd.f32 0.0, %v2146
        %v2148 = vpop.f32.mrf.mxu0
        %v2149 = vadd.f32 0.0, %v2148
        %2150 = vmatmul.bf16.gmra.mxu0 %v2110
        %v2151 = vpop.f32.mrf.mxu0
        %v2152 = vadd.f32 0.0, %v2151
        %v2153 = vpop.f32.mrf.mxu0
        %v2154 = vadd.f32 0.0, %v2153
        %2155 = vdwg.mxu0
        %v2156 = vadd.f32 %v2072, %v2128
        %v2157 = vadd.f32 %v2073, %v2147
        %v2158 = vadd.f32 %v2074, %v2130
        %v2159 = vadd.f32 %v2075, %v2149
        %v2160 = vadd.f32 %v2076, %v2133
        %v2161 = vadd.f32 %v2077, %v2152
        %v2162 = vadd.f32 %v2078, %v2135
        %v2163 = vadd.f32 %v2079, %v2154
        %s2164 = scalar_lea.vmem %s6, 16
        %v2165 = vld [vmem:[%s2164] sm:$0x3]
        %2167 = vst [vmem:[#allocation1] ss:$9 sm:$0xff] %v2165
        %v2168 = vld [vmem:[#allocation1] sm:$0xff]
        %v2169 = vld [vmem:[#allocation1 + $0x9] sm:$0xff]
        %v2170 = vpack.i.b16 %v2168, %v2168
        %v2172 = vperm.slane %v2170, 0
        %v2173 = vpack.i.b16 %v2169, %v2169
        %v2175 = vperm.slane %v2173, 0
        %v2176 = vunpack.c.l.bf16 %v2172
        %v2177 = vunpack.c.l.bf16 %v2175
        %2180 = vrot.lane.b32.xlu0 %v2176, 34
        %v2181 = vpop.permute.xlu0 %2180
        %2182 = vrot.lane.b32.xlu0 %v2177, 34
        %v2183 = vpop.permute.xlu0 %2182
        %vm2184 = vcmask 277504
        %v2185 = vsel %vm2184, %v2181, %v2183
        %v2189 = vmul.f32 %v577, %v2181
        %v2190 = vmul.f32 %v578, %v2185
        %v2191 = vmul.f32 %v733, %v2183
        %v2192 = vpack.c.bf16 %v2189, %v2189
        %v2193 = vpack.c.bf16 %v2190, %v2190
        %v2194 = vpack.c.bf16 %v2191, %v2191
        %v2195 = vmul.f32 %v585, %v2181
        %v2196 = vmul.f32 %v586, %v2185
        %v2197 = vmul.f32 %v753, %v2183
        %v2198 = vpack.c.bf16 %v2195, %v2195
        %v2199 = vpack.c.bf16 %v2196, %v2196
        %v2200 = vpack.c.bf16 %v2197, %v2197
        %s2201 = scalar_lea.vmem %s3, 128
        %v2202 = vld [vmem:[%s2201] sm:$0xf]
        %v2203 = vld [vmem:[%s2201 + $0x4] sm:$0xf]
        %v2204 = vld [vmem:[%s2201 + $0x8] sm:$0xf]
        %v2205 = vld [vmem:[%s2201 + $0xc] sm:$0xf]
        %v2210 = vunpack.c.l.b16 %v2202
        %v2211 = vunpack.c.l.b16 %v2203
        %v2212 = vunpack.c.l.b16 %v2204
        %v2213 = vunpack.c.l.b16 %v2205
        %v2214 = vpack.c.b16 %v2211, %v2210
        %v2215 = vpack.c.b16 %v2213, %v2212
        %2219 = vrot.lane.b32.xlu0 %v2192, 94
        %v2220 = vpop.permute.xlu0 %2219
        %2221 = vrot.lane.b32.xlu0 %v2193, 94
        %v2222 = vpop.permute.xlu0 %2221
        %2223 = vrot.lane.b32.xlu0 %v2194, 94
        %v2224 = vpop.permute.xlu0 %2223
        %vm2225 = vcmask 769024
        %v2226 = vsel %vm2225, %v2220, %v2222
        %v2227 = vsel %vm2225, %v2222, %v2224
        %v2229 = vsel %vm609, %v2214, 0
        %v2232 = vsel %vm609, %v2215, 0
        %v2235 = vsel %vm616, %v2226, 0
        %v2238 = vsel %vm616, %v2227, 0
        %2240 = vmatpush.bf16.msra.mxu0 0
        %2241 = vmatpush.bf16.msra.mxu0 0
        %2242 = vmatpush.bf16.msra.mxu0 0
        %2243 = vmatpush.bf16.msra.mxu0 0
        %2244 = vmatpush.bf16.msra.mxu0 0
        %2245 = vmatpush.bf16.msra.mxu0 0
        %2246 = vmatpush.bf16.msra.mxu0 0
        %2247 = vmatpush.bf16.msra.mxu0 %v2235
        %2248 = vmatmul.bf16.gmra.mxu0 %v2229
        %v2249 = vpop.f32.mrf.mxu0
        %v2250 = vadd.f32 0.0, %v2249
        %v2251 = vpop.f32.mrf.mxu0
        %v2252 = vadd.f32 0.0, %v2251
        %2253 = vmatmul.bf16.gmra.mxu0 %v2232
        %v2254 = vpop.f32.mrf.mxu0
        %v2255 = vadd.f32 0.0, %v2254
        %v2256 = vpop.f32.mrf.mxu0
        %v2257 = vadd.f32 0.0, %v2256
        %2258 = vdwg.mxu0
        %2259 = vmatpush.bf16.msra.mxu0 0
        %2260 = vmatpush.bf16.msra.mxu0 0
        %2261 = vmatpush.bf16.msra.mxu0 0
        %2262 = vmatpush.bf16.msra.mxu0 0
        %2263 = vmatpush.bf16.msra.mxu0 0
        %2264 = vmatpush.bf16.msra.mxu0 0
        %2265 = vmatpush.bf16.msra.mxu0 0
        %2266 = vmatpush.bf16.msra.mxu0 %v2238
        %2267 = vmatmul.bf16.gmra.mxu0 %v2229
        %v2268 = vpop.f32.mrf.mxu0
        %v2269 = vadd.f32 0.0, %v2268
        %v2270 = vpop.f32.mrf.mxu0
        %v2271 = vadd.f32 0.0, %v2270
        %2272 = vmatmul.bf16.gmra.mxu0 %v2232
        %v2273 = vpop.f32.mrf.mxu0
        %v2274 = vadd.f32 0.0, %v2273
        %v2275 = vpop.f32.mrf.mxu0
        %v2276 = vadd.f32 0.0, %v2275
        %2277 = vdwg.mxu0
        %v2278 = vadd.f32 %v2156, %v2250
        %v2279 = vadd.f32 %v2157, %v2269
        %v2280 = vadd.f32 %v2158, %v2252
        %v2281 = vadd.f32 %v2159, %v2271
        %v2282 = vadd.f32 %v2160, %v2255
        %v2283 = vadd.f32 %v2161, %v2274
        %v2284 = vadd.f32 %v2162, %v2257
        %v2285 = vadd.f32 %v2163, %v2276
        %s2286 = scalar_lea.vmem %s4, 128
        %v2287 = vld [vmem:[%s2286] sm:$0xf]
        %v2288 = vld [vmem:[%s2286 + $0x4] sm:$0xf]
        %v2289 = vld [vmem:[%s2286 + $0x8] sm:$0xf]
        %v2290 = vld [vmem:[%s2286 + $0xc] sm:$0xf]
        %v2295 = vunpack.c.l.b16 %v2287
        %v2296 = vunpack.c.l.b16 %v2288
        %v2297 = vunpack.c.l.b16 %v2289
        %v2298 = vunpack.c.l.b16 %v2290
        %v2299 = vpack.c.b16 %v2296, %v2295
        %v2300 = vpack.c.b16 %v2298, %v2297
        %2304 = vrot.lane.b32.xlu0 %v2198, 94
        %v2305 = vpop.permute.xlu0 %2304
        %2306 = vrot.lane.b32.xlu0 %v2199, 94
        %v2307 = vpop.permute.xlu0 %2306
        %2308 = vrot.lane.b32.xlu0 %v2200, 94
        %v2309 = vpop.permute.xlu0 %2308
        %v2310 = vsel %vm2225, %v2305, %v2307
        %v2311 = vsel %vm2225, %v2307, %v2309
        %v2313 = vsel %vm609, %v2299, 0
        %v2316 = vsel %vm609, %v2300, 0
        %v2319 = vsel %vm616, %v2310, 0
        %v2322 = vsel %vm616, %v2311, 0
        %2324 = vmatpush.bf16.msra.mxu0 0
        %2325 = vmatpush.bf16.msra.mxu0 0
        %2326 = vmatpush.bf16.msra.mxu0 0
        %2327 = vmatpush.bf16.msra.mxu0 0
        %2328 = vmatpush.bf16.msra.mxu0 0
        %2329 = vmatpush.bf16.msra.mxu0 0
        %2330 = vmatpush.bf16.msra.mxu0 0
        %2331 = vmatpush.bf16.msra.mxu0 %v2319
        %2332 = vmatmul.bf16.gmra.mxu0 %v2313
        %v2333 = vpop.f32.mrf.mxu0
        %v2334 = vadd.f32 0.0, %v2333
        %v2335 = vpop.f32.mrf.mxu0
        %v2336 = vadd.f32 0.0, %v2335
        %2337 = vmatmul.bf16.gmra.mxu0 %v2316
        %v2338 = vpop.f32.mrf.mxu0
        %v2339 = vadd.f32 0.0, %v2338
        %v2340 = vpop.f32.mrf.mxu0
        %v2341 = vadd.f32 0.0, %v2340
        %2342 = vdwg.mxu0
        %2343 = vmatpush.bf16.msra.mxu0 0
        %2344 = vmatpush.bf16.msra.mxu0 0
        %2345 = vmatpush.bf16.msra.mxu0 0
        %2346 = vmatpush.bf16.msra.mxu0 0
        %2347 = vmatpush.bf16.msra.mxu0 0
        %2348 = vmatpush.bf16.msra.mxu0 0
        %2349 = vmatpush.bf16.msra.mxu0 0
        %2350 = vmatpush.bf16.msra.mxu0 %v2322
        %2351 = vmatmul.bf16.gmra.mxu0 %v2313
        %v2352 = vpop.f32.mrf.mxu0
        %v2353 = vadd.f32 0.0, %v2352
        %v2354 = vpop.f32.mrf.mxu0
        %v2355 = vadd.f32 0.0, %v2354
        %2356 = vmatmul.bf16.gmra.mxu0 %v2316
        %v2357 = vpop.f32.mrf.mxu0
        %v2358 = vadd.f32 0.0, %v2357
        %v2359 = vpop.f32.mrf.mxu0
        %v2360 = vadd.f32 0.0, %v2359
        %2361 = vdwg.mxu0
        %v2362 = vadd.f32 %v2278, %v2334
        %v2363 = vadd.f32 %v2279, %v2353
        %v2364 = vadd.f32 %v2280, %v2336
        %v2365 = vadd.f32 %v2281, %v2355
        %v2366 = vadd.f32 %v2282, %v2339
        %v2367 = vadd.f32 %v2283, %v2358
        %v2368 = vadd.f32 %v2284, %v2341
        %v2369 = vadd.f32 %v2285, %v2360
        %v2370 = vld [vmem:[%s5] sm:$0xff]
        %v2371 = vld [vmem:[%s5 + $0x8] sm:$0xff]
        %v2372 = vld [vmem:[%s5 + $0x10] sm:$0xff]
        %v2373 = vld [vmem:[%s5 + $0x18] sm:$0xff]
        %2375 = vset.pattern.permute.xlu0 0
        %2376 = vperm.xlu0 %2375, %v2370
        %v2377 = vpop.permute.xlu0 %2376
        %2380 = vset.pattern.permute.xlu0 0
        %2381 = vperm.xlu0 %2380, %v2371
        %v2382 = vpop.permute.xlu0 %2381
        %2385 = vset.pattern.permute.xlu0 0
        %2386 = vperm.xlu0 %2385, %v2372
        %v2387 = vpop.permute.xlu0 %2386
        %2390 = vset.pattern.permute.xlu0 0
        %2391 = vperm.xlu0 %2390, %v2373
        %v2392 = vpop.permute.xlu0 %2391
        %v2394 = vadd.f32 %v2362, %v2377
        %v2395 = vadd.f32 %v2363, %v2377
        %v2396 = vadd.f32 %v2364, %v2382
        %v2397 = vadd.f32 %v2365, %v2382
        %v2398 = vadd.f32 %v2366, %v2387
        %v2399 = vadd.f32 %v2367, %v2387
        %v2400 = vadd.f32 %v2368, %v2392
        %v2401 = vadd.f32 %v2369, %v2392
        %v2402 = vxor.u32 %v2394, 2147483648
        %v2403 = vxor.u32 %v2395, 2147483648
        %v2404 = vmul.f32 %v2402, 1.442695
        %v2405 = vpow.pop %v2404
        %v2406 = vmul.f32 %v2403, 1.442695
        %v2407 = vpow.pop %v2406
        %v2408 = vadd.f32 %v2405, 1.0
        %v2409 = vadd.f32 %v2407, 1.0
        %v2410 = vrcp.pop %v2408
        %v2411 = vmul.f32 %v2408, %v2410
        %v2412 = vsub.f32 1.0, %v2411
        %v2413 = vmul.f32 %v2410, %v2412
        %v2414 = vadd.f32 %v2410, %v2413
        %vm2415 = vweird.f32 %v2408
        %vm2416 = vweird.f32 %v2410
        %vm2417 = vmor %vm2415, %vm2416
        %v2418 = vsel %vm2417, %v2410, %v2414
        %v2419 = vand.u32 2147483647, %v2408
        %vm2420 = vcmp.eq.f32.partialorder %v2419, 8.507059e+37
        %v2421 = vand.u32 %v2408, 2147483648
        %v2422 = vor.u32 1.1754944e-38, %v2421
        %v2423 = vsel %vm2420, %v2422, %v2418
        %v2424 = vmul.f32 1.0, %v2423
        %v2425 = vrcp.pop %v2409
        %v2426 = vmul.f32 %v2409, %v2425
        %v2427 = vsub.f32 1.0, %v2426
        %v2428 = vmul.f32 %v2425, %v2427
        %v2429 = vadd.f32 %v2425, %v2428
        %vm2430 = vweird.f32 %v2409
        %vm2431 = vweird.f32 %v2425
        %vm2432 = vmor %vm2430, %vm2431
        %v2433 = vsel %vm2432, %v2425, %v2429
        %v2434 = vand.u32 2147483647, %v2409
        %vm2435 = vcmp.eq.f32.partialorder %v2434, 8.507059e+37
        %v2436 = vand.u32 %v2409, 2147483648
        %v2437 = vor.u32 1.1754944e-38, %v2436
        %v2438 = vsel %vm2435, %v2437, %v2433
        %v2439 = vmul.f32 1.0, %v2438
        %v2440 = vxor.u32 %v2396, 2147483648
        %v2441 = vxor.u32 %v2397, 2147483648
        %v2442 = vmul.f32 %v2440, 1.442695
        %v2443 = vpow.pop %v2442
        %v2444 = vmul.f32 %v2441, 1.442695
        %v2445 = vpow.pop %v2444
        %v2446 = vadd.f32 %v2443, 1.0
        %v2447 = vadd.f32 %v2445, 1.0
        %v2448 = vrcp.pop %v2446
        %v2449 = vmul.f32 %v2446, %v2448
        %v2450 = vsub.f32 1.0, %v2449
        %v2451 = vmul.f32 %v2448, %v2450
        %v2452 = vadd.f32 %v2448, %v2451
        %vm2453 = vweird.f32 %v2446
        %vm2454 = vweird.f32 %v2448
        %vm2455 = vmor %vm2453, %vm2454
        %v2456 = vsel %vm2455, %v2448, %v2452
        %v2457 = vand.u32 2147483647, %v2446
        %vm2458 = vcmp.eq.f32.partialorder %v2457, 8.507059e+37
        %v2459 = vand.u32 %v2446, 2147483648
        %v2460 = vor.u32 1.1754944e-38, %v2459
        %v2461 = vsel %vm2458, %v2460, %v2456
        %v2462 = vmul.f32 1.0, %v2461
        %v2463 = vrcp.pop %v2447
        %v2464 = vmul.f32 %v2447, %v2463
        %v2465 = vsub.f32 1.0, %v2464
        %v2466 = vmul.f32 %v2463, %v2465
        %v2467 = vadd.f32 %v2463, %v2466
        %vm2468 = vweird.f32 %v2447
        %vm2469 = vweird.f32 %v2463
        %vm2470 = vmor %vm2468, %vm2469
        %v2471 = vsel %vm2470, %v2463, %v2467
        %v2472 = vand.u32 2147483647, %v2447
        %vm2473 = vcmp.eq.f32.partialorder %v2472, 8.507059e+37
        %v2474 = vand.u32 %v2447, 2147483648
        %v2475 = vor.u32 1.1754944e-38, %v2474
        %v2476 = vsel %vm2473, %v2475, %v2471
        %v2477 = vmul.f32 1.0, %v2476
        %v2478 = vxor.u32 %v2398, 2147483648
        %v2479 = vxor.u32 %v2399, 2147483648
        %v2480 = vmul.f32 %v2478, 1.442695
        %v2481 = vpow.pop %v2480
        %v2482 = vmul.f32 %v2479, 1.442695
        %v2483 = vpow.pop %v2482
        %v2484 = vadd.f32 %v2481, 1.0
        %v2485 = vadd.f32 %v2483, 1.0
        %v2486 = vrcp.pop %v2484
        %v2487 = vmul.f32 %v2484, %v2486
        %v2488 = vsub.f32 1.0, %v2487
        %v2489 = vmul.f32 %v2486, %v2488
        %v2490 = vadd.f32 %v2486, %v2489
        %vm2491 = vweird.f32 %v2484
        %vm2492 = vweird.f32 %v2486
        %vm2493 = vmor %vm2491, %vm2492
        %v2494 = vsel %vm2493, %v2486, %v2490
        %v2495 = vand.u32 2147483647, %v2484
        %vm2496 = vcmp.eq.f32.partialorder %v2495, 8.507059e+37
        %v2497 = vand.u32 %v2484, 2147483648
        %v2498 = vor.u32 1.1754944e-38, %v2497
        %v2499 = vsel %vm2496, %v2498, %v2494
        %v2500 = vmul.f32 1.0, %v2499
        %v2501 = vrcp.pop %v2485
        %v2502 = vmul.f32 %v2485, %v2501
        %v2503 = vsub.f32 1.0, %v2502
        %v2504 = vmul.f32 %v2501, %v2503
        %v2505 = vadd.f32 %v2501, %v2504
        %vm2506 = vweird.f32 %v2485
        %vm2507 = vweird.f32 %v2501
        %vm2508 = vmor %vm2506, %vm2507
        %v2509 = vsel %vm2508, %v2501, %v2505
        %v2510 = vand.u32 2147483647, %v2485
        %vm2511 = vcmp.eq.f32.partialorder %v2510, 8.507059e+37
        %v2512 = vand.u32 %v2485, 2147483648
        %v2513 = vor.u32 1.1754944e-38, %v2512
        %v2514 = vsel %vm2511, %v2513, %v2509
        %v2515 = vmul.f32 1.0, %v2514
        %v2516 = vtanh.pop %v2400
        %v2517 = vtanh.pop %v2401
        %v2518 = vmul.f32 %v2462, %v526
        %v2519 = vmul.f32 %v2477, %v527
        %v2520 = vmul.f32 %v2424, %v2516
        %v2521 = vmul.f32 %v2439, %v2517
        %v2522 = vadd.f32 %v2518, %v2520
        %v2523 = vadd.f32 %v2519, %v2521
        %v2524 = vtanh.pop %v2522
        %v2525 = vtanh.pop %v2523
        %v2526 = vmul.f32 %v2500, %v2524
        %v2527 = vmul.f32 %v2515, %v2525
        %s2528 = sld [smem:[#allocation2 + %s26]]
        %v2529 = vld [vmem:[%s7] sm:$0xff]
        %v2530 = vld [vmem:[%s7 + $0x8] sm:$0xff]
        %v2531 = vstv %s2528
        %v2532 = vsub.f32 %v2531, %v2529
        %v2533 = vsub.f32 %v2531, %v2530
        %v2534 = vld [vmem:[%s9] sm:$0xff]
        %v2535 = vld [vmem:[%s9 + $0x8] sm:$0xff]
        %v2536 = vmul.f32 %v2532, %v2534
        %v2537 = vmul.f32 %v2533, %v2535
        %vm2538 = vcmp.ge.f32.partialorder %v2536, 0.0
        %vm2539 = vcmp.ge.f32.partialorder %v2537, 0.0
        %v2540 = vfloor.f32 %v2536
        %v2541 = vfloor.f32 %v2537
        %v2542 = vceil.f32 %v2536
        %v2543 = vceil.f32 %v2537
        %v2544 = vsel %vm2538, %v2540, %v2542
        %v2545 = vsel %vm2539, %v2541, %v2543
        %v2546 = vld [vmem:[%s8] sm:$0xff]
        %v2547 = vld [vmem:[%s8 + $0x8] sm:$0xff]
        %v2548 = vmul.f32 %v2546, %v2544
        %v2549 = vmul.f32 %v2547, %v2545
        %v2550 = vsub.f32 %v2532, %v2548
        %v2551 = vsub.f32 %v2533, %v2549
        %v2552 = vand.u32 2147483647, %v2550
        %v2553 = vand.u32 2147483647, %v2551
        %v2554 = vmul.f32 %v2552, %v2534
        %v2555 = vmul.f32 %v2553, %v2535
        %v2556 = vmul.f32 %v2554, 20.0
        %v2557 = vmul.f32 %v2555, 20.0
        %vm2558 = vcmp.lt.f32.partialorder %v2554, 0.1
        %vm2559 = vcmp.lt.f32.partialorder %v2555, 0.1
        %v2560 = vsub.f32 2.0, %v2556
        %v2561 = vsub.f32 2.0, %v2557
        %v2562 = vmul.f32 %v2554, 0.001
        %v2563 = vmul.f32 %v2555, 0.001
        %v2564 = vsel %vm2558, %v2560, %v2562
        %v2565 = vsel %vm2559, %v2561, %v2563
        %vm2566 = vcmp.lt.f32.partialorder %v2554, 0.05
        %vm2567 = vcmp.lt.f32.partialorder %v2555, 0.05
        %v2568 = vsel %vm2566, %v2556, %v2564
        %v2569 = vsel %vm2567, %v2557, %v2565
        %v2570 = vsub.f32 1.0, %v2568
        %v2571 = vsub.f32 1.0, %v2569
        %2572 = vst [vmem:[%s511] sm:$0xff] %v2522
        %2573 = vst [vmem:[%s511 + $0x8] sm:$0xff] %v2523
        %v2574 = vmul.f32 %v2568, %v2522
        %v2575 = vmul.f32 %v2569, %v2523
        %v2576 = vmul.f32 %v2570, %v526
        %v2577 = vmul.f32 %v2571, %v527
        %v2578 = vadd.f32 %v2574, %v2576
        %v2579 = vadd.f32 %v2575, %v2577
        %2580 = vst [vmem:[%s516] sm:$0xff] %v2578
        %2581 = vst [vmem:[%s516 + $0x8] sm:$0xff] %v2579
        %v2582 = vmul.f32 %v2568, %v2526
        %v2583 = vmul.f32 %v2569, %v2527
        %v2584 = vmul.f32 %v2570, %v524
        %v2585 = vmul.f32 %v2571, %v525
        %v2586 = vadd.f32 %v2582, %v2584
        %v2587 = vadd.f32 %v2583, %v2585
        %2588 = vst [vmem:[%s521] sm:$0xff] %v2586
        %2589 = vst [vmem:[%s521 + $0x8] sm:$0xff] %v2587
        %p2590 = scmp.lt.s32.totalorder %s26, 1
        %s2591 = scalar_select %p2590, %s26, 1
        %s2592 = smul.addr %s2591, 2
        %s2593 = smul.addr %s2592, 8
        %s2594 = scalar_lea.vmem %s11, %s2593
        %p2595 = scmp.lt.s32.totalorder %s26, 1
        %s2596 = scalar_select %p2595, %s26, 1
        %s2597 = smul.addr %s2596, 2
        %s2598 = smul.addr %s2597, 8
        %s2599 = scalar_lea.vmem %s12, %s2598
        %p2600 = scmp.lt.s32.totalorder %s26, 1
        %s2601 = scalar_select %p2600, %s26, 1
        %s2602 = smul.addr %s2601, 2
        %s2603 = smul.addr %s2602, 8
        %s2604 = scalar_lea.vmem %s13, %s2603
        // Predicated region
        $region69: #{recurrent_phased_conv_layer.3} parent=63 // pred_check
          %p2605 = pneg %p290
        $region70: #{recurrent_phased_conv_layer.3} parent=63 // pred_check_branch
          %2607 = sbr.rel (%p2605) target = $region72
        $region71: #{recurrent_phased_conv_layer.3} parent=63 // pred_region
          _
        $region72: #{recurrent_phased_conv_layer.3} parent=63 // pred_fallthru
          _
        // Predicated region
        $region73: #{recurrent_phased_conv_layer.3} parent=63 // pred_check
          %p2608 = pneg %p316
        $region74: #{recurrent_phased_conv_layer.3} parent=63 // pred_check_branch
          %2610 = sbr.rel (%p2608) target = $region76
        $region75: #{recurrent_phased_conv_layer.3} parent=63 // pred_region
          _
        $region76: #{recurrent_phased_conv_layer.3} parent=63 // pred_fallthru
          _
        // Predicated region
        $region77: #{recurrent_phased_conv_layer.3} parent=63 // pred_check
          %p2611 = pneg %p342
        $region78: #{recurrent_phased_conv_layer.3} parent=63 // pred_check_branch
          %2613 = sbr.rel (%p2611) target = $region80
        $region79: #{recurrent_phased_conv_layer.3} parent=63 // pred_region
          _
        $region80: #{recurrent_phased_conv_layer.3} parent=63 // pred_fallthru
          _
      $region64: #{recurrent_phased_conv_layer.3} parent=5 // pred_fallthru
        _
      %p2614 = scmp.le.s32.totalorder 2, %s21
      // Predicated region
      $region81: #{recurrent_phased_conv_layer.3} parent=5 // pred_check
        %p2615 = pneg %p2614
      $region82: #{recurrent_phased_conv_layer.3} parent=5 // pred_check_branch
        %2617 = sbr.rel (%p2615) target = $region84
      $region83: #{recurrent_phased_conv_layer.3} parent=5 // pred_region
        %s2618 = ssub.s32 %s21, 2
        // Predicated region
        $region85: #{recurrent_phased_conv_layer.3} parent=83 // pred_check
          %p2619 = pneg %p296
        $region86: #{recurrent_phased_conv_layer.3} parent=83 // pred_check_branch
          %2621 = sbr.rel (%p2619) target = $region88
        $region87: #{recurrent_phased_conv_layer.3} parent=83 // pred_region
          %p2622 = scmp.lt.s32.totalorder %s27, 1
          %s2623 = scalar_select %p2622, %s27, 1
          %s2624 = smul.addr %s2623, 2
          %s2625 = smul.addr %s2624, 8
          %s2626 = scalar_lea.vmem %s11, %s2625
        $region88: #{recurrent_phased_conv_layer.3} parent=83 // pred_fallthru
          _
        // Predicated region
        $region89: #{recurrent_phased_conv_layer.3} parent=83 // pred_check
          %p2627 = pneg %p322
        $region90: #{recurrent_phased_conv_layer.3} parent=83 // pred_check_branch
          %2629 = sbr.rel (%p2627) target = $region92
        $region91: #{recurrent_phased_conv_layer.3} parent=83 // pred_region
          %p2630 = scmp.lt.s32.totalorder %s27, 1
          %s2631 = scalar_select %p2630, %s27, 1
          %s2632 = smul.addr %s2631, 2
          %s2633 = smul.addr %s2632, 8
          %s2634 = scalar_lea.vmem %s12, %s2633
        $region92: #{recurrent_phased_conv_layer.3} parent=83 // pred_fallthru
          _
        // Predicated region
        $region93: #{recurrent_phased_conv_layer.3} parent=83 // pred_check
          %p2635 = pneg %p348
        $region94: #{recurrent_phased_conv_layer.3} parent=83 // pred_check_branch
          %2637 = sbr.rel (%p2635) target = $region96
        $region95: #{recurrent_phased_conv_layer.3} parent=83 // pred_region
          %p2638 = scmp.lt.s32.totalorder %s27, 1
          %s2639 = scalar_select %p2638, %s27, 1
          %s2640 = smul.addr %s2639, 2
          %s2641 = smul.addr %s2640, 8
          %s2642 = scalar_lea.vmem %s13, %s2641
        $region96: #{recurrent_phased_conv_layer.3} parent=83 // pred_fallthru
          _
      $region84: #{recurrent_phased_conv_layer.3} parent=5 // pred_fallthru
        _
    $region6: #{recurrent_phased_conv_layer.3} parent=1 // loop_footer
      %s25 = sadd.s32 1, %s21
    $region7: #{recurrent_phased_conv_layer.3} parent=1 // loop_footer_branch
      %20 = sbr.rel target = $region3
    $region8: #{recurrent_phased_conv_layer.3} parent=1 // loop_exit
      _
    %2643 = vsyncpa [#allocation3], 1
    %s2644 = scalar_lea.sflag [#allocation3], 1
    %2645 = vsyncpa %s2644, 1

</llo_original>
